<compile_context>
chip_gen: v7x
topology: tpu7x:2x2x1
jax: 0.10.0
libtpu: 0.0.40
codegen_flags: <defaults>
</compile_context>

<pallas_src>
import math
import numpy as np

import jax
import jax.numpy as jnp
from jax.experimental import pallas as pl
from jax.experimental.pallas import tpu as pltpu

# ----------------------------- config (small synthetic model) -----------------------------
VOCAB = 100
MAX_POS = 16
HIDDEN = 32
N_LAYERS = 2
N_HEADS = 4
HEAD_DIM = HIDDEN // N_HEADS
FFN_DIM = 4 * HIDDEN          # 128
CLS_HIDDEN = 512
NUM_LABELS = 2
LN_EPS = 1e-12
ATTN_SCALE = 1.0 / math.sqrt(HEAD_DIM)
NEG_BIG = -1e30

BATCH = 2
SEQ = 8
ROWS = BATCH * SEQ            # 16
LANES = 128
CLS_CHUNKS = CLS_HIDDEN // LANES   # 4


# ----------------------------- packed-blob layouts (static) -----------------------------
class _BlobLayout:
    """Row allocator for a (rows, 128)-wide packed parameter blob."""

    def __init__(self, align):
        self.align = align
        self.rows = 0
        self.slots = {}

    def add(self, name, nrows, ncols):
        self.slots[name] = (self.rows, nrows, ncols)
        self.rows += -(-nrows // self.align) * self.align


def _build_layouts():
    w = _BlobLayout(align=16)                      # bf16 blob: 16-row (packed-sublane) alignment
    for l in range(N_LAYERS):
        w.add(f"attn{l}", HIDDEN, 4 * HIDDEN)      # [Wq | Wk | Wv | Wo]  (32, 128)
        w.add(f"ffn1_{l}", HIDDEN, FFN_DIM)        # (32, 128)
        w.add(f"ffn2T_{l}", HIDDEN, FFN_DIM)       # ffn_w2^T              (32, 128)
    for j in range(CLS_CHUNKS):
        w.add(f"cls1_{j}", HIDDEN, LANES)          # cls_w1[:, j*128:(j+1)*128]
    for j in range(CLS_CHUNKS):
        w.add(f"cls2T_{j}", NUM_LABELS, LANES)     # cls_w2[j*128:(j+1)*128, :]^T

    f = _BlobLayout(align=8)                       # f32 blob
    f.add("wembT", HIDDEN, LANES)                  # word_emb^T, vocab padded to 128 lanes
    f.add("pos", ROWS, HIDDEN)                     # pos_emb[:SEQ] tiled over batch
    f.add("emb_ln", 2, HIDDEN)                     # rows: gamma, beta
    for l in range(N_LAYERS):
        f.add(f"attn_b{l}", 4, HIDDEN)             # rows: q_b, k_b, v_b, o_b
        f.add(f"sa_ln{l}", 2, HIDDEN)
        f.add(f"ffn_b1_{l}", 1, FFN_DIM)
        f.add(f"ffn_b2_{l}", 1, HIDDEN)
        f.add(f"out_ln{l}", 2, HIDDEN)
    f.add("cls_b1", CLS_CHUNKS, LANES)
    f.add("cls_b2", 1, NUM_LABELS)
    return w, f


W_LAYOUT, F_LAYOUT = _build_layouts()


# ----------------------------- in-kernel helpers -----------------------------
def _layernorm(x, g, b):
    mu = jnp.mean(x, axis=-1, keepdims=True)
    var = jnp.mean((x - mu) * (x - mu), axis=-1, keepdims=True)
    return (x - mu) * jax.lax.rsqrt(var + LN_EPS) * g + b


def _gelu_tanh(x):
    # TODO(synk): HF DistilBERT uses exact erf-GELU; tanh approximation used because erf
    # has no guaranteed Mosaic lowering.  Kept in f32 (no bf16 VPU/EUP on v5e).
    c = math.sqrt(2.0 / math.pi)
    return 0.5 * x * (1.0 + jnp.tanh(c * (x + 0.044715 * x * x * x)))


def _dot(a_bf16, b_bf16):
    return jnp.dot(a_bf16, b_bf16, preferred_element_type=jnp.float32)


def _dot_nt(a, b):
    """a @ b.T (contract last dims), f32 accumulation."""
    return jax.lax.dot_general(a, b, (((1,), (1,)), ((), ())),
                               preferred_element_type=jnp.float32)


# ----------------------------- fused forward kernel -----------------------------
def fused_encoder_classifier_kernel(w_ref, f_ref, ids_ref, bias_ref, out_ref):
    """w_ref: (Wrows,128) bf16 blob, f_ref: (Frows,128) f32 blob,
    ids_ref: (B*S,1) int32, bias_ref: (B,1,S) f32, out_ref: (B*S, NUM_LABELS) f32."""

    def wblk(name):
        r0, nr, nc = W_LAYOUT.slots[name]
        return w_ref[r0:r0 + nr, 0:nc]

    def fblk(name):
        r0, nr, nc = F_LAYOUT.slots[name]
        return f_ref[r0:r0 + nr, 0:nc]

    H, Dh = HIDDEN, HEAD_DIM

    # ---- embedding lookup fused in-kernel: one-hot(ids) @ word_emb^T (exact, f32 MXU) ----
    ids = ids_ref[...]                                                   # (R, 1) int32
    iota = jax.lax.broadcasted_iota(jnp.int32, (ROWS, LANES), 1)
    onehot = (iota == ids).astype(jnp.float32)                           # (R, 128)
    h = _dot_nt(onehot, fblk("wembT"))                                   # (R, H) f32
    h = h + fblk("pos")                                                  # + positional emb
    emb_ln = fblk("emb_ln")
    h = _layernorm(h, emb_ln[0:1, :], emb_ln[1:2, :])                    # (emb dropout = id)

    attn_bias = bias_ref[...]                                            # (B, 1, S) additive mask

    for l in range(N_LAYERS):                 # static unroll: weights stay resident in VMEM
        a0, _, _ = W_LAYOUT.slots[f"attn{l}"]
        ab = fblk(f"attn_b{l}")                                          # (4, H): q/k/v/o biases
        h_bf = h.astype(jnp.bfloat16)                                    # one bf16 shadow per stage

        # ---- Q/K/V: three lane-aligned (32,32) matmuls ----
        q = _dot(h_bf, w_ref[a0:a0 + H, 0:H]) + ab[0:1, :]
        k = _dot(h_bf, w_ref[a0:a0 + H, H:2 * H]) + ab[1:2, :]
        v = _dot(h_bf, w_ref[a0:a0 + H, 2 * H:3 * H]) + ab[2:3, :]
        q_bf = (q * ATTN_SCALE).astype(jnp.bfloat16)                     # scale q (as HF does)
        k_bf = k.astype(jnp.bfloat16)
        v_bf = v.astype(jnp.bfloat16)

        # ---- attention: per head, batched over batch via 3-D einsums; the per-head
        #      context is folded straight into the output projection (no concatenates) ----
        sa = jnp.zeros((ROWS, H), jnp.float32)
        for hd in range(N_HEADS):
            c0 = hd * Dh
            qh = q_bf[:, c0:c0 + Dh].reshape(BATCH, SEQ, Dh)             # leading-dim split: free
            kh = k_bf[:, c0:c0 + Dh].reshape(BATCH, SEQ, Dh)
            vh = v_bf[:, c0:c0 + Dh].reshape(BATCH, SEQ, Dh)
            s = jnp.einsum('bqd,bkd->bqk', qh, kh,
                           preferred_element_type=jnp.float32) + attn_bias
            s = s - jnp.max(s, axis=-1, keepdims=True)
            p = jnp.exp(s)
            p = p * pl.reciprocal(jnp.sum(p, axis=-1, keepdims=True), approx=True)
            ctx = jnp.einsum('bqk,bkd->bqd', p.astype(jnp.bfloat16), vh,
                             preferred_element_type=jnp.float32)         # (B, S, Dh)
            wo_h = w_ref[a0 + c0:a0 + c0 + Dh, 3 * H:4 * H]              # (Dh, H) slice of Wo
            sa = sa + _dot(ctx.reshape(ROWS, Dh).astype(jnp.bfloat16), wo_h)
        sa = sa + ab[3:4, :]

        ln = fblk(f"sa_ln{l}")
        h = _layernorm(sa + h, ln[0:1, :], ln[1:2, :])

        # ---- FFN (lin1 + GELU + lin2) + residual + LayerNorm ----
        h_bf = h.astype(jnp.bfloat16)
        f1 = _gelu_tanh(_dot(h_bf, wblk(f"ffn1_{l}")) + fblk(f"ffn_b1_{l}"))   # (R, 128) f32
        f2 = _dot_nt(f1.astype(jnp.bfloat16), wblk(f"ffn2T_{l}")) + fblk(f"ffn_b2_{l}")
        ln = fblk(f"out_ln{l}")
        h = _layernorm(f2 + h, ln[0:1, :], ln[1:2, :])

    # ---- classifier head over ALL rows (CLS selection done on the tiny result in the
    #      wrapper); 512-wide hidden processed in 4 lane-dense chunks; dropouts = identity ----
    h_bf = h.astype(jnp.bfloat16)
    b1 = fblk("cls_b1")                                                  # (4, 128)
    logits = jnp.zeros((ROWS, NUM_LABELS), jnp.float32)
    for j in range(CLS_CHUNKS):
        hid = jnp.maximum(_dot(h_bf, wblk(f"cls1_{j}")) + b1[j:j + 1, :], 0.0)
        logits = logits + _dot_nt(hid.astype(jnp.bfloat16), wblk(f"cls2T_{j}"))
    logits = logits + fblk("cls_b2")
    out_ref[...] = logits.astype(out_ref.dtype)


# ----------------------------- wrapper -----------------------------
def _full_spec(a):
    nd = a.ndim
    return pl.BlockSpec(a.shape, lambda i, _nd=nd: (0,) * _nd)


def fused_forward(packed, input_ids, attention_mask):
    B, S = input_ids.shape
    ids = input_ids.reshape(B * S, 1).astype(jnp.int32)
    bias = jnp.where(attention_mask > 0, 0.0, NEG_BIG).astype(jnp.float32).reshape(B, 1, S)

    inputs = (packed["wblob"], packed["fblob"], ids, bias)

    logits_all = pl.pallas_call(
        fused_encoder_classifier_kernel,
        out_shape=jax.ShapeDtypeStruct((B * S, NUM_LABELS), jnp.float32),
        grid=(1,),
        in_specs=[_full_spec(a) for a in inputs],
        out_specs=pl.BlockSpec((B * S, NUM_LABELS), lambda i: (0, 0)),
        compiler_params=pltpu.CompilerParams(
            dimension_semantics=("arbitrary",)),      # single-shot kernel; nothing to split
    )(*inputs)

    # pooled CLS output = hidden state at position 0 of each sequence
    return logits_all.reshape(B, S, NUM_LABELS)[:, 0, :]


# ----------------------------- parameters -----------------------------
def init_params(key):
    def nrm(k, shape, scale=0.02):
        return scale * jax.random.normal(k, shape, dtype=jnp.float32)

    keys = iter(jax.random.split(key, 64))
    p = {
        "word_emb": nrm(next(keys), (VOCAB, HIDDEN)),
        "pos_emb": nrm(next(keys), (MAX_POS, HIDDEN)),
        "emb_ln_g": jnp.ones((HIDDEN,), jnp.float32),
        "emb_ln_b": jnp.zeros((HIDDEN,), jnp.float32),
        "layers": [],
        # classifier head: Linear(HIDDEN, 512) -> ReLU -> Linear(512, NUM_LABELS)
        # (stored as (in, out); equivalent to torch's x @ W.T + b)
        "cls_w1": nrm(next(keys), (HIDDEN, CLS_HIDDEN)),
        "cls_b1": jnp.zeros((CLS_HIDDEN,), jnp.float32),
        "cls_w2": nrm(next(keys), (CLS_HIDDEN, NUM_LABELS)),
        "cls_b2": jnp.zeros((NUM_LABELS,), jnp.float32),
    }
    for _ in range(N_LAYERS):
        p["layers"].append({
            "q_w": nrm(next(keys), (HIDDEN, HIDDEN)), "q_b": jnp.zeros((HIDDEN,), jnp.float32),
            "k_w": nrm(next(keys), (HIDDEN, HIDDEN)), "k_b": jnp.zeros((HIDDEN,), jnp.float32),
            "v_w": nrm(next(keys), (HIDDEN, HIDDEN)), "v_b": jnp.zeros((HIDDEN,), jnp.float32),
            "o_w": nrm(next(keys), (HIDDEN, HIDDEN)), "o_b": jnp.zeros((HIDDEN,), jnp.float32),
            "sa_ln_g": jnp.ones((HIDDEN,), jnp.float32), "sa_ln_b": jnp.zeros((HIDDEN,), jnp.float32),
            "ffn_w1": nrm(next(keys), (HIDDEN, FFN_DIM)), "ffn_b1": jnp.zeros((FFN_DIM,), jnp.float32),
            "ffn_w2": nrm(next(keys), (FFN_DIM, HIDDEN)), "ffn_b2": jnp.zeros((HIDDEN,), jnp.float32),
            "out_ln_g": jnp.ones((HIDDEN,), jnp.float32), "out_ln_b": jnp.zeros((HIDDEN,), jnp.float32),
        })
    return p


def pack_params(p):
    """One-time packing of all parameters into two flat (rows, 128) blobs."""
    p = jax.tree_util.tree_map(np.asarray, p)
    wblob = np.zeros((W_LAYOUT.rows, LANES), np.float32)
    fblob = np.zeros((F_LAYOUT.rows, LANES), np.float32)

    def putw(name, a):
        a = np.asarray(a, np.float32)
        r0, nr, nc = W_LAYOUT.slots[name]
        assert a.shape[0] <= nr and a.shape[1] <= nc
        wblob[r0:r0 + a.shape[0], 0:a.shape[1]] = a

    def putf(name, a):
        a = np.asarray(a, np.float32)
        r0, nr, nc = F_LAYOUT.slots[name]
        assert a.shape[0] <= nr and a.shape[1] <= nc
        fblob[r0:r0 + a.shape[0], 0:a.shape[1]] = a

    putf("wembT", p["word_emb"].T)                                   # (32, 100) -> padded lanes
    putf("pos", np.tile(p["pos_emb"][:SEQ], (BATCH, 1)))             # (B*S, H)
    putf("emb_ln", np.stack([p["emb_ln_g"], p["emb_ln_b"]]))
    for l, lp in enumerate(p["layers"]):
        putw(f"attn{l}", np.concatenate([lp["q_w"], lp["k_w"], lp["v_w"], lp["o_w"]], axis=1))
        putw(f"ffn1_{l}", lp["ffn_w1"])
        putw(f"ffn2T_{l}", lp["ffn_w2"].T)
        putf(f"attn_b{l}", np.stack([lp["q_b"], lp["k_b"], lp["v_b"], lp["o_b"]]))
        putf(f"sa_ln{l}", np.stack([lp["sa_ln_g"], lp["sa_ln_b"]]))
        putf(f"ffn_b1_{l}", lp["ffn_b1"][None, :])
        putf(f"ffn_b2_{l}", lp["ffn_b2"][None, :])
        putf(f"out_ln{l}", np.stack([lp["out_ln_g"], lp["out_ln_b"]]))
    for j in range(CLS_CHUNKS):
        putw(f"cls1_{j}", p["cls_w1"][:, j * LANES:(j + 1) * LANES])
        putw(f"cls2T_{j}", p["cls_w2"][j * LANES:(j + 1) * LANES, :].T)
    putf("cls_b1", p["cls_b1"].reshape(CLS_CHUNKS, LANES))
    putf("cls_b2", p["cls_b2"][None, :])

    return {"wblob": jnp.asarray(wblob, jnp.bfloat16),
            "fblob": jnp.asarray(fblob, jnp.float32)}


# ----------------------------- main -----------------------------
if __name__ == "__main__":
    key = jax.random.PRNGKey(0)
    pkey, ikey = jax.random.split(key)

    params = init_params(pkey)
    packed = pack_params(params)

    input_ids = jax.random.randint(ikey, (BATCH, SEQ), 0, VOCAB, dtype=jnp.int32)
    # second example has two padding positions to exercise the attention mask.
    attention_mask = jnp.array(
        [[1, 1, 1, 1, 1, 1, 1, 1],
         [1, 1, 1, 1, 1, 1, 0, 0]], dtype=jnp.int32)

    logits = jax.jit(fused_forward)(packed, input_ids, attention_mask)
    jax.block_until_ready(logits)
    assert logits.shape == (BATCH, NUM_LABELS) and logits.dtype == jnp.float32
    assert bool(jnp.all(jnp.isfinite(logits)))
    print("KERNEL_OK")
</pallas_src>

<mosaic_0001>
module attributes {stable_mosaic.version = 11 : i64} {
  func.func @fused_encoder_classifier_kernel(%arg0: i32, %arg1: memref<384x128xbf16, #tpu.memory_space<vmem>>, %arg2: memref<152x128xf32, #tpu.memory_space<vmem>>, %arg3: memref<16x1xi32, #tpu.memory_space<vmem>>, %arg4: memref<2x1x8xf32, #tpu.memory_space<vmem>>, %arg5: memref<16x2xf32, #tpu.memory_space<vmem>>) attributes {dimension_semantics = [#tpu.dimension_semantics<arbitrary>], iteration_bounds = array<i64: 1>, scalar_prefetch = 0 : i64, scratch_operands = 0 : i64, tpu.core_type = #tpu.core_type<tc>, window_params = [{pipeline_mode = #tpu.pipeline_mode<synchronous>, transform_indices = @transform_0, window_bounds = array<i64: 384, 128>}, {pipeline_mode = #tpu.pipeline_mode<synchronous>, transform_indices = @transform_1, window_bounds = array<i64: 152, 128>}, {pipeline_mode = #tpu.pipeline_mode<synchronous>, transform_indices = @transform_2, window_bounds = array<i64: 16, 1>}, {pipeline_mode = #tpu.pipeline_mode<synchronous>, transform_indices = @transform_3, window_bounds = array<i64: 2, 1, 8>}, {pipeline_mode = #tpu.pipeline_mode<synchronous>, transform_indices = @transform_4, window_bounds = array<i64: 16, 2>}]} {
    %c0 = arith.constant 0 : index
    %c0_0 = arith.constant 0 : index
    %0 = vector.load %arg3[%c0, %c0_0] : memref<16x1xi32, #tpu.memory_space<vmem>>, vector<16x1xi32>
    %1 = tpu.iota {dimensions = array<i32: 1>} : vector<16x128xi32>
    %2 = vector.broadcast %0 : vector<16x1xi32> to vector<16x128xi32>
    %3 = arith.cmpi eq, %1, %2 : vector<16x128xi32>
    %4 = arith.extui %3 : vector<16x128xi1> to vector<16x128xi32>
    %5 = arith.sitofp %4 : vector<16x128xi32> to vector<16x128xf32>
    %c0_1 = arith.constant 0 : index
    %c0_2 = arith.constant 0 : index
    %6 = vector.load %arg2[%c0_1, %c0_2] : memref<152x128xf32, #tpu.memory_space<vmem>>, vector<32x128xf32>
    %cst = arith.constant dense<0.000000e+00> : vector<16x32xf32>
    %7 = tpu.matmul %5, %6, %cst {dimension_numbers = #tpu.dot_dimension_numbers<[1], [1], [0], [0], [0, 0, 1, 0], [], []>} : vector<16x128xf32>, vector<32x128xf32>, vector<16x32xf32> -> vector<16x32xf32>
    %c32 = arith.constant 32 : index
    %c0_3 = arith.constant 0 : index
    %8 = vector.load %arg2[%c32, %c0_3] : memref<152x128xf32, #tpu.memory_space<vmem>>, vector<16x32xf32>
    %9 = arith.addf %7, %8 : vector<16x32xf32>
    %c48 = arith.constant 48 : index
    %c0_4 = arith.constant 0 : index
    %10 = vector.load %arg2[%c48, %c0_4] : memref<152x128xf32, #tpu.memory_space<vmem>>, vector<2x32xf32>
    %11 = vector.extract_strided_slice %10 {offsets = [0, 0], sizes = [1, 32], strides = [1, 1]} : vector<2x32xf32> to vector<1x32xf32>
    %12 = vector.extract_strided_slice %10 {offsets = [1, 0], sizes = [1, 32], strides = [1, 1]} : vector<2x32xf32> to vector<1x32xf32>
    %cst_5 = arith.constant dense<0.000000e+00> : vector<16xf32>
    %13 = vector.multi_reduction <add>, %9, %cst_5 [1] : vector<16x32xf32> to vector<16xf32>
    %14 = vector.shape_cast %13 : vector<16xf32> to vector<16x1xf32>
    %cst_6 = arith.constant 3.200000e+01 : f32
    %15 = vector.broadcast %cst_6 : f32 to vector<16x1xf32>
    %16 = arith.divf %14, %15 : vector<16x1xf32>
    %17 = vector.broadcast %16 : vector<16x1xf32> to vector<16x32xf32>
    %18 = arith.subf %9, %17 : vector<16x32xf32>
    %19 = vector.broadcast %16 : vector<16x1xf32> to vector<16x32xf32>
    %20 = arith.subf %9, %19 : vector<16x32xf32>
    %21 = arith.mulf %18, %20 : vector<16x32xf32>
    %cst_7 = arith.constant dense<0.000000e+00> : vector<16xf32>
    %22 = vector.multi_reduction <add>, %21, %cst_7 [1] : vector<16x32xf32> to vector<16xf32>
    %23 = vector.shape_cast %22 : vector<16xf32> to vector<16x1xf32>
    %cst_8 = arith.constant 3.200000e+01 : f32
    %24 = vector.broadcast %cst_8 : f32 to vector<16x1xf32>
    %25 = arith.divf %23, %24 : vector<16x1xf32>
    %26 = vector.broadcast %16 : vector<16x1xf32> to vector<16x32xf32>
    %27 = arith.subf %9, %26 : vector<16x32xf32>
    %cst_9 = arith.constant 9.99999996E-13 : f32
    %28 = vector.broadcast %cst_9 : f32 to vector<16x1xf32>
    %29 = arith.addf %25, %28 : vector<16x1xf32>
    %30 = math.rsqrt %29 : vector<16x1xf32>
    %31 = vector.broadcast %30 : vector<16x1xf32> to vector<16x32xf32>
    %32 = arith.mulf %27, %31 : vector<16x32xf32>
    %33 = vector.broadcast %11 : vector<1x32xf32> to vector<16x32xf32>
    %34 = arith.mulf %32, %33 : vector<16x32xf32>
    %35 = vector.broadcast %12 : vector<1x32xf32> to vector<16x32xf32>
    %36 = arith.addf %34, %35 : vector<16x32xf32>
    %c0_10 = arith.constant 0 : index
    %c0_11 = arith.constant 0 : index
    %c0_12 = arith.constant 0 : index
    %37 = vector.load %arg4[%c0_10, %c0_11, %c0_12] : memref<2x1x8xf32, #tpu.memory_space<vmem>>, vector<2x1x8xf32>
    %c56 = arith.constant 56 : index
    %c0_13 = arith.constant 0 : index
    %38 = vector.load %arg2[%c56, %c0_13] : memref<152x128xf32, #tpu.memory_space<vmem>>, vector<4x32xf32>
    %39 = arith.truncf %36 : vector<16x32xf32> to vector<16x32xbf16>
    %c0_14 = arith.constant 0 : index
    %c0_15 = arith.constant 0 : index
    %40 = vector.load %arg1[%c0_14, %c0_15] : memref<384x128xbf16, #tpu.memory_space<vmem>>, vector<32x32xbf16>
    %cst_16 = arith.constant dense<0.000000e+00> : vector<16x32xf32>
    %41 = tpu.matmul %39, %40, %cst_16 {dimension_numbers = #tpu.dot_dimension_numbers<[1], [0], [0], [1], [0, 0, 1, 1], [], []>} : vector<16x32xbf16>, vector<32x32xbf16>, vector<16x32xf32> -> vector<16x32xf32>
    %42 = vector.extract_strided_slice %38 {offsets = [0, 0], sizes = [1, 32], strides = [1, 1]} : vector<4x32xf32> to vector<1x32xf32>
    %43 = vector.broadcast %42 : vector<1x32xf32> to vector<16x32xf32>
    %44 = arith.addf %41, %43 : vector<16x32xf32>
    %c0_17 = arith.constant 0 : index
    %c32_18 = arith.constant 32 : index
    %45 = vector.load %arg1[%c0_17, %c32_18] : memref<384x128xbf16, #tpu.memory_space<vmem>>, vector<32x32xbf16>
    %cst_19 = arith.constant dense<0.000000e+00> : vector<16x32xf32>
    %46 = tpu.matmul %39, %45, %cst_19 {dimension_numbers = #tpu.dot_dimension_numbers<[1], [0], [0], [1], [0, 0, 1, 1], [], []>} : vector<16x32xbf16>, vector<32x32xbf16>, vector<16x32xf32> -> vector<16x32xf32>
    %47 = vector.extract_strided_slice %38 {offsets = [1, 0], sizes = [1, 32], strides = [1, 1]} : vector<4x32xf32> to vector<1x32xf32>
    %48 = vector.broadcast %47 : vector<1x32xf32> to vector<16x32xf32>
    %49 = arith.addf %46, %48 : vector<16x32xf32>
    %c0_20 = arith.constant 0 : index
    %c64 = arith.constant 64 : index
    %50 = vector.load %arg1[%c0_20, %c64] : memref<384x128xbf16, #tpu.memory_space<vmem>>, vector<32x32xbf16>
    %cst_21 = arith.constant dense<0.000000e+00> : vector<16x32xf32>
    %51 = tpu.matmul %39, %50, %cst_21 {dimension_numbers = #tpu.dot_dimension_numbers<[1], [0], [0], [1], [0, 0, 1, 1], [], []>} : vector<16x32xbf16>, vector<32x32xbf16>, vector<16x32xf32> -> vector<16x32xf32>
    %52 = vector.extract_strided_slice %38 {offsets = [2, 0], sizes = [1, 32], strides = [1, 1]} : vector<4x32xf32> to vector<1x32xf32>
    %53 = vector.broadcast %52 : vector<1x32xf32> to vector<16x32xf32>
    %54 = arith.addf %51, %53 : vector<16x32xf32>
    %cst_22 = arith.constant 0.353553385 : f32
    %55 = vector.broadcast %cst_22 : f32 to vector<16x32xf32>
    %56 = arith.mulf %44, %55 : vector<16x32xf32>
    %57 = arith.truncf %56 : vector<16x32xf32> to vector<16x32xbf16>
    %58 = arith.truncf %49 : vector<16x32xf32> to vector<16x32xbf16>
    %59 = arith.truncf %54 : vector<16x32xf32> to vector<16x32xbf16>
    %cst_23 = arith.constant 0.000000e+00 : f32
    %60 = vector.broadcast %cst_23 : f32 to vector<16x32xf32>
    %61 = vector.extract_strided_slice %57 {offsets = [0, 0], sizes = [16, 8], strides = [1, 1]} : vector<16x32xbf16> to vector<16x8xbf16>
    %62 = vector.shape_cast %61 : vector<16x8xbf16> to vector<2x8x8xbf16>
    %63 = vector.extract_strided_slice %58 {offsets = [0, 0], sizes = [16, 8], strides = [1, 1]} : vector<16x32xbf16> to vector<16x8xbf16>
    %64 = vector.shape_cast %63 : vector<16x8xbf16> to vector<2x8x8xbf16>
    %65 = vector.extract_strided_slice %59 {offsets = [0, 0], sizes = [16, 8], strides = [1, 1]} : vector<16x32xbf16> to vector<16x8xbf16>
    %66 = vector.shape_cast %65 : vector<16x8xbf16> to vector<2x8x8xbf16>
    "tpu.trace_start"() <{level = 10 : i32, message = "bqd,bkd->bqk"}> : () -> ()
    %cst_24 = arith.constant dense<0.000000e+00> : vector<2x8x8xf32>
    %67 = tpu.matmul %62, %64, %cst_24 {dimension_numbers = #tpu.dot_dimension_numbers<[2], [2], [1], [1], [0, 0, 0, 1, 1, 1], [0], [0]>} : vector<2x8x8xbf16>, vector<2x8x8xbf16>, vector<2x8x8xf32> -> vector<2x8x8xf32>
    "tpu.trace_stop"() : () -> ()
    %68 = vector.broadcast %37 : vector<2x1x8xf32> to vector<2x8x8xf32>
    %69 = arith.addf %67, %68 : vector<2x8x8xf32>
    %cst_25 = arith.constant dense<0xFF800000> : vector<2x8xf32>
    %70 = vector.multi_reduction <maximumf>, %69, %cst_25 [2] : vector<2x8x8xf32> to vector<2x8xf32>
    %71 = vector.shape_cast %70 : vector<2x8xf32> to vector<2x8x1xf32>
    %72 = vector.broadcast %71 : vector<2x8x1xf32> to vector<2x8x8xf32>
    %73 = arith.subf %69, %72 : vector<2x8x8xf32>
    %74 = math.exp %73 : vector<2x8x8xf32>
    %cst_26 = arith.constant dense<0.000000e+00> : vector<2x8xf32>
    %75 = vector.multi_reduction <add>, %74, %cst_26 [2] : vector<2x8x8xf32> to vector<2x8xf32>
    %76 = vector.shape_cast %75 : vector<2x8xf32> to vector<2x8x1xf32>
    %77 = tpu.reciprocal %76 {approx = true} : vector<2x8x1xf32> -> vector<2x8x1xf32>
    %78 = vector.broadcast %77 : vector<2x8x1xf32> to vector<2x8x8xf32>
    %79 = arith.mulf %74, %78 : vector<2x8x8xf32>
    %80 = arith.truncf %79 : vector<2x8x8xf32> to vector<2x8x8xbf16>
    "tpu.trace_start"() <{level = 10 : i32, message = "bqk,bkd->bqd"}> : () -> ()
    %cst_27 = arith.constant dense<0.000000e+00> : vector<2x8x8xf32>
    %81 = tpu.matmul %80, %66, %cst_27 {dimension_numbers = #tpu.dot_dimension_numbers<[2], [1], [1], [2], [0, 0, 0, 1, 1, 2], [0], [0]>} : vector<2x8x8xbf16>, vector<2x8x8xbf16>, vector<2x8x8xf32> -> vector<2x8x8xf32>
    "tpu.trace_stop"() : () -> ()
    %c0_28 = arith.constant 0 : index
    %c96 = arith.constant 96 : index
    %82 = vector.load %arg1[%c0_28, %c96] : memref<384x128xbf16, #tpu.memory_space<vmem>>, vector<8x32xbf16>
    %83 = vector.shape_cast %81 : vector<2x8x8xf32> to vector<16x8xf32>
    %84 = arith.truncf %83 : vector<16x8xf32> to vector<16x8xbf16>
    %cst_29 = arith.constant dense<0.000000e+00> : vector<16x32xf32>
    %85 = tpu.matmul %84, %82, %cst_29 {dimension_numbers = #tpu.dot_dimension_numbers<[1], [0], [0], [1], [0, 0, 1, 1], [], []>} : vector<16x8xbf16>, vector<8x32xbf16>, vector<16x32xf32> -> vector<16x32xf32>
    %86 = arith.addf %60, %85 : vector<16x32xf32>
    %87 = vector.extract_strided_slice %57 {offsets = [0, 8], sizes = [16, 8], strides = [1, 1]} : vector<16x32xbf16> to vector<16x8xbf16>
    %88 = vector.shape_cast %87 : vector<16x8xbf16> to vector<2x8x8xbf16>
    %89 = vector.extract_strided_slice %58 {offsets = [0, 8], sizes = [16, 8], strides = [1, 1]} : vector<16x32xbf16> to vector<16x8xbf16>
    %90 = vector.shape_cast %89 : vector<16x8xbf16> to vector<2x8x8xbf16>
    %91 = vector.extract_strided_slice %59 {offsets = [0, 8], sizes = [16, 8], strides = [1, 1]} : vector<16x32xbf16> to vector<16x8xbf16>
    %92 = vector.shape_cast %91 : vector<16x8xbf16> to vector<2x8x8xbf16>
    "tpu.trace_start"() <{level = 10 : i32, message = "bqd,bkd->bqk"}> : () -> ()
    %cst_30 = arith.constant dense<0.000000e+00> : vector<2x8x8xf32>
    %93 = tpu.matmul %88, %90, %cst_30 {dimension_numbers = #tpu.dot_dimension_numbers<[2], [2], [1], [1], [0, 0, 0, 1, 1, 1], [0], [0]>} : vector<2x8x8xbf16>, vector<2x8x8xbf16>, vector<2x8x8xf32> -> vector<2x8x8xf32>
    "tpu.trace_stop"() : () -> ()
    %94 = vector.broadcast %37 : vector<2x1x8xf32> to vector<2x8x8xf32>
    %95 = arith.addf %93, %94 : vector<2x8x8xf32>
    %cst_31 = arith.constant dense<0xFF800000> : vector<2x8xf32>
    %96 = vector.multi_reduction <maximumf>, %95, %cst_31 [2] : vector<2x8x8xf32> to vector<2x8xf32>
    %97 = vector.shape_cast %96 : vector<2x8xf32> to vector<2x8x1xf32>
    %98 = vector.broadcast %97 : vector<2x8x1xf32> to vector<2x8x8xf32>
    %99 = arith.subf %95, %98 : vector<2x8x8xf32>
    %100 = math.exp %99 : vector<2x8x8xf32>
    %cst_32 = arith.constant dense<0.000000e+00> : vector<2x8xf32>
    %101 = vector.multi_reduction <add>, %100, %cst_32 [2] : vector<2x8x8xf32> to vector<2x8xf32>
    %102 = vector.shape_cast %101 : vector<2x8xf32> to vector<2x8x1xf32>
    %103 = tpu.reciprocal %102 {approx = true} : vector<2x8x1xf32> -> vector<2x8x1xf32>
    %104 = vector.broadcast %103 : vector<2x8x1xf32> to vector<2x8x8xf32>
    %105 = arith.mulf %100, %104 : vector<2x8x8xf32>
    %106 = arith.truncf %105 : vector<2x8x8xf32> to vector<2x8x8xbf16>
    "tpu.trace_start"() <{level = 10 : i32, message = "bqk,bkd->bqd"}> : () -> ()
    %cst_33 = arith.constant dense<0.000000e+00> : vector<2x8x8xf32>
    %107 = tpu.matmul %106, %92, %cst_33 {dimension_numbers = #tpu.dot_dimension_numbers<[2], [1], [1], [2], [0, 0, 0, 1, 1, 2], [0], [0]>} : vector<2x8x8xbf16>, vector<2x8x8xbf16>, vector<2x8x8xf32> -> vector<2x8x8xf32>
    "tpu.trace_stop"() : () -> ()
    %c8 = arith.constant 8 : index
    %c96_34 = arith.constant 96 : index
    %108 = vector.load %arg1[%c8, %c96_34] : memref<384x128xbf16, #tpu.memory_space<vmem>>, vector<8x32xbf16>
    %109 = vector.shape_cast %107 : vector<2x8x8xf32> to vector<16x8xf32>
    %110 = arith.truncf %109 : vector<16x8xf32> to vector<16x8xbf16>
    %cst_35 = arith.constant dense<0.000000e+00> : vector<16x32xf32>
    %111 = tpu.matmul %110, %108, %cst_35 {dimension_numbers = #tpu.dot_dimension_numbers<[1], [0], [0], [1], [0, 0, 1, 1], [], []>} : vector<16x8xbf16>, vector<8x32xbf16>, vector<16x32xf32> -> vector<16x32xf32>
    %112 = arith.addf %86, %111 : vector<16x32xf32>
    %113 = vector.extract_strided_slice %57 {offsets = [0, 16], sizes = [16, 8], strides = [1, 1]} : vector<16x32xbf16> to vector<16x8xbf16>
    %114 = vector.shape_cast %113 : vector<16x8xbf16> to vector<2x8x8xbf16>
    %115 = vector.extract_strided_slice %58 {offsets = [0, 16], sizes = [16, 8], strides = [1, 1]} : vector<16x32xbf16> to vector<16x8xbf16>
    %116 = vector.shape_cast %115 : vector<16x8xbf16> to vector<2x8x8xbf16>
    %117 = vector.extract_strided_slice %59 {offsets = [0, 16], sizes = [16, 8], strides = [1, 1]} : vector<16x32xbf16> to vector<16x8xbf16>
    %118 = vector.shape_cast %117 : vector<16x8xbf16> to vector<2x8x8xbf16>
    "tpu.trace_start"() <{level = 10 : i32, message = "bqd,bkd->bqk"}> : () -> ()
    %cst_36 = arith.constant dense<0.000000e+00> : vector<2x8x8xf32>
    %119 = tpu.matmul %114, %116, %cst_36 {dimension_numbers = #tpu.dot_dimension_numbers<[2], [2], [1], [1], [0, 0, 0, 1, 1, 1], [0], [0]>} : vector<2x8x8xbf16>, vector<2x8x8xbf16>, vector<2x8x8xf32> -> vector<2x8x8xf32>
    "tpu.trace_stop"() : () -> ()
    %120 = vector.broadcast %37 : vector<2x1x8xf32> to vector<2x8x8xf32>
    %121 = arith.addf %119, %120 : vector<2x8x8xf32>
    %cst_37 = arith.constant dense<0xFF800000> : vector<2x8xf32>
    %122 = vector.multi_reduction <maximumf>, %121, %cst_37 [2] : vector<2x8x8xf32> to vector<2x8xf32>
    %123 = vector.shape_cast %122 : vector<2x8xf32> to vector<2x8x1xf32>
    %124 = vector.broadcast %123 : vector<2x8x1xf32> to vector<2x8x8xf32>
    %125 = arith.subf %121, %124 : vector<2x8x8xf32>
    %126 = math.exp %125 : vector<2x8x8xf32>
    %cst_38 = arith.constant dense<0.000000e+00> : vector<2x8xf32>
    %127 = vector.multi_reduction <add>, %126, %cst_38 [2] : vector<2x8x8xf32> to vector<2x8xf32>
    %128 = vector.shape_cast %127 : vector<2x8xf32> to vector<2x8x1xf32>
    %129 = tpu.reciprocal %128 {approx = true} : vector<2x8x1xf32> -> vector<2x8x1xf32>
    %130 = vector.broadcast %129 : vector<2x8x1xf32> to vector<2x8x8xf32>
    %131 = arith.mulf %126, %130 : vector<2x8x8xf32>
    %132 = arith.truncf %131 : vector<2x8x8xf32> to vector<2x8x8xbf16>
    "tpu.trace_start"() <{level = 10 : i32, message = "bqk,bkd->bqd"}> : () -> ()
    %cst_39 = arith.constant dense<0.000000e+00> : vector<2x8x8xf32>
    %133 = tpu.matmul %132, %118, %cst_39 {dimension_numbers = #tpu.dot_dimension_numbers<[2], [1], [1], [2], [0, 0, 0, 1, 1, 2], [0], [0]>} : vector<2x8x8xbf16>, vector<2x8x8xbf16>, vector<2x8x8xf32> -> vector<2x8x8xf32>
    "tpu.trace_stop"() : () -> ()
    %c16 = arith.constant 16 : index
    %c96_40 = arith.constant 96 : index
    %134 = vector.load %arg1[%c16, %c96_40] : memref<384x128xbf16, #tpu.memory_space<vmem>>, vector<8x32xbf16>
    %135 = vector.shape_cast %133 : vector<2x8x8xf32> to vector<16x8xf32>
    %136 = arith.truncf %135 : vector<16x8xf32> to vector<16x8xbf16>
    %cst_41 = arith.constant dense<0.000000e+00> : vector<16x32xf32>
    %137 = tpu.matmul %136, %134, %cst_41 {dimension_numbers = #tpu.dot_dimension_numbers<[1], [0], [0], [1], [0, 0, 1, 1], [], []>} : vector<16x8xbf16>, vector<8x32xbf16>, vector<16x32xf32> -> vector<16x32xf32>
    %138 = arith.addf %112, %137 : vector<16x32xf32>
    %139 = vector.extract_strided_slice %57 {offsets = [0, 24], sizes = [16, 8], strides = [1, 1]} : vector<16x32xbf16> to vector<16x8xbf16>
    %140 = vector.shape_cast %139 : vector<16x8xbf16> to vector<2x8x8xbf16>
    %141 = vector.extract_strided_slice %58 {offsets = [0, 24], sizes = [16, 8], strides = [1, 1]} : vector<16x32xbf16> to vector<16x8xbf16>
    %142 = vector.shape_cast %141 : vector<16x8xbf16> to vector<2x8x8xbf16>
    %143 = vector.extract_strided_slice %59 {offsets = [0, 24], sizes = [16, 8], strides = [1, 1]} : vector<16x32xbf16> to vector<16x8xbf16>
    %144 = vector.shape_cast %143 : vector<16x8xbf16> to vector<2x8x8xbf16>
    "tpu.trace_start"() <{level = 10 : i32, message = "bqd,bkd->bqk"}> : () -> ()
    %cst_42 = arith.constant dense<0.000000e+00> : vector<2x8x8xf32>
    %145 = tpu.matmul %140, %142, %cst_42 {dimension_numbers = #tpu.dot_dimension_numbers<[2], [2], [1], [1], [0, 0, 0, 1, 1, 1], [0], [0]>} : vector<2x8x8xbf16>, vector<2x8x8xbf16>, vector<2x8x8xf32> -> vector<2x8x8xf32>
    "tpu.trace_stop"() : () -> ()
    %146 = vector.broadcast %37 : vector<2x1x8xf32> to vector<2x8x8xf32>
    %147 = arith.addf %145, %146 : vector<2x8x8xf32>
    %cst_43 = arith.constant dense<0xFF800000> : vector<2x8xf32>
    %148 = vector.multi_reduction <maximumf>, %147, %cst_43 [2] : vector<2x8x8xf32> to vector<2x8xf32>
    %149 = vector.shape_cast %148 : vector<2x8xf32> to vector<2x8x1xf32>
    %150 = vector.broadcast %149 : vector<2x8x1xf32> to vector<2x8x8xf32>
    %151 = arith.subf %147, %150 : vector<2x8x8xf32>
    %152 = math.exp %151 : vector<2x8x8xf32>
    %cst_44 = arith.constant dense<0.000000e+00> : vector<2x8xf32>
    %153 = vector.multi_reduction <add>, %152, %cst_44 [2] : vector<2x8x8xf32> to vector<2x8xf32>
    %154 = vector.shape_cast %153 : vector<2x8xf32> to vector<2x8x1xf32>
    %155 = tpu.reciprocal %154 {approx = true} : vector<2x8x1xf32> -> vector<2x8x1xf32>
    %156 = vector.broadcast %155 : vector<2x8x1xf32> to vector<2x8x8xf32>
    %157 = arith.mulf %152, %156 : vector<2x8x8xf32>
    %158 = arith.truncf %157 : vector<2x8x8xf32> to vector<2x8x8xbf16>
    "tpu.trace_start"() <{level = 10 : i32, message = "bqk,bkd->bqd"}> : () -> ()
    %cst_45 = arith.constant dense<0.000000e+00> : vector<2x8x8xf32>
    %159 = tpu.matmul %158, %144, %cst_45 {dimension_numbers = #tpu.dot_dimension_numbers<[2], [1], [1], [2], [0, 0, 0, 1, 1, 2], [0], [0]>} : vector<2x8x8xbf16>, vector<2x8x8xbf16>, vector<2x8x8xf32> -> vector<2x8x8xf32>
    "tpu.trace_stop"() : () -> ()
    %c24 = arith.constant 24 : index
    %c96_46 = arith.constant 96 : index
    %160 = vector.load %arg1[%c24, %c96_46] : memref<384x128xbf16, #tpu.memory_space<vmem>>, vector<8x32xbf16>
    %161 = vector.shape_cast %159 : vector<2x8x8xf32> to vector<16x8xf32>
    %162 = arith.truncf %161 : vector<16x8xf32> to vector<16x8xbf16>
    %cst_47 = arith.constant dense<0.000000e+00> : vector<16x32xf32>
    %163 = tpu.matmul %162, %160, %cst_47 {dimension_numbers = #tpu.dot_dimension_numbers<[1], [0], [0], [1], [0, 0, 1, 1], [], []>} : vector<16x8xbf16>, vector<8x32xbf16>, vector<16x32xf32> -> vector<16x32xf32>
    %164 = arith.addf %138, %163 : vector<16x32xf32>
    %165 = vector.extract_strided_slice %38 {offsets = [3, 0], sizes = [1, 32], strides = [1, 1]} : vector<4x32xf32> to vector<1x32xf32>
    %166 = vector.broadcast %165 : vector<1x32xf32> to vector<16x32xf32>
    %167 = arith.addf %164, %166 : vector<16x32xf32>
    %c64_48 = arith.constant 64 : index
    %c0_49 = arith.constant 0 : index
    %168 = vector.load %arg2[%c64_48, %c0_49] : memref<152x128xf32, #tpu.memory_space<vmem>>, vector<2x32xf32>
    %169 = arith.addf %167, %36 : vector<16x32xf32>
    %170 = vector.extract_strided_slice %168 {offsets = [0, 0], sizes = [1, 32], strides = [1, 1]} : vector<2x32xf32> to vector<1x32xf32>
    %171 = vector.extract_strided_slice %168 {offsets = [1, 0], sizes = [1, 32], strides = [1, 1]} : vector<2x32xf32> to vector<1x32xf32>
    %cst_50 = arith.constant dense<0.000000e+00> : vector<16xf32>
    %172 = vector.multi_reduction <add>, %169, %cst_50 [1] : vector<16x32xf32> to vector<16xf32>
    %173 = vector.shape_cast %172 : vector<16xf32> to vector<16x1xf32>
    %cst_51 = arith.constant 3.200000e+01 : f32
    %174 = vector.broadcast %cst_51 : f32 to vector<16x1xf32>
    %175 = arith.divf %173, %174 : vector<16x1xf32>
    %176 = vector.broadcast %175 : vector<16x1xf32> to vector<16x32xf32>
    %177 = arith.subf %169, %176 : vector<16x32xf32>
    %178 = vector.broadcast %175 : vector<16x1xf32> to vector<16x32xf32>
    %179 = arith.subf %169, %178 : vector<16x32xf32>
    %180 = arith.mulf %177, %179 : vector<16x32xf32>
    %cst_52 = arith.constant dense<0.000000e+00> : vector<16xf32>
    %181 = vector.multi_reduction <add>, %180, %cst_52 [1] : vector<16x32xf32> to vector<16xf32>
    %182 = vector.shape_cast %181 : vector<16xf32> to vector<16x1xf32>
    %cst_53 = arith.constant 3.200000e+01 : f32
    %183 = vector.broadcast %cst_53 : f32 to vector<16x1xf32>
    %184 = arith.divf %182, %183 : vector<16x1xf32>
    %185 = vector.broadcast %175 : vector<16x1xf32> to vector<16x32xf32>
    %186 = arith.subf %169, %185 : vector<16x32xf32>
    %cst_54 = arith.constant 9.99999996E-13 : f32
    %187 = vector.broadcast %cst_54 : f32 to vector<16x1xf32>
    %188 = arith.addf %184, %187 : vector<16x1xf32>
    %189 = math.rsqrt %188 : vector<16x1xf32>
    %190 = vector.broadcast %189 : vector<16x1xf32> to vector<16x32xf32>
    %191 = arith.mulf %186, %190 : vector<16x32xf32>
    %192 = vector.broadcast %170 : vector<1x32xf32> to vector<16x32xf32>
    %193 = arith.mulf %191, %192 : vector<16x32xf32>
    %194 = vector.broadcast %171 : vector<1x32xf32> to vector<16x32xf32>
    %195 = arith.addf %193, %194 : vector<16x32xf32>
    %196 = arith.truncf %195 : vector<16x32xf32> to vector<16x32xbf16>
    %c32_55 = arith.constant 32 : index
    %c0_56 = arith.constant 0 : index
    %197 = vector.load %arg1[%c32_55, %c0_56] : memref<384x128xbf16, #tpu.memory_space<vmem>>, vector<32x128xbf16>
    %cst_57 = arith.constant dense<0.000000e+00> : vector<16x128xf32>
    %198 = tpu.matmul %196, %197, %cst_57 {dimension_numbers = #tpu.dot_dimension_numbers<[1], [0], [0], [1], [0, 0, 1, 1], [], []>} : vector<16x32xbf16>, vector<32x128xbf16>, vector<16x128xf32> -> vector<16x128xf32>
    %c72 = arith.constant 72 : index
    %c0_58 = arith.constant 0 : index
    %199 = vector.load %arg2[%c72, %c0_58] : memref<152x128xf32, #tpu.memory_space<vmem>>, vector<1x128xf32>
    %200 = vector.broadcast %199 : vector<1x128xf32> to vector<16x128xf32>
    %201 = arith.addf %198, %200 : vector<16x128xf32>
    %cst_59 = arith.constant 5.000000e-01 : f32
    %202 = vector.broadcast %cst_59 : f32 to vector<16x128xf32>
    %203 = arith.mulf %202, %201 : vector<16x128xf32>
    %cst_60 = arith.constant 4.471500e-02 : f32
    %204 = vector.broadcast %cst_60 : f32 to vector<16x128xf32>
    %205 = arith.mulf %204, %201 : vector<16x128xf32>
    %206 = arith.mulf %205, %201 : vector<16x128xf32>
    %207 = arith.mulf %206, %201 : vector<16x128xf32>
    %208 = arith.addf %201, %207 : vector<16x128xf32>
    %cst_61 = arith.constant 0.797884583 : f32
    %209 = vector.broadcast %cst_61 : f32 to vector<16x128xf32>
    %210 = arith.mulf %209, %208 : vector<16x128xf32>
    %211 = math.tanh %210 : vector<16x128xf32>
    %cst_62 = arith.constant 1.000000e+00 : f32
    %212 = vector.broadcast %cst_62 : f32 to vector<16x128xf32>
    %213 = arith.addf %212, %211 : vector<16x128xf32>
    %214 = arith.mulf %203, %213 : vector<16x128xf32>
    %215 = arith.truncf %214 : vector<16x128xf32> to vector<16x128xbf16>
    %c64_63 = arith.constant 64 : index
    %c0_64 = arith.constant 0 : index
    %216 = vector.load %arg1[%c64_63, %c0_64] : memref<384x128xbf16, #tpu.memory_space<vmem>>, vector<32x128xbf16>
    %cst_65 = arith.constant dense<0.000000e+00> : vector<16x32xf32>
    %217 = tpu.matmul %215, %216, %cst_65 {dimension_numbers = #tpu.dot_dimension_numbers<[1], [1], [0], [0], [0, 0, 1, 0], [], []>} : vector<16x128xbf16>, vector<32x128xbf16>, vector<16x32xf32> -> vector<16x32xf32>
    %c80 = arith.constant 80 : index
    %c0_66 = arith.constant 0 : index
    %218 = vector.load %arg2[%c80, %c0_66] : memref<152x128xf32, #tpu.memory_space<vmem>>, vector<1x32xf32>
    %219 = vector.broadcast %218 : vector<1x32xf32> to vector<16x32xf32>
    %220 = arith.addf %217, %219 : vector<16x32xf32>
    %c88 = arith.constant 88 : index
    %c0_67 = arith.constant 0 : index
    %221 = vector.load %arg2[%c88, %c0_67] : memref<152x128xf32, #tpu.memory_space<vmem>>, vector<2x32xf32>
    %222 = arith.addf %220, %195 : vector<16x32xf32>
    %223 = vector.extract_strided_slice %221 {offsets = [0, 0], sizes = [1, 32], strides = [1, 1]} : vector<2x32xf32> to vector<1x32xf32>
    %224 = vector.extract_strided_slice %221 {offsets = [1, 0], sizes = [1, 32], strides = [1, 1]} : vector<2x32xf32> to vector<1x32xf32>
    %cst_68 = arith.constant dense<0.000000e+00> : vector<16xf32>
    %225 = vector.multi_reduction <add>, %222, %cst_68 [1] : vector<16x32xf32> to vector<16xf32>
    %226 = vector.shape_cast %225 : vector<16xf32> to vector<16x1xf32>
    %cst_69 = arith.constant 3.200000e+01 : f32
    %227 = vector.broadcast %cst_69 : f32 to vector<16x1xf32>
    %228 = arith.divf %226, %227 : vector<16x1xf32>
    %229 = vector.broadcast %228 : vector<16x1xf32> to vector<16x32xf32>
    %230 = arith.subf %222, %229 : vector<16x32xf32>
    %231 = vector.broadcast %228 : vector<16x1xf32> to vector<16x32xf32>
    %232 = arith.subf %222, %231 : vector<16x32xf32>
    %233 = arith.mulf %230, %232 : vector<16x32xf32>
    %cst_70 = arith.constant dense<0.000000e+00> : vector<16xf32>
    %234 = vector.multi_reduction <add>, %233, %cst_70 [1] : vector<16x32xf32> to vector<16xf32>
    %235 = vector.shape_cast %234 : vector<16xf32> to vector<16x1xf32>
    %cst_71 = arith.constant 3.200000e+01 : f32
    %236 = vector.broadcast %cst_71 : f32 to vector<16x1xf32>
    %237 = arith.divf %235, %236 : vector<16x1xf32>
    %238 = vector.broadcast %228 : vector<16x1xf32> to vector<16x32xf32>
    %239 = arith.subf %222, %238 : vector<16x32xf32>
    %cst_72 = arith.constant 9.99999996E-13 : f32
    %240 = vector.broadcast %cst_72 : f32 to vector<16x1xf32>
    %241 = arith.addf %237, %240 : vector<16x1xf32>
    %242 = math.rsqrt %241 : vector<16x1xf32>
    %243 = vector.broadcast %242 : vector<16x1xf32> to vector<16x32xf32>
    %244 = arith.mulf %239, %243 : vector<16x32xf32>
    %245 = vector.broadcast %223 : vector<1x32xf32> to vector<16x32xf32>
    %246 = arith.mulf %244, %245 : vector<16x32xf32>
    %247 = vector.broadcast %224 : vector<1x32xf32> to vector<16x32xf32>
    %248 = arith.addf %246, %247 : vector<16x32xf32>
    %c96_73 = arith.constant 96 : index
    %c0_74 = arith.constant 0 : index
    %249 = vector.load %arg2[%c96_73, %c0_74] : memref<152x128xf32, #tpu.memory_space<vmem>>, vector<4x32xf32>
    %250 = arith.truncf %248 : vector<16x32xf32> to vector<16x32xbf16>
    %c96_75 = arith.constant 96 : index
    %c0_76 = arith.constant 0 : index
    %251 = vector.load %arg1[%c96_75, %c0_76] : memref<384x128xbf16, #tpu.memory_space<vmem>>, vector<32x32xbf16>
    %cst_77 = arith.constant dense<0.000000e+00> : vector<16x32xf32>
    %252 = tpu.matmul %250, %251, %cst_77 {dimension_numbers = #tpu.dot_dimension_numbers<[1], [0], [0], [1], [0, 0, 1, 1], [], []>} : vector<16x32xbf16>, vector<32x32xbf16>, vector<16x32xf32> -> vector<16x32xf32>
    %253 = vector.extract_strided_slice %249 {offsets = [0, 0], sizes = [1, 32], strides = [1, 1]} : vector<4x32xf32> to vector<1x32xf32>
    %254 = vector.broadcast %253 : vector<1x32xf32> to vector<16x32xf32>
    %255 = arith.addf %252, %254 : vector<16x32xf32>
    %c96_78 = arith.constant 96 : index
    %c32_79 = arith.constant 32 : index
    %256 = vector.load %arg1[%c96_78, %c32_79] : memref<384x128xbf16, #tpu.memory_space<vmem>>, vector<32x32xbf16>
    %cst_80 = arith.constant dense<0.000000e+00> : vector<16x32xf32>
    %257 = tpu.matmul %250, %256, %cst_80 {dimension_numbers = #tpu.dot_dimension_numbers<[1], [0], [0], [1], [0, 0, 1, 1], [], []>} : vector<16x32xbf16>, vector<32x32xbf16>, vector<16x32xf32> -> vector<16x32xf32>
    %258 = vector.extract_strided_slice %249 {offsets = [1, 0], sizes = [1, 32], strides = [1, 1]} : vector<4x32xf32> to vector<1x32xf32>
    %259 = vector.broadcast %258 : vector<1x32xf32> to vector<16x32xf32>
    %260 = arith.addf %257, %259 : vector<16x32xf32>
    %c96_81 = arith.constant 96 : index
    %c64_82 = arith.constant 64 : index
    %261 = vector.load %arg1[%c96_81, %c64_82] : memref<384x128xbf16, #tpu.memory_space<vmem>>, vector<32x32xbf16>
    %cst_83 = arith.constant dense<0.000000e+00> : vector<16x32xf32>
    %262 = tpu.matmul %250, %261, %cst_83 {dimension_numbers = #tpu.dot_dimension_numbers<[1], [0], [0], [1], [0, 0, 1, 1], [], []>} : vector<16x32xbf16>, vector<32x32xbf16>, vector<16x32xf32> -> vector<16x32xf32>
    %263 = vector.extract_strided_slice %249 {offsets = [2, 0], sizes = [1, 32], strides = [1, 1]} : vector<4x32xf32> to vector<1x32xf32>
    %264 = vector.broadcast %263 : vector<1x32xf32> to vector<16x32xf32>
    %265 = arith.addf %262, %264 : vector<16x32xf32>
    %cst_84 = arith.constant 0.353553385 : f32
    %266 = vector.broadcast %cst_84 : f32 to vector<16x32xf32>
    %267 = arith.mulf %255, %266 : vector<16x32xf32>
    %268 = arith.truncf %267 : vector<16x32xf32> to vector<16x32xbf16>
    %269 = arith.truncf %260 : vector<16x32xf32> to vector<16x32xbf16>
    %270 = arith.truncf %265 : vector<16x32xf32> to vector<16x32xbf16>
    %cst_85 = arith.constant 0.000000e+00 : f32
    %271 = vector.broadcast %cst_85 : f32 to vector<16x32xf32>
    %272 = vector.extract_strided_slice %268 {offsets = [0, 0], sizes = [16, 8], strides = [1, 1]} : vector<16x32xbf16> to vector<16x8xbf16>
    %273 = vector.shape_cast %272 : vector<16x8xbf16> to vector<2x8x8xbf16>
    %274 = vector.extract_strided_slice %269 {offsets = [0, 0], sizes = [16, 8], strides = [1, 1]} : vector<16x32xbf16> to vector<16x8xbf16>
    %275 = vector.shape_cast %274 : vector<16x8xbf16> to vector<2x8x8xbf16>
    %276 = vector.extract_strided_slice %270 {offsets = [0, 0], sizes = [16, 8], strides = [1, 1]} : vector<16x32xbf16> to vector<16x8xbf16>
    %277 = vector.shape_cast %276 : vector<16x8xbf16> to vector<2x8x8xbf16>
    "tpu.trace_start"() <{level = 10 : i32, message = "bqd,bkd->bqk"}> : () -> ()
    %cst_86 = arith.constant dense<0.000000e+00> : vector<2x8x8xf32>
    %278 = tpu.matmul %273, %275, %cst_86 {dimension_numbers = #tpu.dot_dimension_numbers<[2], [2], [1], [1], [0, 0, 0, 1, 1, 1], [0], [0]>} : vector<2x8x8xbf16>, vector<2x8x8xbf16>, vector<2x8x8xf32> -> vector<2x8x8xf32>
    "tpu.trace_stop"() : () -> ()
    %279 = vector.broadcast %37 : vector<2x1x8xf32> to vector<2x8x8xf32>
    %280 = arith.addf %278, %279 : vector<2x8x8xf32>
    %cst_87 = arith.constant dense<0xFF800000> : vector<2x8xf32>
    %281 = vector.multi_reduction <maximumf>, %280, %cst_87 [2] : vector<2x8x8xf32> to vector<2x8xf32>
    %282 = vector.shape_cast %281 : vector<2x8xf32> to vector<2x8x1xf32>
    %283 = vector.broadcast %282 : vector<2x8x1xf32> to vector<2x8x8xf32>
    %284 = arith.subf %280, %283 : vector<2x8x8xf32>
    %285 = math.exp %284 : vector<2x8x8xf32>
    %cst_88 = arith.constant dense<0.000000e+00> : vector<2x8xf32>
    %286 = vector.multi_reduction <add>, %285, %cst_88 [2] : vector<2x8x8xf32> to vector<2x8xf32>
    %287 = vector.shape_cast %286 : vector<2x8xf32> to vector<2x8x1xf32>
    %288 = tpu.reciprocal %287 {approx = true} : vector<2x8x1xf32> -> vector<2x8x1xf32>
    %289 = vector.broadcast %288 : vector<2x8x1xf32> to vector<2x8x8xf32>
    %290 = arith.mulf %285, %289 : vector<2x8x8xf32>
    %291 = arith.truncf %290 : vector<2x8x8xf32> to vector<2x8x8xbf16>
    "tpu.trace_start"() <{level = 10 : i32, message = "bqk,bkd->bqd"}> : () -> ()
    %cst_89 = arith.constant dense<0.000000e+00> : vector<2x8x8xf32>
    %292 = tpu.matmul %291, %277, %cst_89 {dimension_numbers = #tpu.dot_dimension_numbers<[2], [1], [1], [2], [0, 0, 0, 1, 1, 2], [0], [0]>} : vector<2x8x8xbf16>, vector<2x8x8xbf16>, vector<2x8x8xf32> -> vector<2x8x8xf32>
    "tpu.trace_stop"() : () -> ()
    %c96_90 = arith.constant 96 : index
    %c96_91 = arith.constant 96 : index
    %293 = vector.load %arg1[%c96_90, %c96_91] : memref<384x128xbf16, #tpu.memory_space<vmem>>, vector<8x32xbf16>
    %294 = vector.shape_cast %292 : vector<2x8x8xf32> to vector<16x8xf32>
    %295 = arith.truncf %294 : vector<16x8xf32> to vector<16x8xbf16>
    %cst_92 = arith.constant dense<0.000000e+00> : vector<16x32xf32>
    %296 = tpu.matmul %295, %293, %cst_92 {dimension_numbers = #tpu.dot_dimension_numbers<[1], [0], [0], [1], [0, 0, 1, 1], [], []>} : vector<16x8xbf16>, vector<8x32xbf16>, vector<16x32xf32> -> vector<16x32xf32>
    %297 = arith.addf %271, %296 : vector<16x32xf32>
    %298 = vector.extract_strided_slice %268 {offsets = [0, 8], sizes = [16, 8], strides = [1, 1]} : vector<16x32xbf16> to vector<16x8xbf16>
    %299 = vector.shape_cast %298 : vector<16x8xbf16> to vector<2x8x8xbf16>
    %300 = vector.extract_strided_slice %269 {offsets = [0, 8], sizes = [16, 8], strides = [1, 1]} : vector<16x32xbf16> to vector<16x8xbf16>
    %301 = vector.shape_cast %300 : vector<16x8xbf16> to vector<2x8x8xbf16>
    %302 = vector.extract_strided_slice %270 {offsets = [0, 8], sizes = [16, 8], strides = [1, 1]} : vector<16x32xbf16> to vector<16x8xbf16>
    %303 = vector.shape_cast %302 : vector<16x8xbf16> to vector<2x8x8xbf16>
    "tpu.trace_start"() <{level = 10 : i32, message = "bqd,bkd->bqk"}> : () -> ()
    %cst_93 = arith.constant dense<0.000000e+00> : vector<2x8x8xf32>
    %304 = tpu.matmul %299, %301, %cst_93 {dimension_numbers = #tpu.dot_dimension_numbers<[2], [2], [1], [1], [0, 0, 0, 1, 1, 1], [0], [0]>} : vector<2x8x8xbf16>, vector<2x8x8xbf16>, vector<2x8x8xf32> -> vector<2x8x8xf32>
    "tpu.trace_stop"() : () -> ()
    %305 = vector.broadcast %37 : vector<2x1x8xf32> to vector<2x8x8xf32>
    %306 = arith.addf %304, %305 : vector<2x8x8xf32>
    %cst_94 = arith.constant dense<0xFF800000> : vector<2x8xf32>
    %307 = vector.multi_reduction <maximumf>, %306, %cst_94 [2] : vector<2x8x8xf32> to vector<2x8xf32>
    %308 = vector.shape_cast %307 : vector<2x8xf32> to vector<2x8x1xf32>
    %309 = vector.broadcast %308 : vector<2x8x1xf32> to vector<2x8x8xf32>
    %310 = arith.subf %306, %309 : vector<2x8x8xf32>
    %311 = math.exp %310 : vector<2x8x8xf32>
    %cst_95 = arith.constant dense<0.000000e+00> : vector<2x8xf32>
    %312 = vector.multi_reduction <add>, %311, %cst_95 [2] : vector<2x8x8xf32> to vector<2x8xf32>
    %313 = vector.shape_cast %312 : vector<2x8xf32> to vector<2x8x1xf32>
    %314 = tpu.reciprocal %313 {approx = true} : vector<2x8x1xf32> -> vector<2x8x1xf32>
    %315 = vector.broadcast %314 : vector<2x8x1xf32> to vector<2x8x8xf32>
    %316 = arith.mulf %311, %315 : vector<2x8x8xf32>
    %317 = arith.truncf %316 : vector<2x8x8xf32> to vector<2x8x8xbf16>
    "tpu.trace_start"() <{level = 10 : i32, message = "bqk,bkd->bqd"}> : () -> ()
    %cst_96 = arith.constant dense<0.000000e+00> : vector<2x8x8xf32>
    %318 = tpu.matmul %317, %303, %cst_96 {dimension_numbers = #tpu.dot_dimension_numbers<[2], [1], [1], [2], [0, 0, 0, 1, 1, 2], [0], [0]>} : vector<2x8x8xbf16>, vector<2x8x8xbf16>, vector<2x8x8xf32> -> vector<2x8x8xf32>
    "tpu.trace_stop"() : () -> ()
    %c104 = arith.constant 104 : index
    %c96_97 = arith.constant 96 : index
    %319 = vector.load %arg1[%c104, %c96_97] : memref<384x128xbf16, #tpu.memory_space<vmem>>, vector<8x32xbf16>
    %320 = vector.shape_cast %318 : vector<2x8x8xf32> to vector<16x8xf32>
    %321 = arith.truncf %320 : vector<16x8xf32> to vector<16x8xbf16>
    %cst_98 = arith.constant dense<0.000000e+00> : vector<16x32xf32>
    %322 = tpu.matmul %321, %319, %cst_98 {dimension_numbers = #tpu.dot_dimension_numbers<[1], [0], [0], [1], [0, 0, 1, 1], [], []>} : vector<16x8xbf16>, vector<8x32xbf16>, vector<16x32xf32> -> vector<16x32xf32>
    %323 = arith.addf %297, %322 : vector<16x32xf32>
    %324 = vector.extract_strided_slice %268 {offsets = [0, 16], sizes = [16, 8], strides = [1, 1]} : vector<16x32xbf16> to vector<16x8xbf16>
    %325 = vector.shape_cast %324 : vector<16x8xbf16> to vector<2x8x8xbf16>
    %326 = vector.extract_strided_slice %269 {offsets = [0, 16], sizes = [16, 8], strides = [1, 1]} : vector<16x32xbf16> to vector<16x8xbf16>
    %327 = vector.shape_cast %326 : vector<16x8xbf16> to vector<2x8x8xbf16>
    %328 = vector.extract_strided_slice %270 {offsets = [0, 16], sizes = [16, 8], strides = [1, 1]} : vector<16x32xbf16> to vector<16x8xbf16>
    %329 = vector.shape_cast %328 : vector<16x8xbf16> to vector<2x8x8xbf16>
    "tpu.trace_start"() <{level = 10 : i32, message = "bqd,bkd->bqk"}> : () -> ()
    %cst_99 = arith.constant dense<0.000000e+00> : vector<2x8x8xf32>
    %330 = tpu.matmul %325, %327, %cst_99 {dimension_numbers = #tpu.dot_dimension_numbers<[2], [2], [1], [1], [0, 0, 0, 1, 1, 1], [0], [0]>} : vector<2x8x8xbf16>, vector<2x8x8xbf16>, vector<2x8x8xf32> -> vector<2x8x8xf32>
    "tpu.trace_stop"() : () -> ()
    %331 = vector.broadcast %37 : vector<2x1x8xf32> to vector<2x8x8xf32>
    %332 = arith.addf %330, %331 : vector<2x8x8xf32>
    %cst_100 = arith.constant dense<0xFF800000> : vector<2x8xf32>
    %333 = vector.multi_reduction <maximumf>, %332, %cst_100 [2] : vector<2x8x8xf32> to vector<2x8xf32>
    %334 = vector.shape_cast %333 : vector<2x8xf32> to vector<2x8x1xf32>
    %335 = vector.broadcast %334 : vector<2x8x1xf32> to vector<2x8x8xf32>
    %336 = arith.subf %332, %335 : vector<2x8x8xf32>
    %337 = math.exp %336 : vector<2x8x8xf32>
    %cst_101 = arith.constant dense<0.000000e+00> : vector<2x8xf32>
    %338 = vector.multi_reduction <add>, %337, %cst_101 [2] : vector<2x8x8xf32> to vector<2x8xf32>
    %339 = vector.shape_cast %338 : vector<2x8xf32> to vector<2x8x1xf32>
    %340 = tpu.reciprocal %339 {approx = true} : vector<2x8x1xf32> -> vector<2x8x1xf32>
    %341 = vector.broadcast %340 : vector<2x8x1xf32> to vector<2x8x8xf32>
    %342 = arith.mulf %337, %341 : vector<2x8x8xf32>
    %343 = arith.truncf %342 : vector<2x8x8xf32> to vector<2x8x8xbf16>
    "tpu.trace_start"() <{level = 10 : i32, message = "bqk,bkd->bqd"}> : () -> ()
    %cst_102 = arith.constant dense<0.000000e+00> : vector<2x8x8xf32>
    %344 = tpu.matmul %343, %329, %cst_102 {dimension_numbers = #tpu.dot_dimension_numbers<[2], [1], [1], [2], [0, 0, 0, 1, 1, 2], [0], [0]>} : vector<2x8x8xbf16>, vector<2x8x8xbf16>, vector<2x8x8xf32> -> vector<2x8x8xf32>
    "tpu.trace_stop"() : () -> ()
    %c112 = arith.constant 112 : index
    %c96_103 = arith.constant 96 : index
    %345 = vector.load %arg1[%c112, %c96_103] : memref<384x128xbf16, #tpu.memory_space<vmem>>, vector<8x32xbf16>
    %346 = vector.shape_cast %344 : vector<2x8x8xf32> to vector<16x8xf32>
    %347 = arith.truncf %346 : vector<16x8xf32> to vector<16x8xbf16>
    %cst_104 = arith.constant dense<0.000000e+00> : vector<16x32xf32>
    %348 = tpu.matmul %347, %345, %cst_104 {dimension_numbers = #tpu.dot_dimension_numbers<[1], [0], [0], [1], [0, 0, 1, 1], [], []>} : vector<16x8xbf16>, vector<8x32xbf16>, vector<16x32xf32> -> vector<16x32xf32>
    %349 = arith.addf %323, %348 : vector<16x32xf32>
    %350 = vector.extract_strided_slice %268 {offsets = [0, 24], sizes = [16, 8], strides = [1, 1]} : vector<16x32xbf16> to vector<16x8xbf16>
    %351 = vector.shape_cast %350 : vector<16x8xbf16> to vector<2x8x8xbf16>
    %352 = vector.extract_strided_slice %269 {offsets = [0, 24], sizes = [16, 8], strides = [1, 1]} : vector<16x32xbf16> to vector<16x8xbf16>
    %353 = vector.shape_cast %352 : vector<16x8xbf16> to vector<2x8x8xbf16>
    %354 = vector.extract_strided_slice %270 {offsets = [0, 24], sizes = [16, 8], strides = [1, 1]} : vector<16x32xbf16> to vector<16x8xbf16>
    %355 = vector.shape_cast %354 : vector<16x8xbf16> to vector<2x8x8xbf16>
    "tpu.trace_start"() <{level = 10 : i32, message = "bqd,bkd->bqk"}> : () -> ()
    %cst_105 = arith.constant dense<0.000000e+00> : vector<2x8x8xf32>
    %356 = tpu.matmul %351, %353, %cst_105 {dimension_numbers = #tpu.dot_dimension_numbers<[2], [2], [1], [1], [0, 0, 0, 1, 1, 1], [0], [0]>} : vector<2x8x8xbf16>, vector<2x8x8xbf16>, vector<2x8x8xf32> -> vector<2x8x8xf32>
    "tpu.trace_stop"() : () -> ()
    %357 = vector.broadcast %37 : vector<2x1x8xf32> to vector<2x8x8xf32>
    %358 = arith.addf %356, %357 : vector<2x8x8xf32>
    %cst_106 = arith.constant dense<0xFF800000> : vector<2x8xf32>
    %359 = vector.multi_reduction <maximumf>, %358, %cst_106 [2] : vector<2x8x8xf32> to vector<2x8xf32>
    %360 = vector.shape_cast %359 : vector<2x8xf32> to vector<2x8x1xf32>
    %361 = vector.broadcast %360 : vector<2x8x1xf32> to vector<2x8x8xf32>
    %362 = arith.subf %358, %361 : vector<2x8x8xf32>
    %363 = math.exp %362 : vector<2x8x8xf32>
    %cst_107 = arith.constant dense<0.000000e+00> : vector<2x8xf32>
    %364 = vector.multi_reduction <add>, %363, %cst_107 [2] : vector<2x8x8xf32> to vector<2x8xf32>
    %365 = vector.shape_cast %364 : vector<2x8xf32> to vector<2x8x1xf32>
    %366 = tpu.reciprocal %365 {approx = true} : vector<2x8x1xf32> -> vector<2x8x1xf32>
    %367 = vector.broadcast %366 : vector<2x8x1xf32> to vector<2x8x8xf32>
    %368 = arith.mulf %363, %367 : vector<2x8x8xf32>
    %369 = arith.truncf %368 : vector<2x8x8xf32> to vector<2x8x8xbf16>
    "tpu.trace_start"() <{level = 10 : i32, message = "bqk,bkd->bqd"}> : () -> ()
    %cst_108 = arith.constant dense<0.000000e+00> : vector<2x8x8xf32>
    %370 = tpu.matmul %369, %355, %cst_108 {dimension_numbers = #tpu.dot_dimension_numbers<[2], [1], [1], [2], [0, 0, 0, 1, 1, 2], [0], [0]>} : vector<2x8x8xbf16>, vector<2x8x8xbf16>, vector<2x8x8xf32> -> vector<2x8x8xf32>
    "tpu.trace_stop"() : () -> ()
    %c120 = arith.constant 120 : index
    %c96_109 = arith.constant 96 : index
    %371 = vector.load %arg1[%c120, %c96_109] : memref<384x128xbf16, #tpu.memory_space<vmem>>, vector<8x32xbf16>
    %372 = vector.shape_cast %370 : vector<2x8x8xf32> to vector<16x8xf32>
    %373 = arith.truncf %372 : vector<16x8xf32> to vector<16x8xbf16>
    %cst_110 = arith.constant dense<0.000000e+00> : vector<16x32xf32>
    %374 = tpu.matmul %373, %371, %cst_110 {dimension_numbers = #tpu.dot_dimension_numbers<[1], [0], [0], [1], [0, 0, 1, 1], [], []>} : vector<16x8xbf16>, vector<8x32xbf16>, vector<16x32xf32> -> vector<16x32xf32>
    %375 = arith.addf %349, %374 : vector<16x32xf32>
    %376 = vector.extract_strided_slice %249 {offsets = [3, 0], sizes = [1, 32], strides = [1, 1]} : vector<4x32xf32> to vector<1x32xf32>
    %377 = vector.broadcast %376 : vector<1x32xf32> to vector<16x32xf32>
    %378 = arith.addf %375, %377 : vector<16x32xf32>
    %c104_111 = arith.constant 104 : index
    %c0_112 = arith.constant 0 : index
    %379 = vector.load %arg2[%c104_111, %c0_112] : memref<152x128xf32, #tpu.memory_space<vmem>>, vector<2x32xf32>
    %380 = arith.addf %378, %248 : vector<16x32xf32>
    %381 = vector.extract_strided_slice %379 {offsets = [0, 0], sizes = [1, 32], strides = [1, 1]} : vector<2x32xf32> to vector<1x32xf32>
    %382 = vector.extract_strided_slice %379 {offsets = [1, 0], sizes = [1, 32], strides = [1, 1]} : vector<2x32xf32> to vector<1x32xf32>
    %cst_113 = arith.constant dense<0.000000e+00> : vector<16xf32>
    %383 = vector.multi_reduction <add>, %380, %cst_113 [1] : vector<16x32xf32> to vector<16xf32>
    %384 = vector.shape_cast %383 : vector<16xf32> to vector<16x1xf32>
    %cst_114 = arith.constant 3.200000e+01 : f32
    %385 = vector.broadcast %cst_114 : f32 to vector<16x1xf32>
    %386 = arith.divf %384, %385 : vector<16x1xf32>
    %387 = vector.broadcast %386 : vector<16x1xf32> to vector<16x32xf32>
    %388 = arith.subf %380, %387 : vector<16x32xf32>
    %389 = vector.broadcast %386 : vector<16x1xf32> to vector<16x32xf32>
    %390 = arith.subf %380, %389 : vector<16x32xf32>
    %391 = arith.mulf %388, %390 : vector<16x32xf32>
    %cst_115 = arith.constant dense<0.000000e+00> : vector<16xf32>
    %392 = vector.multi_reduction <add>, %391, %cst_115 [1] : vector<16x32xf32> to vector<16xf32>
    %393 = vector.shape_cast %392 : vector<16xf32> to vector<16x1xf32>
    %cst_116 = arith.constant 3.200000e+01 : f32
    %394 = vector.broadcast %cst_116 : f32 to vector<16x1xf32>
    %395 = arith.divf %393, %394 : vector<16x1xf32>
    %396 = vector.broadcast %386 : vector<16x1xf32> to vector<16x32xf32>
    %397 = arith.subf %380, %396 : vector<16x32xf32>
    %cst_117 = arith.constant 9.99999996E-13 : f32
    %398 = vector.broadcast %cst_117 : f32 to vector<16x1xf32>
    %399 = arith.addf %395, %398 : vector<16x1xf32>
    %400 = math.rsqrt %399 : vector<16x1xf32>
    %401 = vector.broadcast %400 : vector<16x1xf32> to vector<16x32xf32>
    %402 = arith.mulf %397, %401 : vector<16x32xf32>
    %403 = vector.broadcast %381 : vector<1x32xf32> to vector<16x32xf32>
    %404 = arith.mulf %402, %403 : vector<16x32xf32>
    %405 = vector.broadcast %382 : vector<1x32xf32> to vector<16x32xf32>
    %406 = arith.addf %404, %405 : vector<16x32xf32>
    %407 = arith.truncf %406 : vector<16x32xf32> to vector<16x32xbf16>
    %c128 = arith.constant 128 : index
    %c0_118 = arith.constant 0 : index
    %408 = vector.load %arg1[%c128, %c0_118] : memref<384x128xbf16, #tpu.memory_space<vmem>>, vector<32x128xbf16>
    %cst_119 = arith.constant dense<0.000000e+00> : vector<16x128xf32>
    %409 = tpu.matmul %407, %408, %cst_119 {dimension_numbers = #tpu.dot_dimension_numbers<[1], [0], [0], [1], [0, 0, 1, 1], [], []>} : vector<16x32xbf16>, vector<32x128xbf16>, vector<16x128xf32> -> vector<16x128xf32>
    %c112_120 = arith.constant 112 : index
    %c0_121 = arith.constant 0 : index
    %410 = vector.load %arg2[%c112_120, %c0_121] : memref<152x128xf32, #tpu.memory_space<vmem>>, vector<1x128xf32>
    %411 = vector.broadcast %410 : vector<1x128xf32> to vector<16x128xf32>
    %412 = arith.addf %409, %411 : vector<16x128xf32>
    %cst_122 = arith.constant 5.000000e-01 : f32
    %413 = vector.broadcast %cst_122 : f32 to vector<16x128xf32>
    %414 = arith.mulf %413, %412 : vector<16x128xf32>
    %cst_123 = arith.constant 4.471500e-02 : f32
    %415 = vector.broadcast %cst_123 : f32 to vector<16x128xf32>
    %416 = arith.mulf %415, %412 : vector<16x128xf32>
    %417 = arith.mulf %416, %412 : vector<16x128xf32>
    %418 = arith.mulf %417, %412 : vector<16x128xf32>
    %419 = arith.addf %412, %418 : vector<16x128xf32>
    %cst_124 = arith.constant 0.797884583 : f32
    %420 = vector.broadcast %cst_124 : f32 to vector<16x128xf32>
    %421 = arith.mulf %420, %419 : vector<16x128xf32>
    %422 = math.tanh %421 : vector<16x128xf32>
    %cst_125 = arith.constant 1.000000e+00 : f32
    %423 = vector.broadcast %cst_125 : f32 to vector<16x128xf32>
    %424 = arith.addf %423, %422 : vector<16x128xf32>
    %425 = arith.mulf %414, %424 : vector<16x128xf32>
    %426 = arith.truncf %425 : vector<16x128xf32> to vector<16x128xbf16>
    %c160 = arith.constant 160 : index
    %c0_126 = arith.constant 0 : index
    %427 = vector.load %arg1[%c160, %c0_126] : memref<384x128xbf16, #tpu.memory_space<vmem>>, vector<32x128xbf16>
    %cst_127 = arith.constant dense<0.000000e+00> : vector<16x32xf32>
    %428 = tpu.matmul %426, %427, %cst_127 {dimension_numbers = #tpu.dot_dimension_numbers<[1], [1], [0], [0], [0, 0, 1, 0], [], []>} : vector<16x128xbf16>, vector<32x128xbf16>, vector<16x32xf32> -> vector<16x32xf32>
    %c120_128 = arith.constant 120 : index
    %c0_129 = arith.constant 0 : index
    %429 = vector.load %arg2[%c120_128, %c0_129] : memref<152x128xf32, #tpu.memory_space<vmem>>, vector<1x32xf32>
    %430 = vector.broadcast %429 : vector<1x32xf32> to vector<16x32xf32>
    %431 = arith.addf %428, %430 : vector<16x32xf32>
    %c128_130 = arith.constant 128 : index
    %c0_131 = arith.constant 0 : index
    %432 = vector.load %arg2[%c128_130, %c0_131] : memref<152x128xf32, #tpu.memory_space<vmem>>, vector<2x32xf32>
    %433 = arith.addf %431, %406 : vector<16x32xf32>
    %434 = vector.extract_strided_slice %432 {offsets = [0, 0], sizes = [1, 32], strides = [1, 1]} : vector<2x32xf32> to vector<1x32xf32>
    %435 = vector.extract_strided_slice %432 {offsets = [1, 0], sizes = [1, 32], strides = [1, 1]} : vector<2x32xf32> to vector<1x32xf32>
    %cst_132 = arith.constant dense<0.000000e+00> : vector<16xf32>
    %436 = vector.multi_reduction <add>, %433, %cst_132 [1] : vector<16x32xf32> to vector<16xf32>
    %437 = vector.shape_cast %436 : vector<16xf32> to vector<16x1xf32>
    %cst_133 = arith.constant 3.200000e+01 : f32
    %438 = vector.broadcast %cst_133 : f32 to vector<16x1xf32>
    %439 = arith.divf %437, %438 : vector<16x1xf32>
    %440 = vector.broadcast %439 : vector<16x1xf32> to vector<16x32xf32>
    %441 = arith.subf %433, %440 : vector<16x32xf32>
    %442 = vector.broadcast %439 : vector<16x1xf32> to vector<16x32xf32>
    %443 = arith.subf %433, %442 : vector<16x32xf32>
    %444 = arith.mulf %441, %443 : vector<16x32xf32>
    %cst_134 = arith.constant dense<0.000000e+00> : vector<16xf32>
    %445 = vector.multi_reduction <add>, %444, %cst_134 [1] : vector<16x32xf32> to vector<16xf32>
    %446 = vector.shape_cast %445 : vector<16xf32> to vector<16x1xf32>
    %cst_135 = arith.constant 3.200000e+01 : f32
    %447 = vector.broadcast %cst_135 : f32 to vector<16x1xf32>
    %448 = arith.divf %446, %447 : vector<16x1xf32>
    %449 = vector.broadcast %439 : vector<16x1xf32> to vector<16x32xf32>
    %450 = arith.subf %433, %449 : vector<16x32xf32>
    %cst_136 = arith.constant 9.99999996E-13 : f32
    %451 = vector.broadcast %cst_136 : f32 to vector<16x1xf32>
    %452 = arith.addf %448, %451 : vector<16x1xf32>
    %453 = math.rsqrt %452 : vector<16x1xf32>
    %454 = vector.broadcast %453 : vector<16x1xf32> to vector<16x32xf32>
    %455 = arith.mulf %450, %454 : vector<16x32xf32>
    %456 = vector.broadcast %434 : vector<1x32xf32> to vector<16x32xf32>
    %457 = arith.mulf %455, %456 : vector<16x32xf32>
    %458 = vector.broadcast %435 : vector<1x32xf32> to vector<16x32xf32>
    %459 = arith.addf %457, %458 : vector<16x32xf32>
    %460 = arith.truncf %459 : vector<16x32xf32> to vector<16x32xbf16>
    %c136 = arith.constant 136 : index
    %c0_137 = arith.constant 0 : index
    %461 = vector.load %arg2[%c136, %c0_137] : memref<152x128xf32, #tpu.memory_space<vmem>>, vector<4x128xf32>
    %cst_138 = arith.constant 0.000000e+00 : f32
    %462 = vector.broadcast %cst_138 : f32 to vector<16x2xf32>
    %c192 = arith.constant 192 : index
    %c0_139 = arith.constant 0 : index
    %463 = vector.load %arg1[%c192, %c0_139] : memref<384x128xbf16, #tpu.memory_space<vmem>>, vector<32x128xbf16>
    %cst_140 = arith.constant dense<0.000000e+00> : vector<16x128xf32>
    %464 = tpu.matmul %460, %463, %cst_140 {dimension_numbers = #tpu.dot_dimension_numbers<[1], [0], [0], [1], [0, 0, 1, 1], [], []>} : vector<16x32xbf16>, vector<32x128xbf16>, vector<16x128xf32> -> vector<16x128xf32>
    %465 = vector.extract_strided_slice %461 {offsets = [0, 0], sizes = [1, 128], strides = [1, 1]} : vector<4x128xf32> to vector<1x128xf32>
    %466 = vector.broadcast %465 : vector<1x128xf32> to vector<16x128xf32>
    %467 = arith.addf %464, %466 : vector<16x128xf32>
    %cst_141 = arith.constant 0.000000e+00 : f32
    %468 = vector.broadcast %cst_141 : f32 to vector<16x128xf32>
    %469 = arith.maximumf %467, %468 : vector<16x128xf32>
    %470 = arith.truncf %469 : vector<16x128xf32> to vector<16x128xbf16>
    %c320 = arith.constant 320 : index
    %c0_142 = arith.constant 0 : index
    %471 = vector.load %arg1[%c320, %c0_142] : memref<384x128xbf16, #tpu.memory_space<vmem>>, vector<2x128xbf16>
    %cst_143 = arith.constant dense<0.000000e+00> : vector<16x2xf32>
    %472 = tpu.matmul %470, %471, %cst_143 {dimension_numbers = #tpu.dot_dimension_numbers<[1], [1], [0], [0], [0, 0, 1, 0], [], []>} : vector<16x128xbf16>, vector<2x128xbf16>, vector<16x2xf32> -> vector<16x2xf32>
    %473 = arith.addf %462, %472 : vector<16x2xf32>
    %c224 = arith.constant 224 : index
    %c0_144 = arith.constant 0 : index
    %474 = vector.load %arg1[%c224, %c0_144] : memref<384x128xbf16, #tpu.memory_space<vmem>>, vector<32x128xbf16>
    %cst_145 = arith.constant dense<0.000000e+00> : vector<16x128xf32>
    %475 = tpu.matmul %460, %474, %cst_145 {dimension_numbers = #tpu.dot_dimension_numbers<[1], [0], [0], [1], [0, 0, 1, 1], [], []>} : vector<16x32xbf16>, vector<32x128xbf16>, vector<16x128xf32> -> vector<16x128xf32>
    %476 = vector.extract_strided_slice %461 {offsets = [1, 0], sizes = [1, 128], strides = [1, 1]} : vector<4x128xf32> to vector<1x128xf32>
    %477 = vector.broadcast %476 : vector<1x128xf32> to vector<16x128xf32>
    %478 = arith.addf %475, %477 : vector<16x128xf32>
    %cst_146 = arith.constant 0.000000e+00 : f32
    %479 = vector.broadcast %cst_146 : f32 to vector<16x128xf32>
    %480 = arith.maximumf %478, %479 : vector<16x128xf32>
    %481 = arith.truncf %480 : vector<16x128xf32> to vector<16x128xbf16>
    %c336 = arith.constant 336 : index
    %c0_147 = arith.constant 0 : index
    %482 = vector.load %arg1[%c336, %c0_147] : memref<384x128xbf16, #tpu.memory_space<vmem>>, vector<2x128xbf16>
    %cst_148 = arith.constant dense<0.000000e+00> : vector<16x2xf32>
    %483 = tpu.matmul %481, %482, %cst_148 {dimension_numbers = #tpu.dot_dimension_numbers<[1], [1], [0], [0], [0, 0, 1, 0], [], []>} : vector<16x128xbf16>, vector<2x128xbf16>, vector<16x2xf32> -> vector<16x2xf32>
    %484 = arith.addf %473, %483 : vector<16x2xf32>
    %c256 = arith.constant 256 : index
    %c0_149 = arith.constant 0 : index
    %485 = vector.load %arg1[%c256, %c0_149] : memref<384x128xbf16, #tpu.memory_space<vmem>>, vector<32x128xbf16>
    %cst_150 = arith.constant dense<0.000000e+00> : vector<16x128xf32>
    %486 = tpu.matmul %460, %485, %cst_150 {dimension_numbers = #tpu.dot_dimension_numbers<[1], [0], [0], [1], [0, 0, 1, 1], [], []>} : vector<16x32xbf16>, vector<32x128xbf16>, vector<16x128xf32> -> vector<16x128xf32>
    %487 = vector.extract_strided_slice %461 {offsets = [2, 0], sizes = [1, 128], strides = [1, 1]} : vector<4x128xf32> to vector<1x128xf32>
    %488 = vector.broadcast %487 : vector<1x128xf32> to vector<16x128xf32>
    %489 = arith.addf %486, %488 : vector<16x128xf32>
    %cst_151 = arith.constant 0.000000e+00 : f32
    %490 = vector.broadcast %cst_151 : f32 to vector<16x128xf32>
    %491 = arith.maximumf %489, %490 : vector<16x128xf32>
    %492 = arith.truncf %491 : vector<16x128xf32> to vector<16x128xbf16>
    %c352 = arith.constant 352 : index
    %c0_152 = arith.constant 0 : index
    %493 = vector.load %arg1[%c352, %c0_152] : memref<384x128xbf16, #tpu.memory_space<vmem>>, vector<2x128xbf16>
    %cst_153 = arith.constant dense<0.000000e+00> : vector<16x2xf32>
    %494 = tpu.matmul %492, %493, %cst_153 {dimension_numbers = #tpu.dot_dimension_numbers<[1], [1], [0], [0], [0, 0, 1, 0], [], []>} : vector<16x128xbf16>, vector<2x128xbf16>, vector<16x2xf32> -> vector<16x2xf32>
    %495 = arith.addf %484, %494 : vector<16x2xf32>
    %c288 = arith.constant 288 : index
    %c0_154 = arith.constant 0 : index
    %496 = vector.load %arg1[%c288, %c0_154] : memref<384x128xbf16, #tpu.memory_space<vmem>>, vector<32x128xbf16>
    %cst_155 = arith.constant dense<0.000000e+00> : vector<16x128xf32>
    %497 = tpu.matmul %460, %496, %cst_155 {dimension_numbers = #tpu.dot_dimension_numbers<[1], [0], [0], [1], [0, 0, 1, 1], [], []>} : vector<16x32xbf16>, vector<32x128xbf16>, vector<16x128xf32> -> vector<16x128xf32>
    %498 = vector.extract_strided_slice %461 {offsets = [3, 0], sizes = [1, 128], strides = [1, 1]} : vector<4x128xf32> to vector<1x128xf32>
    %499 = vector.broadcast %498 : vector<1x128xf32> to vector<16x128xf32>
    %500 = arith.addf %497, %499 : vector<16x128xf32>
    %cst_156 = arith.constant 0.000000e+00 : f32
    %501 = vector.broadcast %cst_156 : f32 to vector<16x128xf32>
    %502 = arith.maximumf %500, %501 : vector<16x128xf32>
    %503 = arith.truncf %502 : vector<16x128xf32> to vector<16x128xbf16>
    %c368 = arith.constant 368 : index
    %c0_157 = arith.constant 0 : index
    %504 = vector.load %arg1[%c368, %c0_157] : memref<384x128xbf16, #tpu.memory_space<vmem>>, vector<2x128xbf16>
    %cst_158 = arith.constant dense<0.000000e+00> : vector<16x2xf32>
    %505 = tpu.matmul %503, %504, %cst_158 {dimension_numbers = #tpu.dot_dimension_numbers<[1], [1], [0], [0], [0, 0, 1, 0], [], []>} : vector<16x128xbf16>, vector<2x128xbf16>, vector<16x2xf32> -> vector<16x2xf32>
    %506 = arith.addf %495, %505 : vector<16x2xf32>
    %c144 = arith.constant 144 : index
    %c0_159 = arith.constant 0 : index
    %507 = vector.load %arg2[%c144, %c0_159] : memref<152x128xf32, #tpu.memory_space<vmem>>, vector<1x2xf32>
    %508 = vector.broadcast %507 : vector<1x2xf32> to vector<16x2xf32>
    %509 = arith.addf %506, %508 : vector<16x2xf32>
    %c0_160 = arith.constant 0 : index
    %c0_161 = arith.constant 0 : index
    %510 = vector.load %arg5[%c0_160, %c0_161] : memref<16x2xf32, #tpu.memory_space<vmem>>, vector<16x2xf32>
    tpu.vector_store %arg5[%c0_160, %c0_161], %509 {strides = array<i32>} : memref<16x2xf32, #tpu.memory_space<vmem>>, vector<16x2xf32>,
    return
  }
  func.func @transform_0(%arg0: i32) -> (i32, i32) {
    %c0_i32 = arith.constant 0 : i32
    %c0_i32_0 = arith.constant 0 : i32
    %c0_i32_1 = arith.constant 0 : i32
    return %c0_i32, %c0_i32_0 : i32, i32
  }
  func.func @transform_1(%arg0: i32) -> (i32, i32) {
    %c0_i32 = arith.constant 0 : i32
    %c0_i32_0 = arith.constant 0 : i32
    %c0_i32_1 = arith.constant 0 : i32
    return %c0_i32, %c0_i32_0 : i32, i32
  }
  func.func @transform_2(%arg0: i32) -> (i32, i32) {
    %c0_i32 = arith.constant 0 : i32
    %c0_i32_0 = arith.constant 0 : i32
    %c0_i32_1 = arith.constant 0 : i32
    return %c0_i32, %c0_i32_0 : i32, i32
  }
  func.func @transform_3(%arg0: i32) -> (i32, i32, i32) {
    %c0_i32 = arith.constant 0 : i32
    %c0_i32_0 = arith.constant 0 : i32
    %c0_i32_1 = arith.constant 0 : i32
    %c0_i32_2 = arith.constant 0 : i32
    return %c0_i32, %c0_i32_0, %c0_i32_1 : i32, i32, i32
  }
  func.func @transform_4(%arg0: i32) -> (i32, i32) {
    %c0_i32 = arith.constant 0 : i32
    %c0_i32_0 = arith.constant 0 : i32
    %c0_i32_1 = arith.constant 0 : i32
    return %c0_i32, %c0_i32_0 : i32, i32
  }
}

</mosaic_0001>

<llo_original>
// kernel: fused_forward.1
$region0: #{fused_forward.1}
  #allocation0 [shape = 'u32[]', space=smem, size = 0x4, offset = 0x4, fixed_abs, tag = 'smem constant byte address 0x4 - core index']
  #allocation1 [shape = 'u32[144,128]{1,0:T(1,128)}', space=vmem, size = 0x12000, scoped, tag = 'internal scratch']
  %s0 = inlined_call_operand.hbm [shape: bf16[384,128], index: 0, kind: input, shape index: {}]
  %s1 = inlined_call_operand.hbm [shape: f32[152,128], index: 1, kind: input, shape index: {}]
  %s2 = inlined_call_operand.vmem [shape: s32[16,1], index: 2, kind: input, shape index: {}]
  %s3 = inlined_call_operand.vmem [shape: f32[2,1,8], index: 3, kind: input, shape index: {}]
  %s4 = inlined_call_operand.vmem [shape: f32[16,2], index: 4, kind: output, shape index: {}]
  %s5 = sld [smem:[#allocation0]]
  $region34: #{fused_forward.1} parent=0
    _
  %s7 = ssub.s32 1, %s5
  %s8 = scalar_select 0, %s7, %s5
  $region1: #{fused_forward.1} parent=0
    #allocation2 [shape = 'u8[98304]{0}', space=vmem, size = 0x18000, scoped, tag = 'input window, operand 0, single buffered']
    #allocation3 [shape = 's32[1]{0}', space=sflag, size = 0x4, scoped, tag = 'scoped memory for fused_forward.1']
    #allocation4 [shape = 'u8[77824]{0}', space=vmem, size = 0x13000, scoped, tag = 'input window, operand 1, single buffered']
    #allocation5 [shape = 's32[1]{0}', space=sflag, size = 0x4, scoped, tag = 'scoped memory for fused_forward.1']
    %9 = vsyncpa [#allocation3], 0
    %10 = vsyncpa [#allocation5], 0
    // Predicated region
    $region2: #{fused_forward.1} parent=1 // pred_check
      _
    $region3: #{fused_forward.1} parent=1 // pred_check_branch
      %12 = sbr.rel (0) target = $region5
    $region4: #{fused_forward.1} parent=1 // pred_region
      %s14 = ssub.s32 3072, 3072
      %15 = vsyncadd [#allocation3], %s14
      %s16 = sshll.u32 [#allocation2], 4
      %s17 = int_to_ptr.vmem [resolvable:$true] %s16
      %22 = dma.hbm_to_vmem [thread:$0]  %s0, 3072, %s17, [#allocation3], 64, 64, 4
    $region5: #{fused_forward.1} parent=1 // pred_fallthru
      _
    // Predicated region
    $region6: #{fused_forward.1} parent=1 // pred_check
      _
    $region7: #{fused_forward.1} parent=1 // pred_check_branch
      %24 = sbr.rel (0) target = $region9
    $region8: #{fused_forward.1} parent=1 // pred_region
      %s26 = ssub.s32 2432, 2432
      %27 = vsyncadd [#allocation5], %s26
      %s28 = sshll.u32 [#allocation4], 4
      %s29 = int_to_ptr.vmem [resolvable:$true] %s28
      %34 = dma.hbm_to_vmem [thread:$0]  %s1, 2432, %s29, [#allocation5], 128, 128, 8
    $region9: #{fused_forward.1} parent=1 // pred_fallthru
      _
    // Predicated region
    $region10: #{fused_forward.1} parent=1 // pred_check
      _
    $region11: #{fused_forward.1} parent=1 // pred_check_branch
      %36 = sbr.rel (0) target = $region13
    $region12: #{fused_forward.1} parent=1 // pred_region
      _
    $region13: #{fused_forward.1} parent=1 // pred_fallthru
      _
    // Predicated region
    $region14: #{fused_forward.1} parent=1 // pred_check
      _
    $region15: #{fused_forward.1} parent=1 // pred_check_branch
      %38 = sbr.rel (0) target = $region17
    $region16: #{fused_forward.1} parent=1 // pred_region
      _
    $region17: #{fused_forward.1} parent=1 // pred_fallthru
      _
    // Predicated region
    $region18: #{fused_forward.1} parent=1 // pred_check
      _
    $region19: #{fused_forward.1} parent=1 // pred_check_branch
      %40 = sbr.rel (0) target = $region21
    $region20: #{fused_forward.1} parent=1 // pred_region
      %41 = dma.done [#allocation3], 3072
    $region21: #{fused_forward.1} parent=1 // pred_fallthru
      _
    // Predicated region
    $region22: #{fused_forward.1} parent=1 // pred_check
      _
    $region23: #{fused_forward.1} parent=1 // pred_check_branch
      %43 = sbr.rel (0) target = $region25
    $region24: #{fused_forward.1} parent=1 // pred_region
      %44 = dma.done [#allocation5], 2432
    $region25: #{fused_forward.1} parent=1 // pred_fallthru
      _
    %v46 = vld [vmem:[%s2] sm:$0xff]
    %v47 = vld [vmem:[%s2 + $0x8] sm:$0xff]
    %v48 = vlaneseq
    %v49 = vand.u32 %v48, 127
    %50 = vset.pattern.permute.xlu0 0
    %51 = vperm.xlu0 %50, %v46
    %v52 = vpop.permute.xlu0 %51
    %53 = vset.pattern.permute.xlu0 0
    %54 = vperm.xlu0 %53, %v47
    %v55 = vpop.permute.xlu0 %54
    %vm56 = vcmp.eq.s32.totalorder %v49, %v52
    %vm57 = vcmp.eq.s32.totalorder %v49, %v55
    %v58 = vsel %vm56, 1, 0
    %v59 = vsel %vm57, 1, 0
    %v60 = vcvt.s32.f32 %v58
    %v61 = vcvt.s32.f32 %v59
    %v62 = vld [vmem:[#allocation4] sm:$0xff]
    %v63 = vld [vmem:[#allocation4 + $0x8] sm:$0xff]
    %v64 = vld [vmem:[#allocation4 + $0x10] sm:$0xff]
    %v65 = vld [vmem:[#allocation4 + $0x18] sm:$0xff]
    %v66 = vld [vmem:[#allocation4 + $0x20] sm:$0xff]
    %v67 = vld [vmem:[#allocation4 + $0x28] sm:$0xff]
    %68 = vmatprep.subr.mxu0 0.0
    %69 = vmatpush1.xpose.msra.mxu0 %v62
    %70 = vmatprep.subr.mxu0 0.0
    %71 = vmatpush1.xpose.msra.mxu0 %v63
    %72 = vmatprep.subr.mxu0 0.0
    %73 = vmatpush1.xpose.msra.mxu0 %v64
    %74 = vmatprep.subr.mxu0 0.0
    %75 = vmatpush1.xpose.msra.mxu0 %v65
    %76 = vmatprep.subr.mxu0 0.0
    %77 = vmatpush1.xpose.msra.mxu0 0.0
    %78 = vmatprep.subr.mxu0 0.0
    %79 = vmatpush1.xpose.msra.mxu0 0.0
    %80 = vmatprep.subr.mxu0 0.0
    %81 = vmatpush1.xpose.msra.mxu0 0.0
    %82 = vmatprep.subr.mxu0 0.0
    %83 = vmatpush1.xpose.msra.mxu0 0.0
    %84 = vmatprep.subr.mxu0 0.0
    %85 = vmatpush1.xpose.msra.mxu0 0.0
    %86 = vmatprep.subr.mxu0 0.0
    %87 = vmatpush1.xpose.msra.mxu0 0.0
    %88 = vmatprep.subr.mxu0 0.0
    %89 = vmatpush1.xpose.msra.mxu0 0.0
    %90 = vmatprep.subr.mxu0 0.0
    %91 = vmatpush1.xpose.msra.mxu0 0.0
    %92 = vmatprep.subr.mxu0 0.0
    %93 = vmatpush1.xpose.msra.mxu0 0.0
    %94 = vmatprep.subr.mxu0 0.0
    %95 = vmatpush1.xpose.msra.mxu0 0.0
    %96 = vmatprep.subr.mxu0 0.0
    %97 = vmatpush1.xpose.msra.mxu0 0.0
    %98 = vmatprep.subr.mxu0 0.0
    %99 = vmatpush1.xpose.msra.mxu0 0.0
    %100 = vmatprep.subr.mxu0 0.0
    %101 = vmatpush1.xpose.msra.mxu0 0.0
    %102 = vmatprep.subr.mxu0 0.0
    %103 = vmatpush1.xpose.msra.mxu0 0.0
    %104 = vmatprep.subr.mxu0 0.0
    %105 = vmatpush1.xpose.msra.mxu0 0.0
    %106 = vmatprep.subr.mxu0 0.0
    %107 = vmatpush1.xpose.msra.mxu0 0.0
    %108 = vmatprep.subr.mxu0 0.0
    %109 = vmatpush1.xpose.msra.mxu0 0.0
    %110 = vmatprep.subr.mxu0 0.0
    %111 = vmatpush1.xpose.msra.mxu0 0.0
    %112 = vmatprep.subr.mxu0 0.0
    %113 = vmatpush1.xpose.msra.mxu0 0.0
    %114 = vmatprep.subr.mxu0 0.0
    %115 = vmatpush1.xpose.msra.mxu0 0.0
    %116 = vmatprep.subr.mxu0 0.0
    %117 = vmatpush1.xpose.msra.mxu0 0.0
    %118 = vmatprep.subr.mxu0 0.0
    %119 = vmatpush1.xpose.msra.mxu0 0.0
    %120 = vmatprep.subr.mxu0 0.0
    %121 = vmatpush1.xpose.msra.mxu0 0.0
    %122 = vmatprep.subr.mxu0 0.0
    %123 = vmatpush1.xpose.msra.mxu0 0.0
    %124 = vmatprep.subr.mxu0 0.0
    %125 = vmatpush1.xpose.msra.mxu0 0.0
    %126 = vmatprep.subr.mxu0 0.0
    %127 = vmatpush1.xpose.msra.mxu0 0.0
    %128 = vmatprep.subr.mxu0 0.0
    %129 = vmatpush1.xpose.msra.mxu0 0.0
    %130 = vmatprep.subr.mxu0 0.0
    %131 = vmatpush1.xpose.msra.mxu0 0.0
    %132 = vmatprep.mubr.f32.mxu0 0.0
    %133 = vmatmul.mubr.f32.gmra.mrb[0].mxu0 %v60
    %v134 = vpop.f32.mrb[0].mxu0
    %v135 = vadd.f32 %v66, %v134
    %v136 = vpop.f32.mrb[0].mxu0
    %137 = vmatprep.mubr.f32.mxu0 0.0
    %138 = vmatmul.mubr.f32.gmra.mrb[0].mxu0 %v61
    %v139 = vpop.f32.mrb[0].mxu0
    %v140 = vadd.f32 %v67, %v139
    %v141 = vpop.f32.mrb[0].mxu0
    %142 = vdwg.mxu0
    %v143 = vld [vmem:[#allocation4 + $0x30] sm:$0x3]
    %vm144 = vcmask 261120
    %v145 = vsel %vm144, %v135, 0.0
    %146 = vadd.xlane.f32.xlu0 %v145
    %v147 = vpop.xlane.xlu0 %146
    %v148 = vsel %vm144, %v140, 0.0
    %149 = vadd.xlane.f32.xlu0 %v148
    %v150 = vpop.xlane.xlu0 %149
    %v151 = vrcp.pop 32.0
    %v152 = vmul.f32 %v147, %v151
    %v153 = vmul.f32 %v150, %v151
    %v154 = vsub.f32 %v135, %v152
    %v155 = vsub.f32 %v140, %v153
    %v156 = vmul.f32 %v154, %v154
    %v157 = vmul.f32 %v155, %v155
    %v158 = vsel %vm144, %v156, 0.0
    %159 = vadd.xlane.f32.xlu0 %v158
    %v160 = vpop.xlane.xlu0 %159
    %v161 = vsel %vm144, %v157, 0.0
    %162 = vadd.xlane.f32.xlu0 %v161
    %v163 = vpop.xlane.xlu0 %162
    %v164 = vmul.f32 %v160, %v151
    %v165 = vmul.f32 %v163, %v151
    %v166 = vadd.f32 %v164, 1e-12
    %v167 = vadd.f32 %v165, 1e-12
    %v168 = vrsqrt.pop %v166
    %v169 = vrsqrt.pop %v167
    %v170 = vmul.f32 %v154, %v168
    %v171 = vmul.f32 %v155, %v169
    %v172 = vlaneseq
    %v173 = vshrl.u32 %v172, 7
    %v174 = vsub.s32 0, %v173
    %v175 = vrot.slane %v143, %v174
    %v176 = vmul.f32 %v170, %v175
    %v177 = vmul.f32 %v171, %v175
    %v178 = vlaneseq
    %v179 = vshrl.u32 %v178, 7
    %v180 = vsub.s32 1, %v179
    %v181 = vrot.slane %v143, %v180
    %v182 = vadd.f32 %v176, %v181
    %v183 = vadd.f32 %v177, %v181
    %v184 = vld [vmem:[%s3] sm:$0x1]
    %v185 = vld [vmem:[%s3 + $0x1] sm:$0x1]
    %v186 = vld [vmem:[#allocation4 + $0x38] sm:$0xf]
    %v187 = vpack.c.bf16 %v183, %v182
    %v188 = vld [vmem:[#allocation2] sm:$0xf]
    %v189 = vld [vmem:[#allocation2 + $0x4] sm:$0xf]
    %v190 = vld [vmem:[#allocation2 + $0x8] sm:$0xf]
    %v191 = vld [vmem:[#allocation2 + $0xc] sm:$0xf]
    %v192 = vlaneseq
    %v193 = vshrl.u32 %v192, 7
    %v194 = vsub.s32 0, %v193
    %v195 = vrot.slane %v186, %v194
    %v200 = vunpack.c.l.b16 %v188
    %v201 = vunpack.c.l.b16 %v189
    %v202 = vunpack.c.l.b16 %v190
    %v203 = vunpack.c.l.b16 %v191
    %v204 = vpack.c.b16 %v201, %v200
    %v205 = vpack.c.b16 %v203, %v202
    %v209 = vsel %vm144, %v187, 0
    %211 = vmatprep.subr.bf16.mxu0 0
    %212 = vmatpush1.bf16.msra.mxu0 %v204
    %213 = vmatprep.subr.bf16.mxu0 0
    %214 = vmatpush1.bf16.msra.mxu0 %v205
    %215 = vmatprep.subr.bf16.mxu0 0
    %216 = vmatpush1.bf16.msra.mxu0 0
    %217 = vmatprep.subr.bf16.mxu0 0
    %218 = vmatpush1.bf16.msra.mxu0 0
    %219 = vmatprep.subr.bf16.mxu0 0
    %220 = vmatpush1.bf16.msra.mxu0 0
    %221 = vmatprep.subr.bf16.mxu0 0
    %222 = vmatpush1.bf16.msra.mxu0 0
    %223 = vmatprep.subr.bf16.mxu0 0
    %224 = vmatpush1.bf16.msra.mxu0 0
    %225 = vmatprep.subr.bf16.mxu0 0
    %226 = vmatpush1.bf16.msra.mxu0 0
    %227 = vmatprep.subr.bf16.mxu0 0
    %228 = vmatpush1.bf16.msra.mxu0 0
    %229 = vmatprep.subr.bf16.mxu0 0
    %230 = vmatpush1.bf16.msra.mxu0 0
    %231 = vmatprep.subr.bf16.mxu0 0
    %232 = vmatpush1.bf16.msra.mxu0 0
    %233 = vmatprep.subr.bf16.mxu0 0
    %234 = vmatpush1.bf16.msra.mxu0 0
    %235 = vmatprep.subr.bf16.mxu0 0
    %236 = vmatpush1.bf16.msra.mxu0 0
    %237 = vmatprep.subr.bf16.mxu0 0
    %238 = vmatpush1.bf16.msra.mxu0 0
    %239 = vmatprep.subr.bf16.mxu0 0
    %240 = vmatpush1.bf16.msra.mxu0 0
    %241 = vmatprep.subr.bf16.mxu0 0
    %242 = vmatpush1.bf16.msra.mxu0 0
    %243 = vmatprep.mubr.bf16.mxu0 0
    %244 = vmatmul.mubr.bf16.gmra.mrb[0].mxu0 %v209
    %v245 = vpop.f32.mrb[0].mxu0
    %v246 = vadd.f32 %v195, %v245
    %v247 = vpop.f32.mrb[0].mxu0
    %v248 = vpop.f32.mrb[0].mxu0
    %v249 = vadd.f32 %v195, %v248
    %v250 = vpop.f32.mrb[0].mxu0
    %251 = vdwg.mxu0
    %v252 = vlaneseq
    %v253 = vshrl.u32 %v252, 7
    %v254 = vsub.s32 1, %v253
    %v255 = vrot.slane %v186, %v254
    %256 = vrot.lane.b32.xlu0 %v204, 96
    %v257 = vpop.permute.xlu0 %256
    %258 = vrot.lane.b32.xlu0 %v205, 96
    %v259 = vpop.permute.xlu0 %258
    %262 = vmatprep.subr.bf16.mxu0 0
    %263 = vmatpush1.bf16.msra.mxu0 %v257
    %264 = vmatprep.subr.bf16.mxu0 0
    %265 = vmatpush1.bf16.msra.mxu0 %v259
    %266 = vmatprep.subr.bf16.mxu0 0
    %267 = vmatpush1.bf16.msra.mxu0 0
    %268 = vmatprep.subr.bf16.mxu0 0
    %269 = vmatpush1.bf16.msra.mxu0 0
    %270 = vmatprep.subr.bf16.mxu0 0
    %271 = vmatpush1.bf16.msra.mxu0 0
    %272 = vmatprep.subr.bf16.mxu0 0
    %273 = vmatpush1.bf16.msra.mxu0 0
    %274 = vmatprep.subr.bf16.mxu0 0
    %275 = vmatpush1.bf16.msra.mxu0 0
    %276 = vmatprep.subr.bf16.mxu0 0
    %277 = vmatpush1.bf16.msra.mxu0 0
    %278 = vmatprep.subr.bf16.mxu0 0
    %279 = vmatpush1.bf16.msra.mxu0 0
    %280 = vmatprep.subr.bf16.mxu0 0
    %281 = vmatpush1.bf16.msra.mxu0 0
    %282 = vmatprep.subr.bf16.mxu0 0
    %283 = vmatpush1.bf16.msra.mxu0 0
    %284 = vmatprep.subr.bf16.mxu0 0
    %285 = vmatpush1.bf16.msra.mxu0 0
    %286 = vmatprep.subr.bf16.mxu0 0
    %287 = vmatpush1.bf16.msra.mxu0 0
    %288 = vmatprep.subr.bf16.mxu0 0
    %289 = vmatpush1.bf16.msra.mxu0 0
    %290 = vmatprep.subr.bf16.mxu0 0
    %291 = vmatpush1.bf16.msra.mxu0 0
    %292 = vmatprep.subr.bf16.mxu0 0
    %293 = vmatpush1.bf16.msra.mxu0 0
    %294 = vmatprep.mubr.bf16.mxu0 0
    %295 = vmatmul.mubr.bf16.gmra.mrb[0].mxu0 %v209
    %v296 = vpop.f32.mrb[0].mxu0
    %v297 = vadd.f32 %v255, %v296
    %v298 = vpop.f32.mrb[0].mxu0
    %v299 = vpop.f32.mrb[0].mxu0
    %v300 = vadd.f32 %v255, %v299
    %v301 = vpop.f32.mrb[0].mxu0
    %302 = vdwg.mxu0
    %v303 = vlaneseq
    %v304 = vshrl.u32 %v303, 7
    %v305 = vsub.s32 2, %v304
    %v306 = vrot.slane %v186, %v305
    %307 = vrot.lane.b32.xlu0 %v204, 64
    %v308 = vpop.permute.xlu0 %307
    %309 = vrot.lane.b32.xlu0 %v205, 64
    %v310 = vpop.permute.xlu0 %309
    %313 = vmatprep.subr.bf16.mxu0 0
    %314 = vmatpush1.bf16.msra.mxu0 %v308
    %315 = vmatprep.subr.bf16.mxu0 0
    %316 = vmatpush1.bf16.msra.mxu0 %v310
    %317 = vmatprep.subr.bf16.mxu0 0
    %318 = vmatpush1.bf16.msra.mxu0 0
    %319 = vmatprep.subr.bf16.mxu0 0
    %320 = vmatpush1.bf16.msra.mxu0 0
    %321 = vmatprep.subr.bf16.mxu0 0
    %322 = vmatpush1.bf16.msra.mxu0 0
    %323 = vmatprep.subr.bf16.mxu0 0
    %324 = vmatpush1.bf16.msra.mxu0 0
    %325 = vmatprep.subr.bf16.mxu0 0
    %326 = vmatpush1.bf16.msra.mxu0 0
    %327 = vmatprep.subr.bf16.mxu0 0
    %328 = vmatpush1.bf16.msra.mxu0 0
    %329 = vmatprep.subr.bf16.mxu0 0
    %330 = vmatpush1.bf16.msra.mxu0 0
    %331 = vmatprep.subr.bf16.mxu0 0
    %332 = vmatpush1.bf16.msra.mxu0 0
    %333 = vmatprep.subr.bf16.mxu0 0
    %334 = vmatpush1.bf16.msra.mxu0 0
    %335 = vmatprep.subr.bf16.mxu0 0
    %336 = vmatpush1.bf16.msra.mxu0 0
    %337 = vmatprep.subr.bf16.mxu0 0
    %338 = vmatpush1.bf16.msra.mxu0 0
    %339 = vmatprep.subr.bf16.mxu0 0
    %340 = vmatpush1.bf16.msra.mxu0 0
    %341 = vmatprep.subr.bf16.mxu0 0
    %342 = vmatpush1.bf16.msra.mxu0 0
    %343 = vmatprep.subr.bf16.mxu0 0
    %344 = vmatpush1.bf16.msra.mxu0 0
    %345 = vmatprep.mubr.bf16.mxu0 0
    %346 = vmatmul.mubr.bf16.gmra.mrb[0].mxu0 %v209
    %v347 = vpop.f32.mrb[0].mxu0
    %v348 = vadd.f32 %v306, %v347
    %v349 = vpop.f32.mrb[0].mxu0
    %v350 = vpop.f32.mrb[0].mxu0
    %v351 = vadd.f32 %v306, %v350
    %v352 = vpop.f32.mrb[0].mxu0
    %353 = vdwg.mxu0
    %v354 = vmul.f32 %v246, 0.35355338
    %v355 = vmul.f32 %v249, 0.35355338
    %v356 = vpack.c.bf16 %v355, %v354
    %v357 = vpack.c.bf16 %v300, %v297
    %v358 = vpack.c.bf16 %v351, %v348
    %v360 = vunpack.c.l.b16 %v356
    %v361 = vunpack.c.h.b16 %v356
    %v362 = vpack.c.b16 %v360, %v360
    %v363 = vpack.c.b16 %v361, %v361
    %v365 = vunpack.c.l.b16 %v357
    %v366 = vunpack.c.h.b16 %v357
    %v367 = vpack.c.b16 %v365, %v365
    %v368 = vpack.c.b16 %v366, %v366
    %v370 = vunpack.c.l.b16 %v358
    %v371 = vunpack.c.h.b16 %v358
    %v372 = vpack.c.b16 %v370, %v370
    %v373 = vpack.c.b16 %v371, %v371
    %v376 = vlaneseq
    %v377 = vshrl.u32 %v376, 7
    %v378 = vsub.s32 0, %v377
    %v379 = vrot.slane %v184, %v378
    %v380 = vlaneseq
    %v381 = vshrl.u32 %v380, 7
    %v382 = vsub.s32 0, %v381
    %v383 = vrot.slane %v185, %v382
    %vm386 = vcmask 64512
    %v388 = vsel %vm386, %v362, 0
    %v391 = vsel %vm386, %v367, 0
    %393 = vmatprep.subr.bf16.mxu0 0
    %394 = vmatpush1.bf16.xpose.msra.mxu0 %v391
    %395 = vmatprep.subr.bf16.mxu0 0
    %396 = vmatpush1.bf16.xpose.msra.mxu0 0
    %397 = vmatprep.subr.bf16.mxu0 0
    %398 = vmatpush1.bf16.xpose.msra.mxu0 0
    %399 = vmatprep.subr.bf16.mxu0 0
    %400 = vmatpush1.bf16.xpose.msra.mxu0 0
    %401 = vmatprep.subr.bf16.mxu0 0
    %402 = vmatpush1.bf16.xpose.msra.mxu0 0
    %403 = vmatprep.subr.bf16.mxu0 0
    %404 = vmatpush1.bf16.xpose.msra.mxu0 0
    %405 = vmatprep.subr.bf16.mxu0 0
    %406 = vmatpush1.bf16.xpose.msra.mxu0 0
    %407 = vmatprep.subr.bf16.mxu0 0
    %408 = vmatpush1.bf16.xpose.msra.mxu0 0
    %409 = vmatprep.subr.bf16.mxu0 0
    %410 = vmatpush1.bf16.xpose.msra.mxu0 0
    %411 = vmatprep.subr.bf16.mxu0 0
    %412 = vmatpush1.bf16.xpose.msra.mxu0 0
    %413 = vmatprep.subr.bf16.mxu0 0
    %414 = vmatpush1.bf16.xpose.msra.mxu0 0
    %415 = vmatprep.subr.bf16.mxu0 0
    %416 = vmatpush1.bf16.xpose.msra.mxu0 0
    %417 = vmatprep.subr.bf16.mxu0 0
    %418 = vmatpush1.bf16.xpose.msra.mxu0 0
    %419 = vmatprep.subr.bf16.mxu0 0
    %420 = vmatpush1.bf16.xpose.msra.mxu0 0
    %421 = vmatprep.subr.bf16.mxu0 0
    %422 = vmatpush1.bf16.xpose.msra.mxu0 0
    %423 = vmatprep.subr.bf16.mxu0 0
    %424 = vmatpush1.bf16.xpose.msra.mxu0 0
    %425 = vmatprep.mubr.bf16.mxu0 0
    %426 = vmatmul.mubr.bf16.gmra.mrb[0].mxu0 %v388
    %v427 = vpop.f32.mrb[0].mxu0
    %v428 = vadd.f32 %v379, %v427
    %v429 = vpop.f32.mrb[0].mxu0
    %v430 = vpop.f32.mrb[0].mxu0
    %v431 = vpop.f32.mrb[0].mxu0
    %432 = vdwg.mxu0
    %v434 = vsel %vm386, %v363, 0
    %v437 = vsel %vm386, %v368, 0
    %439 = vmatprep.subr.bf16.mxu0 0
    %440 = vmatpush1.bf16.xpose.msra.mxu0 %v437
    %441 = vmatprep.subr.bf16.mxu0 0
    %442 = vmatpush1.bf16.xpose.msra.mxu0 0
    %443 = vmatprep.subr.bf16.mxu0 0
    %444 = vmatpush1.bf16.xpose.msra.mxu0 0
    %445 = vmatprep.subr.bf16.mxu0 0
    %446 = vmatpush1.bf16.xpose.msra.mxu0 0
    %447 = vmatprep.subr.bf16.mxu0 0
    %448 = vmatpush1.bf16.xpose.msra.mxu0 0
    %449 = vmatprep.subr.bf16.mxu0 0
    %450 = vmatpush1.bf16.xpose.msra.mxu0 0
    %451 = vmatprep.subr.bf16.mxu0 0
    %452 = vmatpush1.bf16.xpose.msra.mxu0 0
    %453 = vmatprep.subr.bf16.mxu0 0
    %454 = vmatpush1.bf16.xpose.msra.mxu0 0
    %455 = vmatprep.subr.bf16.mxu0 0
    %456 = vmatpush1.bf16.xpose.msra.mxu0 0
    %457 = vmatprep.subr.bf16.mxu0 0
    %458 = vmatpush1.bf16.xpose.msra.mxu0 0
    %459 = vmatprep.subr.bf16.mxu0 0
    %460 = vmatpush1.bf16.xpose.msra.mxu0 0
    %461 = vmatprep.subr.bf16.mxu0 0
    %462 = vmatpush1.bf16.xpose.msra.mxu0 0
    %463 = vmatprep.subr.bf16.mxu0 0
    %464 = vmatpush1.bf16.xpose.msra.mxu0 0
    %465 = vmatprep.subr.bf16.mxu0 0
    %466 = vmatpush1.bf16.xpose.msra.mxu0 0
    %467 = vmatprep.subr.bf16.mxu0 0
    %468 = vmatpush1.bf16.xpose.msra.mxu0 0
    %469 = vmatprep.subr.bf16.mxu0 0
    %470 = vmatpush1.bf16.xpose.msra.mxu0 0
    %471 = vmatprep.mubr.bf16.mxu0 0
    %472 = vmatmul.mubr.bf16.gmra.mrb[0].mxu0 %v434
    %v473 = vpop.f32.mrb[0].mxu0
    %v474 = vadd.f32 %v383, %v473
    %v475 = vpop.f32.mrb[0].mxu0
    %v476 = vpop.f32.mrb[0].mxu0
    %v477 = vpop.f32.mrb[0].mxu0
    %478 = vdwg.mxu0
    %v479 = vsel %vm386, %v428, -inf
    %480 = vmax.xlane.f32.xlu0 %v479
    %v481 = vpop.xlane.xlu0 %480
    %v482 = vsel %vm386, %v474, -inf
    %483 = vmax.xlane.f32.xlu0 %v482
    %v484 = vpop.xlane.xlu0 %483
    %v485 = vsub.f32 %v428, %v481
    %v486 = vsub.f32 %v474, %v484
    %v487 = vmul.f32 %v485, 1.442695
    %v488 = vpow.pop %v487
    %v489 = vmul.f32 %v486, 1.442695
    %v490 = vpow.pop %v489
    %v491 = vsel %vm386, %v488, 0.0
    %492 = vadd.xlane.f32.xlu0 %v491
    %v493 = vpop.xlane.xlu0 %492
    %v494 = vsel %vm386, %v490, 0.0
    %495 = vadd.xlane.f32.xlu0 %v494
    %v496 = vpop.xlane.xlu0 %495
    %v497 = vrcp.pop %v493
    %v498 = vrcp.pop %v496
    %v499 = vmul.f32 %v488, %v497
    %v500 = vmul.f32 %v490, %v498
    %v501 = vpack.c.bf16 %v499, %v499
    %v502 = vpack.c.bf16 %v500, %v500
    %v504 = vsel %vm386, %v501, 0
    %vm506 = vcmask 1043456
    %v508 = vsel %vm506, %v372, 0
    %510 = vmatprep.subr.bf16.mxu0 0
    %511 = vmatpush1.bf16.msra.mxu0 %v508
    %512 = vmatprep.subr.bf16.mxu0 0
    %513 = vmatpush1.bf16.msra.mxu0 0
    %514 = vmatprep.subr.bf16.mxu0 0
    %515 = vmatpush1.bf16.msra.mxu0 0
    %516 = vmatprep.subr.bf16.mxu0 0
    %517 = vmatpush1.bf16.msra.mxu0 0
    %518 = vmatprep.subr.bf16.mxu0 0
    %519 = vmatpush1.bf16.msra.mxu0 0
    %520 = vmatprep.subr.bf16.mxu0 0
    %521 = vmatpush1.bf16.msra.mxu0 0
    %522 = vmatprep.subr.bf16.mxu0 0
    %523 = vmatpush1.bf16.msra.mxu0 0
    %524 = vmatprep.subr.bf16.mxu0 0
    %525 = vmatpush1.bf16.msra.mxu0 0
    %526 = vmatprep.subr.bf16.mxu0 0
    %527 = vmatpush1.bf16.msra.mxu0 0
    %528 = vmatprep.subr.bf16.mxu0 0
    %529 = vmatpush1.bf16.msra.mxu0 0
    %530 = vmatprep.subr.bf16.mxu0 0
    %531 = vmatpush1.bf16.msra.mxu0 0
    %532 = vmatprep.subr.bf16.mxu0 0
    %533 = vmatpush1.bf16.msra.mxu0 0
    %534 = vmatprep.subr.bf16.mxu0 0
    %535 = vmatpush1.bf16.msra.mxu0 0
    %536 = vmatprep.subr.bf16.mxu0 0
    %537 = vmatpush1.bf16.msra.mxu0 0
    %538 = vmatprep.subr.bf16.mxu0 0
    %539 = vmatpush1.bf16.msra.mxu0 0
    %540 = vmatprep.subr.bf16.mxu0 0
    %541 = vmatpush1.bf16.msra.mxu0 0
    %542 = vmatprep.mubr.bf16.mxu0 0
    %543 = vmatmul.mubr.bf16.gmra.mrb[0].mxu0 %v504
    %v544 = vpop.f32.mrb[0].mxu0
    %v545 = vadd.f32 0.0, %v544
    %v546 = vpop.f32.mrb[0].mxu0
    %v547 = vpop.f32.mrb[0].mxu0
    %v548 = vpop.f32.mrb[0].mxu0
    %549 = vdwg.mxu0
    %v551 = vsel %vm386, %v502, 0
    %v554 = vsel %vm506, %v373, 0
    %556 = vmatprep.subr.bf16.mxu0 0
    %557 = vmatpush1.bf16.msra.mxu0 %v554
    %558 = vmatprep.subr.bf16.mxu0 0
    %559 = vmatpush1.bf16.msra.mxu0 0
    %560 = vmatprep.subr.bf16.mxu0 0
    %561 = vmatpush1.bf16.msra.mxu0 0
    %562 = vmatprep.subr.bf16.mxu0 0
    %563 = vmatpush1.bf16.msra.mxu0 0
    %564 = vmatprep.subr.bf16.mxu0 0
    %565 = vmatpush1.bf16.msra.mxu0 0
    %566 = vmatprep.subr.bf16.mxu0 0
    %567 = vmatpush1.bf16.msra.mxu0 0
    %568 = vmatprep.subr.bf16.mxu0 0
    %569 = vmatpush1.bf16.msra.mxu0 0
    %570 = vmatprep.subr.bf16.mxu0 0
    %571 = vmatpush1.bf16.msra.mxu0 0
    %572 = vmatprep.subr.bf16.mxu0 0
    %573 = vmatpush1.bf16.msra.mxu0 0
    %574 = vmatprep.subr.bf16.mxu0 0
    %575 = vmatpush1.bf16.msra.mxu0 0
    %576 = vmatprep.subr.bf16.mxu0 0
    %577 = vmatpush1.bf16.msra.mxu0 0
    %578 = vmatprep.subr.bf16.mxu0 0
    %579 = vmatpush1.bf16.msra.mxu0 0
    %580 = vmatprep.subr.bf16.mxu0 0
    %581 = vmatpush1.bf16.msra.mxu0 0
    %582 = vmatprep.subr.bf16.mxu0 0
    %583 = vmatpush1.bf16.msra.mxu0 0
    %584 = vmatprep.subr.bf16.mxu0 0
    %585 = vmatpush1.bf16.msra.mxu0 0
    %586 = vmatprep.subr.bf16.mxu0 0
    %587 = vmatpush1.bf16.msra.mxu0 0
    %588 = vmatprep.mubr.bf16.mxu0 0
    %589 = vmatmul.mubr.bf16.gmra.mrb[0].mxu0 %v551
    %v590 = vpop.f32.mrb[0].mxu0
    %v591 = vadd.f32 0.0, %v590
    %v592 = vpop.f32.mrb[0].mxu0
    %v593 = vpop.f32.mrb[0].mxu0
    %v594 = vpop.f32.mrb[0].mxu0
    %595 = vdwg.mxu0
    %v596 = vld [vmem:[#allocation2] sm:$0xf]
    %v597 = vpack.c.bf16 %v591, %v545
    %598 = vrot.lane.b32.xlu0 %v362, 120
    %v599 = vpop.permute.xlu0 %598
    %600 = vrot.lane.b32.xlu0 %v367, 120
    %v601 = vpop.permute.xlu0 %600
    %v603 = vsel %vm386, %v599, 0
    %v606 = vsel %vm386, %v601, 0
    %608 = vmatprep.subr.bf16.mxu0 0
    %609 = vmatpush1.bf16.xpose.msra.mxu0 %v606
    %610 = vmatprep.subr.bf16.mxu0 0
    %611 = vmatpush1.bf16.xpose.msra.mxu0 0
    %612 = vmatprep.subr.bf16.mxu0 0
    %613 = vmatpush1.bf16.xpose.msra.mxu0 0
    %614 = vmatprep.subr.bf16.mxu0 0
    %615 = vmatpush1.bf16.xpose.msra.mxu0 0
    %616 = vmatprep.subr.bf16.mxu0 0
    %617 = vmatpush1.bf16.xpose.msra.mxu0 0
    %618 = vmatprep.subr.bf16.mxu0 0
    %619 = vmatpush1.bf16.xpose.msra.mxu0 0
    %620 = vmatprep.subr.bf16.mxu0 0
    %621 = vmatpush1.bf16.xpose.msra.mxu0 0
    %622 = vmatprep.subr.bf16.mxu0 0
    %623 = vmatpush1.bf16.xpose.msra.mxu0 0
    %624 = vmatprep.subr.bf16.mxu0 0
    %625 = vmatpush1.bf16.xpose.msra.mxu0 0
    %626 = vmatprep.subr.bf16.mxu0 0
    %627 = vmatpush1.bf16.xpose.msra.mxu0 0
    %628 = vmatprep.subr.bf16.mxu0 0
    %629 = vmatpush1.bf16.xpose.msra.mxu0 0
    %630 = vmatprep.subr.bf16.mxu0 0
    %631 = vmatpush1.bf16.xpose.msra.mxu0 0
    %632 = vmatprep.subr.bf16.mxu0 0
    %633 = vmatpush1.bf16.xpose.msra.mxu0 0
    %634 = vmatprep.subr.bf16.mxu0 0
    %635 = vmatpush1.bf16.xpose.msra.mxu0 0
    %636 = vmatprep.subr.bf16.mxu0 0
    %637 = vmatpush1.bf16.xpose.msra.mxu0 0
    %638 = vmatprep.subr.bf16.mxu0 0
    %639 = vmatpush1.bf16.xpose.msra.mxu0 0
    %640 = vmatprep.mubr.bf16.mxu0 0
    %641 = vmatmul.mubr.bf16.gmra.mrb[0].mxu0 %v603
    %v642 = vpop.f32.mrb[0].mxu0
    %v643 = vadd.f32 %v379, %v642
    %v644 = vpop.f32.mrb[0].mxu0
    %v645 = vpop.f32.mrb[0].mxu0
    %v646 = vpop.f32.mrb[0].mxu0
    %647 = vdwg.mxu0
    %648 = vrot.lane.b32.xlu0 %v363, 120
    %v649 = vpop.permute.xlu0 %648
    %650 = vrot.lane.b32.xlu0 %v368, 120
    %v651 = vpop.permute.xlu0 %650
    %v653 = vsel %vm386, %v649, 0
    %v656 = vsel %vm386, %v651, 0
    %658 = vmatprep.subr.bf16.mxu0 0
    %659 = vmatpush1.bf16.xpose.msra.mxu0 %v656
    %660 = vmatprep.subr.bf16.mxu0 0
    %661 = vmatpush1.bf16.xpose.msra.mxu0 0
    %662 = vmatprep.subr.bf16.mxu0 0
    %663 = vmatpush1.bf16.xpose.msra.mxu0 0
    %664 = vmatprep.subr.bf16.mxu0 0
    %665 = vmatpush1.bf16.xpose.msra.mxu0 0
    %666 = vmatprep.subr.bf16.mxu0 0
    %667 = vmatpush1.bf16.xpose.msra.mxu0 0
    %668 = vmatprep.subr.bf16.mxu0 0
    %669 = vmatpush1.bf16.xpose.msra.mxu0 0
    %670 = vmatprep.subr.bf16.mxu0 0
    %671 = vmatpush1.bf16.xpose.msra.mxu0 0
    %672 = vmatprep.subr.bf16.mxu0 0
    %673 = vmatpush1.bf16.xpose.msra.mxu0 0
    %674 = vmatprep.subr.bf16.mxu0 0
    %675 = vmatpush1.bf16.xpose.msra.mxu0 0
    %676 = vmatprep.subr.bf16.mxu0 0
    %677 = vmatpush1.bf16.xpose.msra.mxu0 0
    %678 = vmatprep.subr.bf16.mxu0 0
    %679 = vmatpush1.bf16.xpose.msra.mxu0 0
    %680 = vmatprep.subr.bf16.mxu0 0
    %681 = vmatpush1.bf16.xpose.msra.mxu0 0
    %682 = vmatprep.subr.bf16.mxu0 0
    %683 = vmatpush1.bf16.xpose.msra.mxu0 0
    %684 = vmatprep.subr.bf16.mxu0 0
    %685 = vmatpush1.bf16.xpose.msra.mxu0 0
    %686 = vmatprep.subr.bf16.mxu0 0
    %687 = vmatpush1.bf16.xpose.msra.mxu0 0
    %688 = vmatprep.subr.bf16.mxu0 0
    %689 = vmatpush1.bf16.xpose.msra.mxu0 0
    %690 = vmatprep.mubr.bf16.mxu0 0
    %691 = vmatmul.mubr.bf16.gmra.mrb[0].mxu0 %v653
    %v692 = vpop.f32.mrb[0].mxu0
    %v693 = vadd.f32 %v383, %v692
    %v694 = vpop.f32.mrb[0].mxu0
    %v695 = vpop.f32.mrb[0].mxu0
    %v696 = vpop.f32.mrb[0].mxu0
    %697 = vdwg.mxu0
    %v698 = vsel %vm386, %v643, -inf
    %699 = vmax.xlane.f32.xlu0 %v698
    %v700 = vpop.xlane.xlu0 %699
    %v701 = vsel %vm386, %v693, -inf
    %702 = vmax.xlane.f32.xlu0 %v701
    %v703 = vpop.xlane.xlu0 %702
    %v704 = vsub.f32 %v643, %v700
    %v705 = vsub.f32 %v693, %v703
    %v706 = vmul.f32 %v704, 1.442695
    %v707 = vpow.pop %v706
    %v708 = vmul.f32 %v705, 1.442695
    %v709 = vpow.pop %v708
    %v710 = vsel %vm386, %v707, 0.0
    %711 = vadd.xlane.f32.xlu0 %v710
    %v712 = vpop.xlane.xlu0 %711
    %v713 = vsel %vm386, %v709, 0.0
    %714 = vadd.xlane.f32.xlu0 %v713
    %v715 = vpop.xlane.xlu0 %714
    %v716 = vrcp.pop %v712
    %v717 = vrcp.pop %v715
    %v718 = vmul.f32 %v707, %v716
    %v719 = vmul.f32 %v709, %v717
    %v720 = vpack.c.bf16 %v718, %v718
    %v721 = vpack.c.bf16 %v719, %v719
    %722 = vrot.lane.b32.xlu0 %v372, 120
    %v723 = vpop.permute.xlu0 %722
    %v725 = vsel %vm386, %v720, 0
    %v728 = vsel %vm506, %v723, 0
    %730 = vmatprep.subr.bf16.mxu0 0
    %731 = vmatpush1.bf16.msra.mxu0 %v728
    %732 = vmatprep.subr.bf16.mxu0 0
    %733 = vmatpush1.bf16.msra.mxu0 0
    %734 = vmatprep.subr.bf16.mxu0 0
    %735 = vmatpush1.bf16.msra.mxu0 0
    %736 = vmatprep.subr.bf16.mxu0 0
    %737 = vmatpush1.bf16.msra.mxu0 0
    %738 = vmatprep.subr.bf16.mxu0 0
    %739 = vmatpush1.bf16.msra.mxu0 0
    %740 = vmatprep.subr.bf16.mxu0 0
    %741 = vmatpush1.bf16.msra.mxu0 0
    %742 = vmatprep.subr.bf16.mxu0 0
    %743 = vmatpush1.bf16.msra.mxu0 0
    %744 = vmatprep.subr.bf16.mxu0 0
    %745 = vmatpush1.bf16.msra.mxu0 0
    %746 = vmatprep.subr.bf16.mxu0 0
    %747 = vmatpush1.bf16.msra.mxu0 0
    %748 = vmatprep.subr.bf16.mxu0 0
    %749 = vmatpush1.bf16.msra.mxu0 0
    %750 = vmatprep.subr.bf16.mxu0 0
    %751 = vmatpush1.bf16.msra.mxu0 0
    %752 = vmatprep.subr.bf16.mxu0 0
    %753 = vmatpush1.bf16.msra.mxu0 0
    %754 = vmatprep.subr.bf16.mxu0 0
    %755 = vmatpush1.bf16.msra.mxu0 0
    %756 = vmatprep.subr.bf16.mxu0 0
    %757 = vmatpush1.bf16.msra.mxu0 0
    %758 = vmatprep.subr.bf16.mxu0 0
    %759 = vmatpush1.bf16.msra.mxu0 0
    %760 = vmatprep.subr.bf16.mxu0 0
    %761 = vmatpush1.bf16.msra.mxu0 0
    %762 = vmatprep.mubr.bf16.mxu0 0
    %763 = vmatmul.mubr.bf16.gmra.mrb[0].mxu0 %v725
    %v764 = vpop.f32.mrb[0].mxu0
    %v765 = vadd.f32 0.0, %v764
    %v766 = vpop.f32.mrb[0].mxu0
    %v767 = vpop.f32.mrb[0].mxu0
    %v768 = vpop.f32.mrb[0].mxu0
    %769 = vdwg.mxu0
    %770 = vrot.lane.b32.xlu0 %v373, 120
    %v771 = vpop.permute.xlu0 %770
    %v773 = vsel %vm386, %v721, 0
    %v776 = vsel %vm506, %v771, 0
    %778 = vmatprep.subr.bf16.mxu0 0
    %779 = vmatpush1.bf16.msra.mxu0 %v776
    %780 = vmatprep.subr.bf16.mxu0 0
    %781 = vmatpush1.bf16.msra.mxu0 0
    %782 = vmatprep.subr.bf16.mxu0 0
    %783 = vmatpush1.bf16.msra.mxu0 0
    %784 = vmatprep.subr.bf16.mxu0 0
    %785 = vmatpush1.bf16.msra.mxu0 0
    %786 = vmatprep.subr.bf16.mxu0 0
    %787 = vmatpush1.bf16.msra.mxu0 0
    %788 = vmatprep.subr.bf16.mxu0 0
    %789 = vmatpush1.bf16.msra.mxu0 0
    %790 = vmatprep.subr.bf16.mxu0 0
    %791 = vmatpush1.bf16.msra.mxu0 0
    %792 = vmatprep.subr.bf16.mxu0 0
    %793 = vmatpush1.bf16.msra.mxu0 0
    %794 = vmatprep.subr.bf16.mxu0 0
    %795 = vmatpush1.bf16.msra.mxu0 0
    %796 = vmatprep.subr.bf16.mxu0 0
    %797 = vmatpush1.bf16.msra.mxu0 0
    %798 = vmatprep.subr.bf16.mxu0 0
    %799 = vmatpush1.bf16.msra.mxu0 0
    %800 = vmatprep.subr.bf16.mxu0 0
    %801 = vmatpush1.bf16.msra.mxu0 0
    %802 = vmatprep.subr.bf16.mxu0 0
    %803 = vmatpush1.bf16.msra.mxu0 0
    %804 = vmatprep.subr.bf16.mxu0 0
    %805 = vmatpush1.bf16.msra.mxu0 0
    %806 = vmatprep.subr.bf16.mxu0 0
    %807 = vmatpush1.bf16.msra.mxu0 0
    %808 = vmatprep.subr.bf16.mxu0 0
    %809 = vmatpush1.bf16.msra.mxu0 0
    %810 = vmatprep.mubr.bf16.mxu0 0
    %811 = vmatmul.mubr.bf16.gmra.mrb[0].mxu0 %v773
    %v812 = vpop.f32.mrb[0].mxu0
    %v813 = vadd.f32 0.0, %v812
    %v814 = vpop.f32.mrb[0].mxu0
    %v815 = vpop.f32.mrb[0].mxu0
    %v816 = vpop.f32.mrb[0].mxu0
    %817 = vdwg.mxu0
    %v818 = vld [vmem:[#allocation2 + $0x4] sm:$0xf]
    %v819 = vpack.c.bf16 %v813, %v765
    %v821 = vunpack.c.l.b16 %v818
    %v822 = vpack.c.b16 %v821, %v821
    %823 = vrot.lane.b32.xlu0 %v822, 32
    %v824 = vpop.permute.xlu0 %823
    %v826 = vsel %vm386, %v819, 0
    %v829 = vsel %vm506, %v824, 0
    %831 = vmatprep.subr.bf16.mxu0 0
    %832 = vmatpush1.bf16.msra.mxu0 %v829
    %833 = vmatprep.subr.bf16.mxu0 0
    %834 = vmatpush1.bf16.msra.mxu0 0
    %835 = vmatprep.subr.bf16.mxu0 0
    %836 = vmatpush1.bf16.msra.mxu0 0
    %837 = vmatprep.subr.bf16.mxu0 0
    %838 = vmatpush1.bf16.msra.mxu0 0
    %839 = vmatprep.subr.bf16.mxu0 0
    %840 = vmatpush1.bf16.msra.mxu0 0
    %841 = vmatprep.subr.bf16.mxu0 0
    %842 = vmatpush1.bf16.msra.mxu0 0
    %843 = vmatprep.subr.bf16.mxu0 0
    %844 = vmatpush1.bf16.msra.mxu0 0
    %845 = vmatprep.subr.bf16.mxu0 0
    %846 = vmatpush1.bf16.msra.mxu0 0
    %847 = vmatprep.subr.bf16.mxu0 0
    %848 = vmatpush1.bf16.msra.mxu0 0
    %849 = vmatprep.subr.bf16.mxu0 0
    %850 = vmatpush1.bf16.msra.mxu0 0
    %851 = vmatprep.subr.bf16.mxu0 0
    %852 = vmatpush1.bf16.msra.mxu0 0
    %853 = vmatprep.subr.bf16.mxu0 0
    %854 = vmatpush1.bf16.msra.mxu0 0
    %855 = vmatprep.subr.bf16.mxu0 0
    %856 = vmatpush1.bf16.msra.mxu0 0
    %857 = vmatprep.subr.bf16.mxu0 0
    %858 = vmatpush1.bf16.msra.mxu0 0
    %859 = vmatprep.subr.bf16.mxu0 0
    %860 = vmatpush1.bf16.msra.mxu0 0
    %861 = vmatprep.subr.bf16.mxu0 0
    %862 = vmatpush1.bf16.msra.mxu0 0
    %863 = vmatprep.mubr.bf16.mxu0 0
    %864 = vmatmul.mubr.bf16.gmra.mrb[0].mxu0 %v826
    %v865 = vpop.f32.mrb[0].mxu0
    %v866 = vadd.f32 0.0, %v865
    %v867 = vpop.f32.mrb[0].mxu0
    %v868 = vpop.f32.mrb[0].mxu0
    %v869 = vadd.f32 0.0, %v868
    %v870 = vpop.f32.mrb[0].mxu0
    %871 = vdwg.mxu0
    %v873 = vunpack.c.l.b16 %v596
    %v874 = vpack.c.b16 %v873, %v873
    %875 = vrot.lane.b32.xlu0 %v874, 32
    %v876 = vpop.permute.xlu0 %875
    %v878 = vsel %vm386, %v597, 0
    %v881 = vsel %vm506, %v876, 0
    %883 = vmatprep.subr.bf16.mxu0 0
    %884 = vmatpush1.bf16.msra.mxu0 %v881
    %885 = vmatprep.subr.bf16.mxu0 0
    %886 = vmatpush1.bf16.msra.mxu0 0
    %887 = vmatprep.subr.bf16.mxu0 0
    %888 = vmatpush1.bf16.msra.mxu0 0
    %889 = vmatprep.subr.bf16.mxu0 0
    %890 = vmatpush1.bf16.msra.mxu0 0
    %891 = vmatprep.subr.bf16.mxu0 0
    %892 = vmatpush1.bf16.msra.mxu0 0
    %893 = vmatprep.subr.bf16.mxu0 0
    %894 = vmatpush1.bf16.msra.mxu0 0
    %895 = vmatprep.subr.bf16.mxu0 0
    %896 = vmatpush1.bf16.msra.mxu0 0
    %897 = vmatprep.subr.bf16.mxu0 0
    %898 = vmatpush1.bf16.msra.mxu0 0
    %899 = vmatprep.subr.bf16.mxu0 0
    %900 = vmatpush1.bf16.msra.mxu0 0
    %901 = vmatprep.subr.bf16.mxu0 0
    %902 = vmatpush1.bf16.msra.mxu0 0
    %903 = vmatprep.subr.bf16.mxu0 0
    %904 = vmatpush1.bf16.msra.mxu0 0
    %905 = vmatprep.subr.bf16.mxu0 0
    %906 = vmatpush1.bf16.msra.mxu0 0
    %907 = vmatprep.subr.bf16.mxu0 0
    %908 = vmatpush1.bf16.msra.mxu0 0
    %909 = vmatprep.subr.bf16.mxu0 0
    %910 = vmatpush1.bf16.msra.mxu0 0
    %911 = vmatprep.subr.bf16.mxu0 0
    %912 = vmatpush1.bf16.msra.mxu0 0
    %913 = vmatprep.subr.bf16.mxu0 0
    %914 = vmatpush1.bf16.msra.mxu0 0
    %915 = vmatprep.mubr.bf16.mxu0 0
    %916 = vmatmul.mubr.bf16.gmra.mrb[0].mxu0 %v878
    %v917 = vpop.f32.mrb[0].mxu0
    %v918 = vadd.f32 %v866, %v917
    %v919 = vpop.f32.mrb[0].mxu0
    %v920 = vpop.f32.mrb[0].mxu0
    %v921 = vadd.f32 %v869, %v920
    %v922 = vpop.f32.mrb[0].mxu0
    %923 = vdwg.mxu0
    %924 = vrot.lane.b32.xlu0 %v362, 112
    %v925 = vpop.permute.xlu0 %924
    %926 = vrot.lane.b32.xlu0 %v367, 112
    %v927 = vpop.permute.xlu0 %926
    %v929 = vsel %vm386, %v925, 0
    %v932 = vsel %vm386, %v927, 0
    %934 = vmatprep.subr.bf16.mxu0 0
    %935 = vmatpush1.bf16.xpose.msra.mxu0 %v932
    %936 = vmatprep.subr.bf16.mxu0 0
    %937 = vmatpush1.bf16.xpose.msra.mxu0 0
    %938 = vmatprep.subr.bf16.mxu0 0
    %939 = vmatpush1.bf16.xpose.msra.mxu0 0
    %940 = vmatprep.subr.bf16.mxu0 0
    %941 = vmatpush1.bf16.xpose.msra.mxu0 0
    %942 = vmatprep.subr.bf16.mxu0 0
    %943 = vmatpush1.bf16.xpose.msra.mxu0 0
    %944 = vmatprep.subr.bf16.mxu0 0
    %945 = vmatpush1.bf16.xpose.msra.mxu0 0
    %946 = vmatprep.subr.bf16.mxu0 0
    %947 = vmatpush1.bf16.xpose.msra.mxu0 0
    %948 = vmatprep.subr.bf16.mxu0 0
    %949 = vmatpush1.bf16.xpose.msra.mxu0 0
    %950 = vmatprep.subr.bf16.mxu0 0
    %951 = vmatpush1.bf16.xpose.msra.mxu0 0
    %952 = vmatprep.subr.bf16.mxu0 0
    %953 = vmatpush1.bf16.xpose.msra.mxu0 0
    %954 = vmatprep.subr.bf16.mxu0 0
    %955 = vmatpush1.bf16.xpose.msra.mxu0 0
    %956 = vmatprep.subr.bf16.mxu0 0
    %957 = vmatpush1.bf16.xpose.msra.mxu0 0
    %958 = vmatprep.subr.bf16.mxu0 0
    %959 = vmatpush1.bf16.xpose.msra.mxu0 0
    %960 = vmatprep.subr.bf16.mxu0 0
    %961 = vmatpush1.bf16.xpose.msra.mxu0 0
    %962 = vmatprep.subr.bf16.mxu0 0
    %963 = vmatpush1.bf16.xpose.msra.mxu0 0
    %964 = vmatprep.subr.bf16.mxu0 0
    %965 = vmatpush1.bf16.xpose.msra.mxu0 0
    %966 = vmatprep.mubr.bf16.mxu0 0
    %967 = vmatmul.mubr.bf16.gmra.mrb[0].mxu0 %v929
    %v968 = vpop.f32.mrb[0].mxu0
    %v969 = vadd.f32 %v379, %v968
    %v970 = vpop.f32.mrb[0].mxu0
    %v971 = vpop.f32.mrb[0].mxu0
    %v972 = vpop.f32.mrb[0].mxu0
    %973 = vdwg.mxu0
    %974 = vrot.lane.b32.xlu0 %v363, 112
    %v975 = vpop.permute.xlu0 %974
    %976 = vrot.lane.b32.xlu0 %v368, 112
    %v977 = vpop.permute.xlu0 %976
    %v979 = vsel %vm386, %v975, 0
    %v982 = vsel %vm386, %v977, 0
    %984 = vmatprep.subr.bf16.mxu0 0
    %985 = vmatpush1.bf16.xpose.msra.mxu0 %v982
    %986 = vmatprep.subr.bf16.mxu0 0
    %987 = vmatpush1.bf16.xpose.msra.mxu0 0
    %988 = vmatprep.subr.bf16.mxu0 0
    %989 = vmatpush1.bf16.xpose.msra.mxu0 0
    %990 = vmatprep.subr.bf16.mxu0 0
    %991 = vmatpush1.bf16.xpose.msra.mxu0 0
    %992 = vmatprep.subr.bf16.mxu0 0
    %993 = vmatpush1.bf16.xpose.msra.mxu0 0
    %994 = vmatprep.subr.bf16.mxu0 0
    %995 = vmatpush1.bf16.xpose.msra.mxu0 0
    %996 = vmatprep.subr.bf16.mxu0 0
    %997 = vmatpush1.bf16.xpose.msra.mxu0 0
    %998 = vmatprep.subr.bf16.mxu0 0
    %999 = vmatpush1.bf16.xpose.msra.mxu0 0
    %1000 = vmatprep.subr.bf16.mxu0 0
    %1001 = vmatpush1.bf16.xpose.msra.mxu0 0
    %1002 = vmatprep.subr.bf16.mxu0 0
    %1003 = vmatpush1.bf16.xpose.msra.mxu0 0
    %1004 = vmatprep.subr.bf16.mxu0 0
    %1005 = vmatpush1.bf16.xpose.msra.mxu0 0
    %1006 = vmatprep.subr.bf16.mxu0 0
    %1007 = vmatpush1.bf16.xpose.msra.mxu0 0
    %1008 = vmatprep.subr.bf16.mxu0 0
    %1009 = vmatpush1.bf16.xpose.msra.mxu0 0
    %1010 = vmatprep.subr.bf16.mxu0 0
    %1011 = vmatpush1.bf16.xpose.msra.mxu0 0
    %1012 = vmatprep.subr.bf16.mxu0 0
    %1013 = vmatpush1.bf16.xpose.msra.mxu0 0
    %1014 = vmatprep.subr.bf16.mxu0 0
    %1015 = vmatpush1.bf16.xpose.msra.mxu0 0
    %1016 = vmatprep.mubr.bf16.mxu0 0
    %1017 = vmatmul.mubr.bf16.gmra.mrb[0].mxu0 %v979
    %v1018 = vpop.f32.mrb[0].mxu0
    %v1019 = vadd.f32 %v383, %v1018
    %v1020 = vpop.f32.mrb[0].mxu0
    %v1021 = vpop.f32.mrb[0].mxu0
    %v1022 = vpop.f32.mrb[0].mxu0
    %1023 = vdwg.mxu0
    %v1024 = vsel %vm386, %v969, -inf
    %1025 = vmax.xlane.f32.xlu0 %v1024
    %v1026 = vpop.xlane.xlu0 %1025
    %v1027 = vsel %vm386, %v1019, -inf
    %1028 = vmax.xlane.f32.xlu0 %v1027
    %v1029 = vpop.xlane.xlu0 %1028
    %v1030 = vsub.f32 %v969, %v1026
    %v1031 = vsub.f32 %v1019, %v1029
    %v1032 = vmul.f32 %v1030, 1.442695
    %v1033 = vpow.pop %v1032
    %v1034 = vmul.f32 %v1031, 1.442695
    %v1035 = vpow.pop %v1034
    %v1036 = vsel %vm386, %v1033, 0.0
    %1037 = vadd.xlane.f32.xlu0 %v1036
    %v1038 = vpop.xlane.xlu0 %1037
    %v1039 = vsel %vm386, %v1035, 0.0
    %1040 = vadd.xlane.f32.xlu0 %v1039
    %v1041 = vpop.xlane.xlu0 %1040
    %v1042 = vrcp.pop %v1038
    %v1043 = vrcp.pop %v1041
    %v1044 = vmul.f32 %v1033, %v1042
    %v1045 = vmul.f32 %v1035, %v1043
    %v1046 = vpack.c.bf16 %v1044, %v1044
    %v1047 = vpack.c.bf16 %v1045, %v1045
    %1048 = vrot.lane.b32.xlu0 %v372, 112
    %v1049 = vpop.permute.xlu0 %1048
    %v1051 = vsel %vm386, %v1046, 0
    %v1054 = vsel %vm506, %v1049, 0
    %1056 = vmatprep.subr.bf16.mxu0 0
    %1057 = vmatpush1.bf16.msra.mxu0 %v1054
    %1058 = vmatprep.subr.bf16.mxu0 0
    %1059 = vmatpush1.bf16.msra.mxu0 0
    %1060 = vmatprep.subr.bf16.mxu0 0
    %1061 = vmatpush1.bf16.msra.mxu0 0
    %1062 = vmatprep.subr.bf16.mxu0 0
    %1063 = vmatpush1.bf16.msra.mxu0 0
    %1064 = vmatprep.subr.bf16.mxu0 0
    %1065 = vmatpush1.bf16.msra.mxu0 0
    %1066 = vmatprep.subr.bf16.mxu0 0
    %1067 = vmatpush1.bf16.msra.mxu0 0
    %1068 = vmatprep.subr.bf16.mxu0 0
    %1069 = vmatpush1.bf16.msra.mxu0 0
    %1070 = vmatprep.subr.bf16.mxu0 0
    %1071 = vmatpush1.bf16.msra.mxu0 0
    %1072 = vmatprep.subr.bf16.mxu0 0
    %1073 = vmatpush1.bf16.msra.mxu0 0
    %1074 = vmatprep.subr.bf16.mxu0 0
    %1075 = vmatpush1.bf16.msra.mxu0 0
    %1076 = vmatprep.subr.bf16.mxu0 0
    %1077 = vmatpush1.bf16.msra.mxu0 0
    %1078 = vmatprep.subr.bf16.mxu0 0
    %1079 = vmatpush1.bf16.msra.mxu0 0
    %1080 = vmatprep.subr.bf16.mxu0 0
    %1081 = vmatpush1.bf16.msra.mxu0 0
    %1082 = vmatprep.subr.bf16.mxu0 0
    %1083 = vmatpush1.bf16.msra.mxu0 0
    %1084 = vmatprep.subr.bf16.mxu0 0
    %1085 = vmatpush1.bf16.msra.mxu0 0
    %1086 = vmatprep.subr.bf16.mxu0 0
    %1087 = vmatpush1.bf16.msra.mxu0 0
    %1088 = vmatprep.mubr.bf16.mxu0 0
    %1089 = vmatmul.mubr.bf16.gmra.mrb[0].mxu0 %v1051
    %v1090 = vpop.f32.mrb[0].mxu0
    %v1091 = vadd.f32 0.0, %v1090
    %v1092 = vpop.f32.mrb[0].mxu0
    %v1093 = vpop.f32.mrb[0].mxu0
    %v1094 = vpop.f32.mrb[0].mxu0
    %1095 = vdwg.mxu0
    %1096 = vrot.lane.b32.xlu0 %v373, 112
    %v1097 = vpop.permute.xlu0 %1096
    %v1099 = vsel %vm386, %v1047, 0
    %v1102 = vsel %vm506, %v1097, 0
    %1104 = vmatprep.subr.bf16.mxu0 0
    %1105 = vmatpush1.bf16.msra.mxu0 %v1102
    %1106 = vmatprep.subr.bf16.mxu0 0
    %1107 = vmatpush1.bf16.msra.mxu0 0
    %1108 = vmatprep.subr.bf16.mxu0 0
    %1109 = vmatpush1.bf16.msra.mxu0 0
    %1110 = vmatprep.subr.bf16.mxu0 0
    %1111 = vmatpush1.bf16.msra.mxu0 0
    %1112 = vmatprep.subr.bf16.mxu0 0
    %1113 = vmatpush1.bf16.msra.mxu0 0
    %1114 = vmatprep.subr.bf16.mxu0 0
    %1115 = vmatpush1.bf16.msra.mxu0 0
    %1116 = vmatprep.subr.bf16.mxu0 0
    %1117 = vmatpush1.bf16.msra.mxu0 0
    %1118 = vmatprep.subr.bf16.mxu0 0
    %1119 = vmatpush1.bf16.msra.mxu0 0
    %1120 = vmatprep.subr.bf16.mxu0 0
    %1121 = vmatpush1.bf16.msra.mxu0 0
    %1122 = vmatprep.subr.bf16.mxu0 0
    %1123 = vmatpush1.bf16.msra.mxu0 0
    %1124 = vmatprep.subr.bf16.mxu0 0
    %1125 = vmatpush1.bf16.msra.mxu0 0
    %1126 = vmatprep.subr.bf16.mxu0 0
    %1127 = vmatpush1.bf16.msra.mxu0 0
    %1128 = vmatprep.subr.bf16.mxu0 0
    %1129 = vmatpush1.bf16.msra.mxu0 0
    %1130 = vmatprep.subr.bf16.mxu0 0
    %1131 = vmatpush1.bf16.msra.mxu0 0
    %1132 = vmatprep.subr.bf16.mxu0 0
    %1133 = vmatpush1.bf16.msra.mxu0 0
    %1134 = vmatprep.subr.bf16.mxu0 0
    %1135 = vmatpush1.bf16.msra.mxu0 0
    %1136 = vmatprep.mubr.bf16.mxu0 0
    %1137 = vmatmul.mubr.bf16.gmra.mrb[0].mxu0 %v1099
    %v1138 = vpop.f32.mrb[0].mxu0
    %v1139 = vadd.f32 0.0, %v1138
    %v1140 = vpop.f32.mrb[0].mxu0
    %v1141 = vpop.f32.mrb[0].mxu0
    %v1142 = vpop.f32.mrb[0].mxu0
    %1143 = vdwg.mxu0
    %v1144 = vld [vmem:[#allocation2 + $0x8] sm:$0xf]
    %v1145 = vpack.c.bf16 %v1139, %v1091
    %v1147 = vunpack.c.l.b16 %v1144
    %v1148 = vpack.c.b16 %v1147, %v1147
    %1149 = vrot.lane.b32.xlu0 %v1148, 32
    %v1150 = vpop.permute.xlu0 %1149
    %v1152 = vsel %vm386, %v1145, 0
    %v1155 = vsel %vm506, %v1150, 0
    %1157 = vmatprep.subr.bf16.mxu0 0
    %1158 = vmatpush1.bf16.msra.mxu0 %v1155
    %1159 = vmatprep.subr.bf16.mxu0 0
    %1160 = vmatpush1.bf16.msra.mxu0 0
    %1161 = vmatprep.subr.bf16.mxu0 0
    %1162 = vmatpush1.bf16.msra.mxu0 0
    %1163 = vmatprep.subr.bf16.mxu0 0
    %1164 = vmatpush1.bf16.msra.mxu0 0
    %1165 = vmatprep.subr.bf16.mxu0 0
    %1166 = vmatpush1.bf16.msra.mxu0 0
    %1167 = vmatprep.subr.bf16.mxu0 0
    %1168 = vmatpush1.bf16.msra.mxu0 0
    %1169 = vmatprep.subr.bf16.mxu0 0
    %1170 = vmatpush1.bf16.msra.mxu0 0
    %1171 = vmatprep.subr.bf16.mxu0 0
    %1172 = vmatpush1.bf16.msra.mxu0 0
    %1173 = vmatprep.subr.bf16.mxu0 0
    %1174 = vmatpush1.bf16.msra.mxu0 0
    %1175 = vmatprep.subr.bf16.mxu0 0
    %1176 = vmatpush1.bf16.msra.mxu0 0
    %1177 = vmatprep.subr.bf16.mxu0 0
    %1178 = vmatpush1.bf16.msra.mxu0 0
    %1179 = vmatprep.subr.bf16.mxu0 0
    %1180 = vmatpush1.bf16.msra.mxu0 0
    %1181 = vmatprep.subr.bf16.mxu0 0
    %1182 = vmatpush1.bf16.msra.mxu0 0
    %1183 = vmatprep.subr.bf16.mxu0 0
    %1184 = vmatpush1.bf16.msra.mxu0 0
    %1185 = vmatprep.subr.bf16.mxu0 0
    %1186 = vmatpush1.bf16.msra.mxu0 0
    %1187 = vmatprep.subr.bf16.mxu0 0
    %1188 = vmatpush1.bf16.msra.mxu0 0
    %1189 = vmatprep.mubr.bf16.mxu0 0
    %1190 = vmatmul.mubr.bf16.gmra.mrb[0].mxu0 %v1152
    %v1191 = vpop.f32.mrb[0].mxu0
    %v1192 = vadd.f32 0.0, %v1191
    %v1193 = vpop.f32.mrb[0].mxu0
    %v1194 = vpop.f32.mrb[0].mxu0
    %v1195 = vadd.f32 0.0, %v1194
    %v1196 = vpop.f32.mrb[0].mxu0
    %1197 = vdwg.mxu0
    %v1198 = vadd.f32 %v918, %v1192
    %v1199 = vadd.f32 %v921, %v1195
    %1200 = vrot.lane.b32.xlu0 %v362, 104
    %v1201 = vpop.permute.xlu0 %1200
    %1202 = vrot.lane.b32.xlu0 %v367, 104
    %v1203 = vpop.permute.xlu0 %1202
    %v1205 = vsel %vm386, %v1201, 0
    %v1208 = vsel %vm386, %v1203, 0
    %1210 = vmatprep.subr.bf16.mxu0 0
    %1211 = vmatpush1.bf16.xpose.msra.mxu0 %v1208
    %1212 = vmatprep.subr.bf16.mxu0 0
    %1213 = vmatpush1.bf16.xpose.msra.mxu0 0
    %1214 = vmatprep.subr.bf16.mxu0 0
    %1215 = vmatpush1.bf16.xpose.msra.mxu0 0
    %1216 = vmatprep.subr.bf16.mxu0 0
    %1217 = vmatpush1.bf16.xpose.msra.mxu0 0
    %1218 = vmatprep.subr.bf16.mxu0 0
    %1219 = vmatpush1.bf16.xpose.msra.mxu0 0
    %1220 = vmatprep.subr.bf16.mxu0 0
    %1221 = vmatpush1.bf16.xpose.msra.mxu0 0
    %1222 = vmatprep.subr.bf16.mxu0 0
    %1223 = vmatpush1.bf16.xpose.msra.mxu0 0
    %1224 = vmatprep.subr.bf16.mxu0 0
    %1225 = vmatpush1.bf16.xpose.msra.mxu0 0
    %1226 = vmatprep.subr.bf16.mxu0 0
    %1227 = vmatpush1.bf16.xpose.msra.mxu0 0
    %1228 = vmatprep.subr.bf16.mxu0 0
    %1229 = vmatpush1.bf16.xpose.msra.mxu0 0
    %1230 = vmatprep.subr.bf16.mxu0 0
    %1231 = vmatpush1.bf16.xpose.msra.mxu0 0
    %1232 = vmatprep.subr.bf16.mxu0 0
    %1233 = vmatpush1.bf16.xpose.msra.mxu0 0
    %1234 = vmatprep.subr.bf16.mxu0 0
    %1235 = vmatpush1.bf16.xpose.msra.mxu0 0
    %1236 = vmatprep.subr.bf16.mxu0 0
    %1237 = vmatpush1.bf16.xpose.msra.mxu0 0
    %1238 = vmatprep.subr.bf16.mxu0 0
    %1239 = vmatpush1.bf16.xpose.msra.mxu0 0
    %1240 = vmatprep.subr.bf16.mxu0 0
    %1241 = vmatpush1.bf16.xpose.msra.mxu0 0
    %1242 = vmatprep.mubr.bf16.mxu0 0
    %1243 = vmatmul.mubr.bf16.gmra.mrb[0].mxu0 %v1205
    %v1244 = vpop.f32.mrb[0].mxu0
    %v1245 = vadd.f32 %v379, %v1244
    %v1246 = vpop.f32.mrb[0].mxu0
    %v1247 = vpop.f32.mrb[0].mxu0
    %v1248 = vpop.f32.mrb[0].mxu0
    %1249 = vdwg.mxu0
    %1250 = vrot.lane.b32.xlu0 %v363, 104
    %v1251 = vpop.permute.xlu0 %1250
    %1252 = vrot.lane.b32.xlu0 %v368, 104
    %v1253 = vpop.permute.xlu0 %1252
    %v1255 = vsel %vm386, %v1251, 0
    %v1258 = vsel %vm386, %v1253, 0
    %1260 = vmatprep.subr.bf16.mxu0 0
    %1261 = vmatpush1.bf16.xpose.msra.mxu0 %v1258
    %1262 = vmatprep.subr.bf16.mxu0 0
    %1263 = vmatpush1.bf16.xpose.msra.mxu0 0
    %1264 = vmatprep.subr.bf16.mxu0 0
    %1265 = vmatpush1.bf16.xpose.msra.mxu0 0
    %1266 = vmatprep.subr.bf16.mxu0 0
    %1267 = vmatpush1.bf16.xpose.msra.mxu0 0
    %1268 = vmatprep.subr.bf16.mxu0 0
    %1269 = vmatpush1.bf16.xpose.msra.mxu0 0
    %1270 = vmatprep.subr.bf16.mxu0 0
    %1271 = vmatpush1.bf16.xpose.msra.mxu0 0
    %1272 = vmatprep.subr.bf16.mxu0 0
    %1273 = vmatpush1.bf16.xpose.msra.mxu0 0
    %1274 = vmatprep.subr.bf16.mxu0 0
    %1275 = vmatpush1.bf16.xpose.msra.mxu0 0
    %1276 = vmatprep.subr.bf16.mxu0 0
    %1277 = vmatpush1.bf16.xpose.msra.mxu0 0
    %1278 = vmatprep.subr.bf16.mxu0 0
    %1279 = vmatpush1.bf16.xpose.msra.mxu0 0
    %1280 = vmatprep.subr.bf16.mxu0 0
    %1281 = vmatpush1.bf16.xpose.msra.mxu0 0
    %1282 = vmatprep.subr.bf16.mxu0 0
    %1283 = vmatpush1.bf16.xpose.msra.mxu0 0
    %1284 = vmatprep.subr.bf16.mxu0 0
    %1285 = vmatpush1.bf16.xpose.msra.mxu0 0
    %1286 = vmatprep.subr.bf16.mxu0 0
    %1287 = vmatpush1.bf16.xpose.msra.mxu0 0
    %1288 = vmatprep.subr.bf16.mxu0 0
    %1289 = vmatpush1.bf16.xpose.msra.mxu0 0
    %1290 = vmatprep.subr.bf16.mxu0 0
    %1291 = vmatpush1.bf16.xpose.msra.mxu0 0
    %1292 = vmatprep.mubr.bf16.mxu0 0
    %1293 = vmatmul.mubr.bf16.gmra.mrb[0].mxu0 %v1255
    %v1294 = vpop.f32.mrb[0].mxu0
    %v1295 = vadd.f32 %v383, %v1294
    %v1296 = vpop.f32.mrb[0].mxu0
    %v1297 = vpop.f32.mrb[0].mxu0
    %v1298 = vpop.f32.mrb[0].mxu0
    %1299 = vdwg.mxu0
    %v1300 = vsel %vm386, %v1245, -inf
    %1301 = vmax.xlane.f32.xlu0 %v1300
    %v1302 = vpop.xlane.xlu0 %1301
    %v1303 = vsel %vm386, %v1295, -inf
    %1304 = vmax.xlane.f32.xlu0 %v1303
    %v1305 = vpop.xlane.xlu0 %1304
    %v1306 = vsub.f32 %v1245, %v1302
    %v1307 = vsub.f32 %v1295, %v1305
    %v1308 = vmul.f32 %v1306, 1.442695
    %v1309 = vpow.pop %v1308
    %v1310 = vmul.f32 %v1307, 1.442695
    %v1311 = vpow.pop %v1310
    %v1312 = vsel %vm386, %v1309, 0.0
    %1313 = vadd.xlane.f32.xlu0 %v1312
    %v1314 = vpop.xlane.xlu0 %1313
    %v1315 = vsel %vm386, %v1311, 0.0
    %1316 = vadd.xlane.f32.xlu0 %v1315
    %v1317 = vpop.xlane.xlu0 %1316
    %v1318 = vrcp.pop %v1314
    %v1319 = vrcp.pop %v1317
    %v1320 = vmul.f32 %v1309, %v1318
    %v1321 = vmul.f32 %v1311, %v1319
    %v1322 = vpack.c.bf16 %v1320, %v1320
    %v1323 = vpack.c.bf16 %v1321, %v1321
    %1324 = vrot.lane.b32.xlu0 %v372, 104
    %v1325 = vpop.permute.xlu0 %1324
    %v1327 = vsel %vm386, %v1322, 0
    %v1330 = vsel %vm506, %v1325, 0
    %1332 = vmatprep.subr.bf16.mxu0 0
    %1333 = vmatpush1.bf16.msra.mxu0 %v1330
    %1334 = vmatprep.subr.bf16.mxu0 0
    %1335 = vmatpush1.bf16.msra.mxu0 0
    %1336 = vmatprep.subr.bf16.mxu0 0
    %1337 = vmatpush1.bf16.msra.mxu0 0
    %1338 = vmatprep.subr.bf16.mxu0 0
    %1339 = vmatpush1.bf16.msra.mxu0 0
    %1340 = vmatprep.subr.bf16.mxu0 0
    %1341 = vmatpush1.bf16.msra.mxu0 0
    %1342 = vmatprep.subr.bf16.mxu0 0
    %1343 = vmatpush1.bf16.msra.mxu0 0
    %1344 = vmatprep.subr.bf16.mxu0 0
    %1345 = vmatpush1.bf16.msra.mxu0 0
    %1346 = vmatprep.subr.bf16.mxu0 0
    %1347 = vmatpush1.bf16.msra.mxu0 0
    %1348 = vmatprep.subr.bf16.mxu0 0
    %1349 = vmatpush1.bf16.msra.mxu0 0
    %1350 = vmatprep.subr.bf16.mxu0 0
    %1351 = vmatpush1.bf16.msra.mxu0 0
    %1352 = vmatprep.subr.bf16.mxu0 0
    %1353 = vmatpush1.bf16.msra.mxu0 0
    %1354 = vmatprep.subr.bf16.mxu0 0
    %1355 = vmatpush1.bf16.msra.mxu0 0
    %1356 = vmatprep.subr.bf16.mxu0 0
    %1357 = vmatpush1.bf16.msra.mxu0 0
    %1358 = vmatprep.subr.bf16.mxu0 0
    %1359 = vmatpush1.bf16.msra.mxu0 0
    %1360 = vmatprep.subr.bf16.mxu0 0
    %1361 = vmatpush1.bf16.msra.mxu0 0
    %1362 = vmatprep.subr.bf16.mxu0 0
    %1363 = vmatpush1.bf16.msra.mxu0 0
    %1364 = vmatprep.mubr.bf16.mxu0 0
    %1365 = vmatmul.mubr.bf16.gmra.mrb[0].mxu0 %v1327
    %v1366 = vpop.f32.mrb[0].mxu0
    %v1367 = vadd.f32 0.0, %v1366
    %v1368 = vpop.f32.mrb[0].mxu0
    %v1369 = vpop.f32.mrb[0].mxu0
    %v1370 = vpop.f32.mrb[0].mxu0
    %1371 = vdwg.mxu0
    %1372 = vrot.lane.b32.xlu0 %v373, 104
    %v1373 = vpop.permute.xlu0 %1372
    %v1375 = vsel %vm386, %v1323, 0
    %v1378 = vsel %vm506, %v1373, 0
    %1380 = vmatprep.subr.bf16.mxu0 0
    %1381 = vmatpush1.bf16.msra.mxu0 %v1378
    %1382 = vmatprep.subr.bf16.mxu0 0
    %1383 = vmatpush1.bf16.msra.mxu0 0
    %1384 = vmatprep.subr.bf16.mxu0 0
    %1385 = vmatpush1.bf16.msra.mxu0 0
    %1386 = vmatprep.subr.bf16.mxu0 0
    %1387 = vmatpush1.bf16.msra.mxu0 0
    %1388 = vmatprep.subr.bf16.mxu0 0
    %1389 = vmatpush1.bf16.msra.mxu0 0
    %1390 = vmatprep.subr.bf16.mxu0 0
    %1391 = vmatpush1.bf16.msra.mxu0 0
    %1392 = vmatprep.subr.bf16.mxu0 0
    %1393 = vmatpush1.bf16.msra.mxu0 0
    %1394 = vmatprep.subr.bf16.mxu0 0
    %1395 = vmatpush1.bf16.msra.mxu0 0
    %1396 = vmatprep.subr.bf16.mxu0 0
    %1397 = vmatpush1.bf16.msra.mxu0 0
    %1398 = vmatprep.subr.bf16.mxu0 0
    %1399 = vmatpush1.bf16.msra.mxu0 0
    %1400 = vmatprep.subr.bf16.mxu0 0
    %1401 = vmatpush1.bf16.msra.mxu0 0
    %1402 = vmatprep.subr.bf16.mxu0 0
    %1403 = vmatpush1.bf16.msra.mxu0 0
    %1404 = vmatprep.subr.bf16.mxu0 0
    %1405 = vmatpush1.bf16.msra.mxu0 0
    %1406 = vmatprep.subr.bf16.mxu0 0
    %1407 = vmatpush1.bf16.msra.mxu0 0
    %1408 = vmatprep.subr.bf16.mxu0 0
    %1409 = vmatpush1.bf16.msra.mxu0 0
    %1410 = vmatprep.subr.bf16.mxu0 0
    %1411 = vmatpush1.bf16.msra.mxu0 0
    %1412 = vmatprep.mubr.bf16.mxu0 0
    %1413 = vmatmul.mubr.bf16.gmra.mrb[0].mxu0 %v1375
    %v1414 = vpop.f32.mrb[0].mxu0
    %v1415 = vadd.f32 0.0, %v1414
    %v1416 = vpop.f32.mrb[0].mxu0
    %v1417 = vpop.f32.mrb[0].mxu0
    %v1418 = vpop.f32.mrb[0].mxu0
    %1419 = vdwg.mxu0
    %v1420 = vld [vmem:[#allocation2 + $0xc] sm:$0xf]
    %v1421 = vpack.c.bf16 %v1415, %v1367
    %v1423 = vunpack.c.l.b16 %v1420
    %v1424 = vpack.c.b16 %v1423, %v1423
    %1425 = vrot.lane.b32.xlu0 %v1424, 32
    %v1426 = vpop.permute.xlu0 %1425
    %v1428 = vsel %vm386, %v1421, 0
    %v1431 = vsel %vm506, %v1426, 0
    %1433 = vmatprep.subr.bf16.mxu0 0
    %1434 = vmatpush1.bf16.msra.mxu0 %v1431
    %1435 = vmatprep.subr.bf16.mxu0 0
    %1436 = vmatpush1.bf16.msra.mxu0 0
    %1437 = vmatprep.subr.bf16.mxu0 0
    %1438 = vmatpush1.bf16.msra.mxu0 0
    %1439 = vmatprep.subr.bf16.mxu0 0
    %1440 = vmatpush1.bf16.msra.mxu0 0
    %1441 = vmatprep.subr.bf16.mxu0 0
    %1442 = vmatpush1.bf16.msra.mxu0 0
    %1443 = vmatprep.subr.bf16.mxu0 0
    %1444 = vmatpush1.bf16.msra.mxu0 0
    %1445 = vmatprep.subr.bf16.mxu0 0
    %1446 = vmatpush1.bf16.msra.mxu0 0
    %1447 = vmatprep.subr.bf16.mxu0 0
    %1448 = vmatpush1.bf16.msra.mxu0 0
    %1449 = vmatprep.subr.bf16.mxu0 0
    %1450 = vmatpush1.bf16.msra.mxu0 0
    %1451 = vmatprep.subr.bf16.mxu0 0
    %1452 = vmatpush1.bf16.msra.mxu0 0
    %1453 = vmatprep.subr.bf16.mxu0 0
    %1454 = vmatpush1.bf16.msra.mxu0 0
    %1455 = vmatprep.subr.bf16.mxu0 0
    %1456 = vmatpush1.bf16.msra.mxu0 0
    %1457 = vmatprep.subr.bf16.mxu0 0
    %1458 = vmatpush1.bf16.msra.mxu0 0
    %1459 = vmatprep.subr.bf16.mxu0 0
    %1460 = vmatpush1.bf16.msra.mxu0 0
    %1461 = vmatprep.subr.bf16.mxu0 0
    %1462 = vmatpush1.bf16.msra.mxu0 0
    %1463 = vmatprep.subr.bf16.mxu0 0
    %1464 = vmatpush1.bf16.msra.mxu0 0
    %1465 = vmatprep.mubr.bf16.mxu0 0
    %1466 = vmatmul.mubr.bf16.gmra.mrb[0].mxu0 %v1428
    %v1467 = vpop.f32.mrb[0].mxu0
    %v1468 = vadd.f32 0.0, %v1467
    %v1469 = vpop.f32.mrb[0].mxu0
    %v1470 = vpop.f32.mrb[0].mxu0
    %v1471 = vadd.f32 0.0, %v1470
    %v1472 = vpop.f32.mrb[0].mxu0
    %1473 = vdwg.mxu0
    %v1474 = vadd.f32 %v1198, %v1468
    %v1475 = vadd.f32 %v1199, %v1471
    %v1476 = vlaneseq
    %v1477 = vshrl.u32 %v1476, 7
    %v1478 = vsub.s32 3, %v1477
    %v1479 = vrot.slane %v186, %v1478
    %v1480 = vadd.f32 %v1474, %v1479
    %v1481 = vadd.f32 %v1475, %v1479
    %v1482 = vld [vmem:[#allocation4 + $0x40] sm:$0x3]
    %v1483 = vadd.f32 %v1480, %v182
    %v1484 = vadd.f32 %v1481, %v183
    %v1485 = vsel %vm144, %v1483, 0.0
    %1486 = vadd.xlane.f32.xlu0 %v1485
    %v1487 = vpop.xlane.xlu0 %1486
    %v1488 = vsel %vm144, %v1484, 0.0
    %1489 = vadd.xlane.f32.xlu0 %v1488
    %v1490 = vpop.xlane.xlu0 %1489
    %v1491 = vmul.f32 %v1487, %v151
    %v1492 = vmul.f32 %v1490, %v151
    %v1493 = vsub.f32 %v1483, %v1491
    %v1494 = vsub.f32 %v1484, %v1492
    %v1495 = vmul.f32 %v1493, %v1493
    %v1496 = vmul.f32 %v1494, %v1494
    %v1497 = vsel %vm144, %v1495, 0.0
    %1498 = vadd.xlane.f32.xlu0 %v1497
    %v1499 = vpop.xlane.xlu0 %1498
    %v1500 = vsel %vm144, %v1496, 0.0
    %1501 = vadd.xlane.f32.xlu0 %v1500
    %v1502 = vpop.xlane.xlu0 %1501
    %v1503 = vmul.f32 %v1499, %v151
    %v1504 = vmul.f32 %v1502, %v151
    %v1505 = vadd.f32 %v1503, 1e-12
    %v1506 = vadd.f32 %v1504, 1e-12
    %v1507 = vrsqrt.pop %v1505
    %v1508 = vrsqrt.pop %v1506
    %v1509 = vmul.f32 %v1493, %v1507
    %v1510 = vmul.f32 %v1494, %v1508
    %v1511 = vlaneseq
    %v1512 = vshrl.u32 %v1511, 7
    %v1513 = vsub.s32 0, %v1512
    %v1514 = vrot.slane %v1482, %v1513
    %v1515 = vmul.f32 %v1509, %v1514
    %v1516 = vmul.f32 %v1510, %v1514
    %v1517 = vlaneseq
    %v1518 = vshrl.u32 %v1517, 7
    %v1519 = vsub.s32 1, %v1518
    %v1520 = vrot.slane %v1482, %v1519
    %v1521 = vadd.f32 %v1515, %v1520
    %v1522 = vadd.f32 %v1516, %v1520
    %v1523 = vpack.c.bf16 %v1522, %v1521
    %v1524 = vld [vmem:[#allocation2 + $0x10] sm:$0xf]
    %v1525 = vld [vmem:[#allocation2 + $0x14] sm:$0xf]
    %v1526 = vld [vmem:[#allocation2 + $0x18] sm:$0xf]
    %v1527 = vld [vmem:[#allocation2 + $0x1c] sm:$0xf]
    %v1528 = vld [vmem:[#allocation4 + $0x48] sm:$0x1]
    %v1529 = vlaneseq
    %v1530 = vshrl.u32 %v1529, 7
    %v1531 = vsub.s32 0, %v1530
    %v1532 = vrot.slane %v1528, %v1531
    %v1537 = vunpack.c.l.b16 %v1524
    %v1538 = vunpack.c.l.b16 %v1525
    %v1539 = vunpack.c.l.b16 %v1526
    %v1540 = vunpack.c.l.b16 %v1527
    %v1541 = vpack.c.b16 %v1538, %v1537
    %v1542 = vpack.c.b16 %v1540, %v1539
    %v1546 = vsel %vm144, %v1523, 0
    %1548 = vmatprep.subr.bf16.mxu0 0
    %1549 = vmatpush1.bf16.msra.mxu0 %v1541
    %1550 = vmatprep.subr.bf16.mxu0 0
    %1551 = vmatpush1.bf16.msra.mxu0 %v1542
    %1552 = vmatprep.subr.bf16.mxu0 0
    %1553 = vmatpush1.bf16.msra.mxu0 0
    %1554 = vmatprep.subr.bf16.mxu0 0
    %1555 = vmatpush1.bf16.msra.mxu0 0
    %1556 = vmatprep.subr.bf16.mxu0 0
    %1557 = vmatpush1.bf16.msra.mxu0 0
    %1558 = vmatprep.subr.bf16.mxu0 0
    %1559 = vmatpush1.bf16.msra.mxu0 0
    %1560 = vmatprep.subr.bf16.mxu0 0
    %1561 = vmatpush1.bf16.msra.mxu0 0
    %1562 = vmatprep.subr.bf16.mxu0 0
    %1563 = vmatpush1.bf16.msra.mxu0 0
    %1564 = vmatprep.subr.bf16.mxu0 0
    %1565 = vmatpush1.bf16.msra.mxu0 0
    %1566 = vmatprep.subr.bf16.mxu0 0
    %1567 = vmatpush1.bf16.msra.mxu0 0
    %1568 = vmatprep.subr.bf16.mxu0 0
    %1569 = vmatpush1.bf16.msra.mxu0 0
    %1570 = vmatprep.subr.bf16.mxu0 0
    %1571 = vmatpush1.bf16.msra.mxu0 0
    %1572 = vmatprep.subr.bf16.mxu0 0
    %1573 = vmatpush1.bf16.msra.mxu0 0
    %1574 = vmatprep.subr.bf16.mxu0 0
    %1575 = vmatpush1.bf16.msra.mxu0 0
    %1576 = vmatprep.subr.bf16.mxu0 0
    %1577 = vmatpush1.bf16.msra.mxu0 0
    %1578 = vmatprep.subr.bf16.mxu0 0
    %1579 = vmatpush1.bf16.msra.mxu0 0
    %1580 = vmatprep.mubr.bf16.mxu0 0
    %1581 = vmatmul.mubr.bf16.gmra.mrb[0].mxu0 %v1546
    %v1582 = vpop.f32.mrb[0].mxu0
    %v1583 = vadd.f32 %v1532, %v1582
    %v1584 = vpop.f32.mrb[0].mxu0
    %v1585 = vpop.f32.mrb[0].mxu0
    %v1586 = vadd.f32 %v1532, %v1585
    %v1587 = vpop.f32.mrb[0].mxu0
    %1588 = vdwg.mxu0
    %v1589 = vmul.f32 %v1583, 0.5
    %v1590 = vmul.f32 %v1586, 0.5
    %v1591 = vmul.f32 %v1583, 0.044715
    %v1592 = vmul.f32 %v1586, 0.044715
    %v1593 = vmul.f32 %v1591, %v1583
    %v1594 = vmul.f32 %v1592, %v1586
    %v1595 = vmul.f32 %v1593, %v1583
    %v1596 = vmul.f32 %v1594, %v1586
    %v1597 = vadd.f32 %v1583, %v1595
    %v1598 = vadd.f32 %v1586, %v1596
    %v1599 = vmul.f32 %v1597, 0.7978846
    %v1600 = vmul.f32 %v1598, 0.7978846
    %v1601 = vtanh.pop %v1599
    %v1602 = vtanh.pop %v1600
    %v1603 = vadd.f32 %v1601, 1.0
    %v1604 = vadd.f32 %v1602, 1.0
    %v1605 = vmul.f32 %v1589, %v1603
    %v1606 = vmul.f32 %v1590, %v1604
    %v1607 = vpack.c.bf16 %v1606, %v1605
    %v1608 = vld [vmem:[#allocation2 + $0x20] sm:$0xf]
    %v1609 = vld [vmem:[#allocation2 + $0x24] sm:$0xf]
    %v1610 = vld [vmem:[#allocation2 + $0x28] sm:$0xf]
    %v1611 = vld [vmem:[#allocation2 + $0x2c] sm:$0xf]
    %v1612 = vld [vmem:[#allocation4 + $0x50] sm:$0x1]
    %v1613 = vlaneseq
    %v1614 = vshrl.u32 %v1613, 7
    %v1615 = vsub.s32 0, %v1614
    %v1616 = vrot.slane %v1612, %v1615
    %v1621 = vunpack.c.l.b16 %v1608
    %v1622 = vunpack.c.l.b16 %v1609
    %v1623 = vunpack.c.l.b16 %v1610
    %v1624 = vunpack.c.l.b16 %v1611
    %v1625 = vpack.c.b16 %v1622, %v1621
    %v1626 = vpack.c.b16 %v1624, %v1623
    %1629 = vmatprep.subr.bf16.mxu0 0
    %1630 = vmatpush1.bf16.xpose.msra.mxu0 %v1625
    %1631 = vmatprep.subr.bf16.mxu0 0
    %1632 = vmatpush1.bf16.xpose.msra.mxu0 %v1626
    %1633 = vmatprep.subr.bf16.mxu0 0
    %1634 = vmatpush1.bf16.xpose.msra.mxu0 0
    %1635 = vmatprep.subr.bf16.mxu0 0
    %1636 = vmatpush1.bf16.xpose.msra.mxu0 0
    %1637 = vmatprep.subr.bf16.mxu0 0
    %1638 = vmatpush1.bf16.xpose.msra.mxu0 0
    %1639 = vmatprep.subr.bf16.mxu0 0
    %1640 = vmatpush1.bf16.xpose.msra.mxu0 0
    %1641 = vmatprep.subr.bf16.mxu0 0
    %1642 = vmatpush1.bf16.xpose.msra.mxu0 0
    %1643 = vmatprep.subr.bf16.mxu0 0
    %1644 = vmatpush1.bf16.xpose.msra.mxu0 0
    %1645 = vmatprep.subr.bf16.mxu0 0
    %1646 = vmatpush1.bf16.xpose.msra.mxu0 0
    %1647 = vmatprep.subr.bf16.mxu0 0
    %1648 = vmatpush1.bf16.xpose.msra.mxu0 0
    %1649 = vmatprep.subr.bf16.mxu0 0
    %1650 = vmatpush1.bf16.xpose.msra.mxu0 0
    %1651 = vmatprep.subr.bf16.mxu0 0
    %1652 = vmatpush1.bf16.xpose.msra.mxu0 0
    %1653 = vmatprep.subr.bf16.mxu0 0
    %1654 = vmatpush1.bf16.xpose.msra.mxu0 0
    %1655 = vmatprep.subr.bf16.mxu0 0
    %1656 = vmatpush1.bf16.xpose.msra.mxu0 0
    %1657 = vmatprep.subr.bf16.mxu0 0
    %1658 = vmatpush1.bf16.xpose.msra.mxu0 0
    %1659 = vmatprep.subr.bf16.mxu0 0
    %1660 = vmatpush1.bf16.xpose.msra.mxu0 0
    %1661 = vmatprep.mubr.bf16.mxu0 0
    %1662 = vmatmul.mubr.bf16.gmra.mrb[0].mxu0 %v1607
    %v1663 = vpop.f32.mrb[0].mxu0
    %v1664 = vadd.f32 %v1616, %v1663
    %v1665 = vpop.f32.mrb[0].mxu0
    %v1666 = vpop.f32.mrb[0].mxu0
    %v1667 = vadd.f32 %v1616, %v1666
    %v1668 = vpop.f32.mrb[0].mxu0
    %1669 = vdwg.mxu0
    %v1670 = vld [vmem:[#allocation4 + $0x58] sm:$0x3]
    %v1671 = vadd.f32 %v1664, %v1521
    %v1672 = vadd.f32 %v1667, %v1522
    %v1673 = vsel %vm144, %v1671, 0.0
    %1674 = vadd.xlane.f32.xlu0 %v1673
    %v1675 = vpop.xlane.xlu0 %1674
    %v1676 = vsel %vm144, %v1672, 0.0
    %1677 = vadd.xlane.f32.xlu0 %v1676
    %v1678 = vpop.xlane.xlu0 %1677
    %v1679 = vmul.f32 %v1675, %v151
    %v1680 = vmul.f32 %v1678, %v151
    %v1681 = vsub.f32 %v1671, %v1679
    %v1682 = vsub.f32 %v1672, %v1680
    %v1683 = vmul.f32 %v1681, %v1681
    %v1684 = vmul.f32 %v1682, %v1682
    %v1685 = vsel %vm144, %v1683, 0.0
    %1686 = vadd.xlane.f32.xlu0 %v1685
    %v1687 = vpop.xlane.xlu0 %1686
    %v1688 = vsel %vm144, %v1684, 0.0
    %1689 = vadd.xlane.f32.xlu0 %v1688
    %v1690 = vpop.xlane.xlu0 %1689
    %v1691 = vmul.f32 %v1687, %v151
    %v1692 = vmul.f32 %v1690, %v151
    %v1693 = vadd.f32 %v1691, 1e-12
    %v1694 = vadd.f32 %v1692, 1e-12
    %v1695 = vrsqrt.pop %v1693
    %v1696 = vrsqrt.pop %v1694
    %v1697 = vmul.f32 %v1681, %v1695
    %v1698 = vmul.f32 %v1682, %v1696
    %v1699 = vlaneseq
    %v1700 = vshrl.u32 %v1699, 7
    %v1701 = vsub.s32 0, %v1700
    %v1702 = vrot.slane %v1670, %v1701
    %v1703 = vmul.f32 %v1697, %v1702
    %v1704 = vmul.f32 %v1698, %v1702
    %v1705 = vlaneseq
    %v1706 = vshrl.u32 %v1705, 7
    %v1707 = vsub.s32 1, %v1706
    %v1708 = vrot.slane %v1670, %v1707
    %v1709 = vadd.f32 %v1703, %v1708
    %v1710 = vadd.f32 %v1704, %v1708
    %v1711 = vld [vmem:[#allocation4 + $0x60] sm:$0xf]
    %v1712 = vpack.c.bf16 %v1710, %v1709
    %v1713 = vld [vmem:[#allocation2 + $0x30] sm:$0xf]
    %v1714 = vld [vmem:[#allocation2 + $0x34] sm:$0xf]
    %v1715 = vld [vmem:[#allocation2 + $0x38] sm:$0xf]
    %v1716 = vld [vmem:[#allocation2 + $0x3c] sm:$0xf]
    %v1717 = vlaneseq
    %v1718 = vshrl.u32 %v1717, 7
    %v1719 = vsub.s32 0, %v1718
    %v1720 = vrot.slane %v1711, %v1719
    %v1725 = vunpack.c.l.b16 %v1713
    %v1726 = vunpack.c.l.b16 %v1714
    %v1727 = vunpack.c.l.b16 %v1715
    %v1728 = vunpack.c.l.b16 %v1716
    %v1729 = vpack.c.b16 %v1726, %v1725
    %v1730 = vpack.c.b16 %v1728, %v1727
    %v1734 = vsel %vm144, %v1712, 0
    %1736 = vmatprep.subr.bf16.mxu0 0
    %1737 = vmatpush1.bf16.msra.mxu0 %v1729
    %1738 = vmatprep.subr.bf16.mxu0 0
    %1739 = vmatpush1.bf16.msra.mxu0 %v1730
    %1740 = vmatprep.subr.bf16.mxu0 0
    %1741 = vmatpush1.bf16.msra.mxu0 0
    %1742 = vmatprep.subr.bf16.mxu0 0
    %1743 = vmatpush1.bf16.msra.mxu0 0
    %1744 = vmatprep.subr.bf16.mxu0 0
    %1745 = vmatpush1.bf16.msra.mxu0 0
    %1746 = vmatprep.subr.bf16.mxu0 0
    %1747 = vmatpush1.bf16.msra.mxu0 0
    %1748 = vmatprep.subr.bf16.mxu0 0
    %1749 = vmatpush1.bf16.msra.mxu0 0
    %1750 = vmatprep.subr.bf16.mxu0 0
    %1751 = vmatpush1.bf16.msra.mxu0 0
    %1752 = vmatprep.subr.bf16.mxu0 0
    %1753 = vmatpush1.bf16.msra.mxu0 0
    %1754 = vmatprep.subr.bf16.mxu0 0
    %1755 = vmatpush1.bf16.msra.mxu0 0
    %1756 = vmatprep.subr.bf16.mxu0 0
    %1757 = vmatpush1.bf16.msra.mxu0 0
    %1758 = vmatprep.subr.bf16.mxu0 0
    %1759 = vmatpush1.bf16.msra.mxu0 0
    %1760 = vmatprep.subr.bf16.mxu0 0
    %1761 = vmatpush1.bf16.msra.mxu0 0
    %1762 = vmatprep.subr.bf16.mxu0 0
    %1763 = vmatpush1.bf16.msra.mxu0 0
    %1764 = vmatprep.subr.bf16.mxu0 0
    %1765 = vmatpush1.bf16.msra.mxu0 0
    %1766 = vmatprep.subr.bf16.mxu0 0
    %1767 = vmatpush1.bf16.msra.mxu0 0
    %1768 = vmatprep.mubr.bf16.mxu0 0
    %1769 = vmatmul.mubr.bf16.gmra.mrb[0].mxu0 %v1734
    %v1770 = vpop.f32.mrb[0].mxu0
    %v1771 = vadd.f32 %v1720, %v1770
    %v1772 = vpop.f32.mrb[0].mxu0
    %v1773 = vpop.f32.mrb[0].mxu0
    %v1774 = vadd.f32 %v1720, %v1773
    %v1775 = vpop.f32.mrb[0].mxu0
    %1776 = vdwg.mxu0
    %v1777 = vlaneseq
    %v1778 = vshrl.u32 %v1777, 7
    %v1779 = vsub.s32 1, %v1778
    %v1780 = vrot.slane %v1711, %v1779
    %1781 = vrot.lane.b32.xlu0 %v1729, 96
    %v1782 = vpop.permute.xlu0 %1781
    %1783 = vrot.lane.b32.xlu0 %v1730, 96
    %v1784 = vpop.permute.xlu0 %1783
    %1787 = vmatprep.subr.bf16.mxu0 0
    %1788 = vmatpush1.bf16.msra.mxu0 %v1782
    %1789 = vmatprep.subr.bf16.mxu0 0
    %1790 = vmatpush1.bf16.msra.mxu0 %v1784
    %1791 = vmatprep.subr.bf16.mxu0 0
    %1792 = vmatpush1.bf16.msra.mxu0 0
    %1793 = vmatprep.subr.bf16.mxu0 0
    %1794 = vmatpush1.bf16.msra.mxu0 0
    %1795 = vmatprep.subr.bf16.mxu0 0
    %1796 = vmatpush1.bf16.msra.mxu0 0
    %1797 = vmatprep.subr.bf16.mxu0 0
    %1798 = vmatpush1.bf16.msra.mxu0 0
    %1799 = vmatprep.subr.bf16.mxu0 0
    %1800 = vmatpush1.bf16.msra.mxu0 0
    %1801 = vmatprep.subr.bf16.mxu0 0
    %1802 = vmatpush1.bf16.msra.mxu0 0
    %1803 = vmatprep.subr.bf16.mxu0 0
    %1804 = vmatpush1.bf16.msra.mxu0 0
    %1805 = vmatprep.subr.bf16.mxu0 0
    %1806 = vmatpush1.bf16.msra.mxu0 0
    %1807 = vmatprep.subr.bf16.mxu0 0
    %1808 = vmatpush1.bf16.msra.mxu0 0
    %1809 = vmatprep.subr.bf16.mxu0 0
    %1810 = vmatpush1.bf16.msra.mxu0 0
    %1811 = vmatprep.subr.bf16.mxu0 0
    %1812 = vmatpush1.bf16.msra.mxu0 0
    %1813 = vmatprep.subr.bf16.mxu0 0
    %1814 = vmatpush1.bf16.msra.mxu0 0
    %1815 = vmatprep.subr.bf16.mxu0 0
    %1816 = vmatpush1.bf16.msra.mxu0 0
    %1817 = vmatprep.subr.bf16.mxu0 0
    %1818 = vmatpush1.bf16.msra.mxu0 0
    %1819 = vmatprep.mubr.bf16.mxu0 0
    %1820 = vmatmul.mubr.bf16.gmra.mrb[0].mxu0 %v1734
    %v1821 = vpop.f32.mrb[0].mxu0
    %v1822 = vadd.f32 %v1780, %v1821
    %v1823 = vpop.f32.mrb[0].mxu0
    %v1824 = vpop.f32.mrb[0].mxu0
    %v1825 = vadd.f32 %v1780, %v1824
    %v1826 = vpop.f32.mrb[0].mxu0
    %1827 = vdwg.mxu0
    %v1828 = vlaneseq
    %v1829 = vshrl.u32 %v1828, 7
    %v1830 = vsub.s32 2, %v1829
    %v1831 = vrot.slane %v1711, %v1830
    %1832 = vrot.lane.b32.xlu0 %v1729, 64
    %v1833 = vpop.permute.xlu0 %1832
    %1834 = vrot.lane.b32.xlu0 %v1730, 64
    %v1835 = vpop.permute.xlu0 %1834
    %1838 = vmatprep.subr.bf16.mxu0 0
    %1839 = vmatpush1.bf16.msra.mxu0 %v1833
    %1840 = vmatprep.subr.bf16.mxu0 0
    %1841 = vmatpush1.bf16.msra.mxu0 %v1835
    %1842 = vmatprep.subr.bf16.mxu0 0
    %1843 = vmatpush1.bf16.msra.mxu0 0
    %1844 = vmatprep.subr.bf16.mxu0 0
    %1845 = vmatpush1.bf16.msra.mxu0 0
    %1846 = vmatprep.subr.bf16.mxu0 0
    %1847 = vmatpush1.bf16.msra.mxu0 0
    %1848 = vmatprep.subr.bf16.mxu0 0
    %1849 = vmatpush1.bf16.msra.mxu0 0
    %1850 = vmatprep.subr.bf16.mxu0 0
    %1851 = vmatpush1.bf16.msra.mxu0 0
    %1852 = vmatprep.subr.bf16.mxu0 0
    %1853 = vmatpush1.bf16.msra.mxu0 0
    %1854 = vmatprep.subr.bf16.mxu0 0
    %1855 = vmatpush1.bf16.msra.mxu0 0
    %1856 = vmatprep.subr.bf16.mxu0 0
    %1857 = vmatpush1.bf16.msra.mxu0 0
    %1858 = vmatprep.subr.bf16.mxu0 0
    %1859 = vmatpush1.bf16.msra.mxu0 0
    %1860 = vmatprep.subr.bf16.mxu0 0
    %1861 = vmatpush1.bf16.msra.mxu0 0
    %1862 = vmatprep.subr.bf16.mxu0 0
    %1863 = vmatpush1.bf16.msra.mxu0 0
    %1864 = vmatprep.subr.bf16.mxu0 0
    %1865 = vmatpush1.bf16.msra.mxu0 0
    %1866 = vmatprep.subr.bf16.mxu0 0
    %1867 = vmatpush1.bf16.msra.mxu0 0
    %1868 = vmatprep.subr.bf16.mxu0 0
    %1869 = vmatpush1.bf16.msra.mxu0 0
    %1870 = vmatprep.mubr.bf16.mxu0 0
    %1871 = vmatmul.mubr.bf16.gmra.mrb[0].mxu0 %v1734
    %v1872 = vpop.f32.mrb[0].mxu0
    %v1873 = vadd.f32 %v1831, %v1872
    %v1874 = vpop.f32.mrb[0].mxu0
    %v1875 = vpop.f32.mrb[0].mxu0
    %v1876 = vadd.f32 %v1831, %v1875
    %v1877 = vpop.f32.mrb[0].mxu0
    %1878 = vdwg.mxu0
    %v1879 = vmul.f32 %v1771, 0.35355338
    %v1880 = vmul.f32 %v1774, 0.35355338
    %v1881 = vpack.c.bf16 %v1880, %v1879
    %v1882 = vpack.c.bf16 %v1825, %v1822
    %v1883 = vpack.c.bf16 %v1876, %v1873
    %v1885 = vunpack.c.l.b16 %v1881
    %v1886 = vunpack.c.h.b16 %v1881
    %v1887 = vpack.c.b16 %v1885, %v1885
    %v1888 = vpack.c.b16 %v1886, %v1886
    %v1890 = vunpack.c.l.b16 %v1882
    %v1891 = vunpack.c.h.b16 %v1882
    %v1892 = vpack.c.b16 %v1890, %v1890
    %v1893 = vpack.c.b16 %v1891, %v1891
    %v1895 = vunpack.c.l.b16 %v1883
    %v1896 = vunpack.c.h.b16 %v1883
    %v1897 = vpack.c.b16 %v1895, %v1895
    %v1898 = vpack.c.b16 %v1896, %v1896
    %v1900 = vsel %vm386, %v1887, 0
    %v1903 = vsel %vm386, %v1892, 0
    %1905 = vmatprep.subr.bf16.mxu0 0
    %1906 = vmatpush1.bf16.xpose.msra.mxu0 %v1903
    %1907 = vmatprep.subr.bf16.mxu0 0
    %1908 = vmatpush1.bf16.xpose.msra.mxu0 0
    %1909 = vmatprep.subr.bf16.mxu0 0
    %1910 = vmatpush1.bf16.xpose.msra.mxu0 0
    %1911 = vmatprep.subr.bf16.mxu0 0
    %1912 = vmatpush1.bf16.xpose.msra.mxu0 0
    %1913 = vmatprep.subr.bf16.mxu0 0
    %1914 = vmatpush1.bf16.xpose.msra.mxu0 0
    %1915 = vmatprep.subr.bf16.mxu0 0
    %1916 = vmatpush1.bf16.xpose.msra.mxu0 0
    %1917 = vmatprep.subr.bf16.mxu0 0
    %1918 = vmatpush1.bf16.xpose.msra.mxu0 0
    %1919 = vmatprep.subr.bf16.mxu0 0
    %1920 = vmatpush1.bf16.xpose.msra.mxu0 0
    %1921 = vmatprep.subr.bf16.mxu0 0
    %1922 = vmatpush1.bf16.xpose.msra.mxu0 0
    %1923 = vmatprep.subr.bf16.mxu0 0
    %1924 = vmatpush1.bf16.xpose.msra.mxu0 0
    %1925 = vmatprep.subr.bf16.mxu0 0
    %1926 = vmatpush1.bf16.xpose.msra.mxu0 0
    %1927 = vmatprep.subr.bf16.mxu0 0
    %1928 = vmatpush1.bf16.xpose.msra.mxu0 0
    %1929 = vmatprep.subr.bf16.mxu0 0
    %1930 = vmatpush1.bf16.xpose.msra.mxu0 0
    %1931 = vmatprep.subr.bf16.mxu0 0
    %1932 = vmatpush1.bf16.xpose.msra.mxu0 0
    %1933 = vmatprep.subr.bf16.mxu0 0
    %1934 = vmatpush1.bf16.xpose.msra.mxu0 0
    %1935 = vmatprep.subr.bf16.mxu0 0
    %1936 = vmatpush1.bf16.xpose.msra.mxu0 0
    %1937 = vmatprep.mubr.bf16.mxu0 0
    %1938 = vmatmul.mubr.bf16.gmra.mrb[0].mxu0 %v1900
    %v1939 = vpop.f32.mrb[0].mxu0
    %v1940 = vadd.f32 %v379, %v1939
    %v1941 = vpop.f32.mrb[0].mxu0
    %v1942 = vpop.f32.mrb[0].mxu0
    %v1943 = vpop.f32.mrb[0].mxu0
    %1944 = vdwg.mxu0
    %v1946 = vsel %vm386, %v1888, 0
    %v1949 = vsel %vm386, %v1893, 0
    %1951 = vmatprep.subr.bf16.mxu0 0
    %1952 = vmatpush1.bf16.xpose.msra.mxu0 %v1949
    %1953 = vmatprep.subr.bf16.mxu0 0
    %1954 = vmatpush1.bf16.xpose.msra.mxu0 0
    %1955 = vmatprep.subr.bf16.mxu0 0
    %1956 = vmatpush1.bf16.xpose.msra.mxu0 0
    %1957 = vmatprep.subr.bf16.mxu0 0
    %1958 = vmatpush1.bf16.xpose.msra.mxu0 0
    %1959 = vmatprep.subr.bf16.mxu0 0
    %1960 = vmatpush1.bf16.xpose.msra.mxu0 0
    %1961 = vmatprep.subr.bf16.mxu0 0
    %1962 = vmatpush1.bf16.xpose.msra.mxu0 0
    %1963 = vmatprep.subr.bf16.mxu0 0
    %1964 = vmatpush1.bf16.xpose.msra.mxu0 0
    %1965 = vmatprep.subr.bf16.mxu0 0
    %1966 = vmatpush1.bf16.xpose.msra.mxu0 0
    %1967 = vmatprep.subr.bf16.mxu0 0
    %1968 = vmatpush1.bf16.xpose.msra.mxu0 0
    %1969 = vmatprep.subr.bf16.mxu0 0
    %1970 = vmatpush1.bf16.xpose.msra.mxu0 0
    %1971 = vmatprep.subr.bf16.mxu0 0
    %1972 = vmatpush1.bf16.xpose.msra.mxu0 0
    %1973 = vmatprep.subr.bf16.mxu0 0
    %1974 = vmatpush1.bf16.xpose.msra.mxu0 0
    %1975 = vmatprep.subr.bf16.mxu0 0
    %1976 = vmatpush1.bf16.xpose.msra.mxu0 0
    %1977 = vmatprep.subr.bf16.mxu0 0
    %1978 = vmatpush1.bf16.xpose.msra.mxu0 0
    %1979 = vmatprep.subr.bf16.mxu0 0
    %1980 = vmatpush1.bf16.xpose.msra.mxu0 0
    %1981 = vmatprep.subr.bf16.mxu0 0
    %1982 = vmatpush1.bf16.xpose.msra.mxu0 0
    %1983 = vmatprep.mubr.bf16.mxu0 0
    %1984 = vmatmul.mubr.bf16.gmra.mrb[0].mxu0 %v1946
    %v1985 = vpop.f32.mrb[0].mxu0
    %v1986 = vadd.f32 %v383, %v1985
    %v1987 = vpop.f32.mrb[0].mxu0
    %v1988 = vpop.f32.mrb[0].mxu0
    %v1989 = vpop.f32.mrb[0].mxu0
    %1990 = vdwg.mxu0
    %v1991 = vsel %vm386, %v1940, -inf
    %1992 = vmax.xlane.f32.xlu0 %v1991
    %v1993 = vpop.xlane.xlu0 %1992
    %v1994 = vsel %vm386, %v1986, -inf
    %1995 = vmax.xlane.f32.xlu0 %v1994
    %v1996 = vpop.xlane.xlu0 %1995
    %v1997 = vsub.f32 %v1940, %v1993
    %v1998 = vsub.f32 %v1986, %v1996
    %v1999 = vmul.f32 %v1997, 1.442695
    %v2000 = vpow.pop %v1999
    %v2001 = vmul.f32 %v1998, 1.442695
    %v2002 = vpow.pop %v2001
    %v2003 = vsel %vm386, %v2000, 0.0
    %2004 = vadd.xlane.f32.xlu0 %v2003
    %v2005 = vpop.xlane.xlu0 %2004
    %v2006 = vsel %vm386, %v2002, 0.0
    %2007 = vadd.xlane.f32.xlu0 %v2006
    %v2008 = vpop.xlane.xlu0 %2007
    %v2009 = vrcp.pop %v2005
    %v2010 = vrcp.pop %v2008
    %v2011 = vmul.f32 %v2000, %v2009
    %v2012 = vmul.f32 %v2002, %v2010
    %v2013 = vpack.c.bf16 %v2011, %v2011
    %v2014 = vpack.c.bf16 %v2012, %v2012
    %v2016 = vsel %vm386, %v2013, 0
    %v2019 = vsel %vm506, %v1897, 0
    %2021 = vmatprep.subr.bf16.mxu0 0
    %2022 = vmatpush1.bf16.msra.mxu0 %v2019
    %2023 = vmatprep.subr.bf16.mxu0 0
    %2024 = vmatpush1.bf16.msra.mxu0 0
    %2025 = vmatprep.subr.bf16.mxu0 0
    %2026 = vmatpush1.bf16.msra.mxu0 0
    %2027 = vmatprep.subr.bf16.mxu0 0
    %2028 = vmatpush1.bf16.msra.mxu0 0
    %2029 = vmatprep.subr.bf16.mxu0 0
    %2030 = vmatpush1.bf16.msra.mxu0 0
    %2031 = vmatprep.subr.bf16.mxu0 0
    %2032 = vmatpush1.bf16.msra.mxu0 0
    %2033 = vmatprep.subr.bf16.mxu0 0
    %2034 = vmatpush1.bf16.msra.mxu0 0
    %2035 = vmatprep.subr.bf16.mxu0 0
    %2036 = vmatpush1.bf16.msra.mxu0 0
    %2037 = vmatprep.subr.bf16.mxu0 0
    %2038 = vmatpush1.bf16.msra.mxu0 0
    %2039 = vmatprep.subr.bf16.mxu0 0
    %2040 = vmatpush1.bf16.msra.mxu0 0
    %2041 = vmatprep.subr.bf16.mxu0 0
    %2042 = vmatpush1.bf16.msra.mxu0 0
    %2043 = vmatprep.subr.bf16.mxu0 0
    %2044 = vmatpush1.bf16.msra.mxu0 0
    %2045 = vmatprep.subr.bf16.mxu0 0
    %2046 = vmatpush1.bf16.msra.mxu0 0
    %2047 = vmatprep.subr.bf16.mxu0 0
    %2048 = vmatpush1.bf16.msra.mxu0 0
    %2049 = vmatprep.subr.bf16.mxu0 0
    %2050 = vmatpush1.bf16.msra.mxu0 0
    %2051 = vmatprep.subr.bf16.mxu0 0
    %2052 = vmatpush1.bf16.msra.mxu0 0
    %2053 = vmatprep.mubr.bf16.mxu0 0
    %2054 = vmatmul.mubr.bf16.gmra.mrb[0].mxu0 %v2016
    %v2055 = vpop.f32.mrb[0].mxu0
    %v2056 = vadd.f32 0.0, %v2055
    %v2057 = vpop.f32.mrb[0].mxu0
    %v2058 = vpop.f32.mrb[0].mxu0
    %v2059 = vpop.f32.mrb[0].mxu0
    %2060 = vdwg.mxu0
    %v2062 = vsel %vm386, %v2014, 0
    %v2065 = vsel %vm506, %v1898, 0
    %2067 = vmatprep.subr.bf16.mxu0 0
    %2068 = vmatpush1.bf16.msra.mxu0 %v2065
    %2069 = vmatprep.subr.bf16.mxu0 0
    %2070 = vmatpush1.bf16.msra.mxu0 0
    %2071 = vmatprep.subr.bf16.mxu0 0
    %2072 = vmatpush1.bf16.msra.mxu0 0
    %2073 = vmatprep.subr.bf16.mxu0 0
    %2074 = vmatpush1.bf16.msra.mxu0 0
    %2075 = vmatprep.subr.bf16.mxu0 0
    %2076 = vmatpush1.bf16.msra.mxu0 0
    %2077 = vmatprep.subr.bf16.mxu0 0
    %2078 = vmatpush1.bf16.msra.mxu0 0
    %2079 = vmatprep.subr.bf16.mxu0 0
    %2080 = vmatpush1.bf16.msra.mxu0 0
    %2081 = vmatprep.subr.bf16.mxu0 0
    %2082 = vmatpush1.bf16.msra.mxu0 0
    %2083 = vmatprep.subr.bf16.mxu0 0
    %2084 = vmatpush1.bf16.msra.mxu0 0
    %2085 = vmatprep.subr.bf16.mxu0 0
    %2086 = vmatpush1.bf16.msra.mxu0 0
    %2087 = vmatprep.subr.bf16.mxu0 0
    %2088 = vmatpush1.bf16.msra.mxu0 0
    %2089 = vmatprep.subr.bf16.mxu0 0
    %2090 = vmatpush1.bf16.msra.mxu0 0
    %2091 = vmatprep.subr.bf16.mxu0 0
    %2092 = vmatpush1.bf16.msra.mxu0 0
    %2093 = vmatprep.subr.bf16.mxu0 0
    %2094 = vmatpush1.bf16.msra.mxu0 0
    %2095 = vmatprep.subr.bf16.mxu0 0
    %2096 = vmatpush1.bf16.msra.mxu0 0
    %2097 = vmatprep.subr.bf16.mxu0 0
    %2098 = vmatpush1.bf16.msra.mxu0 0
    %2099 = vmatprep.mubr.bf16.mxu0 0
    %2100 = vmatmul.mubr.bf16.gmra.mrb[0].mxu0 %v2062
    %v2101 = vpop.f32.mrb[0].mxu0
    %v2102 = vadd.f32 0.0, %v2101
    %v2103 = vpop.f32.mrb[0].mxu0
    %v2104 = vpop.f32.mrb[0].mxu0
    %v2105 = vpop.f32.mrb[0].mxu0
    %2106 = vdwg.mxu0
    %v2107 = vld [vmem:[#allocation2 + $0x30] sm:$0xf]
    %v2108 = vpack.c.bf16 %v2102, %v2056
    %2109 = vrot.lane.b32.xlu0 %v1887, 120
    %v2110 = vpop.permute.xlu0 %2109
    %2111 = vrot.lane.b32.xlu0 %v1892, 120
    %v2112 = vpop.permute.xlu0 %2111
    %v2114 = vsel %vm386, %v2110, 0
    %v2117 = vsel %vm386, %v2112, 0
    %2119 = vmatprep.subr.bf16.mxu0 0
    %2120 = vmatpush1.bf16.xpose.msra.mxu0 %v2117
    %2121 = vmatprep.subr.bf16.mxu0 0
    %2122 = vmatpush1.bf16.xpose.msra.mxu0 0
    %2123 = vmatprep.subr.bf16.mxu0 0
    %2124 = vmatpush1.bf16.xpose.msra.mxu0 0
    %2125 = vmatprep.subr.bf16.mxu0 0
    %2126 = vmatpush1.bf16.xpose.msra.mxu0 0
    %2127 = vmatprep.subr.bf16.mxu0 0
    %2128 = vmatpush1.bf16.xpose.msra.mxu0 0
    %2129 = vmatprep.subr.bf16.mxu0 0
    %2130 = vmatpush1.bf16.xpose.msra.mxu0 0
    %2131 = vmatprep.subr.bf16.mxu0 0
    %2132 = vmatpush1.bf16.xpose.msra.mxu0 0
    %2133 = vmatprep.subr.bf16.mxu0 0
    %2134 = vmatpush1.bf16.xpose.msra.mxu0 0
    %2135 = vmatprep.subr.bf16.mxu0 0
    %2136 = vmatpush1.bf16.xpose.msra.mxu0 0
    %2137 = vmatprep.subr.bf16.mxu0 0
    %2138 = vmatpush1.bf16.xpose.msra.mxu0 0
    %2139 = vmatprep.subr.bf16.mxu0 0
    %2140 = vmatpush1.bf16.xpose.msra.mxu0 0
    %2141 = vmatprep.subr.bf16.mxu0 0
    %2142 = vmatpush1.bf16.xpose.msra.mxu0 0
    %2143 = vmatprep.subr.bf16.mxu0 0
    %2144 = vmatpush1.bf16.xpose.msra.mxu0 0
    %2145 = vmatprep.subr.bf16.mxu0 0
    %2146 = vmatpush1.bf16.xpose.msra.mxu0 0
    %2147 = vmatprep.subr.bf16.mxu0 0
    %2148 = vmatpush1.bf16.xpose.msra.mxu0 0
    %2149 = vmatprep.subr.bf16.mxu0 0
    %2150 = vmatpush1.bf16.xpose.msra.mxu0 0
    %2151 = vmatprep.mubr.bf16.mxu0 0
    %2152 = vmatmul.mubr.bf16.gmra.mrb[0].mxu0 %v2114
    %v2153 = vpop.f32.mrb[0].mxu0
    %v2154 = vadd.f32 %v379, %v2153
    %v2155 = vpop.f32.mrb[0].mxu0
    %v2156 = vpop.f32.mrb[0].mxu0
    %v2157 = vpop.f32.mrb[0].mxu0
    %2158 = vdwg.mxu0
    %2159 = vrot.lane.b32.xlu0 %v1888, 120
    %v2160 = vpop.permute.xlu0 %2159
    %2161 = vrot.lane.b32.xlu0 %v1893, 120
    %v2162 = vpop.permute.xlu0 %2161
    %v2164 = vsel %vm386, %v2160, 0
    %v2167 = vsel %vm386, %v2162, 0
    %2169 = vmatprep.subr.bf16.mxu0 0
    %2170 = vmatpush1.bf16.xpose.msra.mxu0 %v2167
    %2171 = vmatprep.subr.bf16.mxu0 0
    %2172 = vmatpush1.bf16.xpose.msra.mxu0 0
    %2173 = vmatprep.subr.bf16.mxu0 0
    %2174 = vmatpush1.bf16.xpose.msra.mxu0 0
    %2175 = vmatprep.subr.bf16.mxu0 0
    %2176 = vmatpush1.bf16.xpose.msra.mxu0 0
    %2177 = vmatprep.subr.bf16.mxu0 0
    %2178 = vmatpush1.bf16.xpose.msra.mxu0 0
    %2179 = vmatprep.subr.bf16.mxu0 0
    %2180 = vmatpush1.bf16.xpose.msra.mxu0 0
    %2181 = vmatprep.subr.bf16.mxu0 0
    %2182 = vmatpush1.bf16.xpose.msra.mxu0 0
    %2183 = vmatprep.subr.bf16.mxu0 0
    %2184 = vmatpush1.bf16.xpose.msra.mxu0 0
    %2185 = vmatprep.subr.bf16.mxu0 0
    %2186 = vmatpush1.bf16.xpose.msra.mxu0 0
    %2187 = vmatprep.subr.bf16.mxu0 0
    %2188 = vmatpush1.bf16.xpose.msra.mxu0 0
    %2189 = vmatprep.subr.bf16.mxu0 0
    %2190 = vmatpush1.bf16.xpose.msra.mxu0 0
    %2191 = vmatprep.subr.bf16.mxu0 0
    %2192 = vmatpush1.bf16.xpose.msra.mxu0 0
    %2193 = vmatprep.subr.bf16.mxu0 0
    %2194 = vmatpush1.bf16.xpose.msra.mxu0 0
    %2195 = vmatprep.subr.bf16.mxu0 0
    %2196 = vmatpush1.bf16.xpose.msra.mxu0 0
    %2197 = vmatprep.subr.bf16.mxu0 0
    %2198 = vmatpush1.bf16.xpose.msra.mxu0 0
    %2199 = vmatprep.subr.bf16.mxu0 0
    %2200 = vmatpush1.bf16.xpose.msra.mxu0 0
    %2201 = vmatprep.mubr.bf16.mxu0 0
    %2202 = vmatmul.mubr.bf16.gmra.mrb[0].mxu0 %v2164
    %v2203 = vpop.f32.mrb[0].mxu0
    %v2204 = vadd.f32 %v383, %v2203
    %v2205 = vpop.f32.mrb[0].mxu0
    %v2206 = vpop.f32.mrb[0].mxu0
    %v2207 = vpop.f32.mrb[0].mxu0
    %2208 = vdwg.mxu0
    %v2209 = vsel %vm386, %v2154, -inf
    %2210 = vmax.xlane.f32.xlu0 %v2209
    %v2211 = vpop.xlane.xlu0 %2210
    %v2212 = vsel %vm386, %v2204, -inf
    %2213 = vmax.xlane.f32.xlu0 %v2212
    %v2214 = vpop.xlane.xlu0 %2213
    %v2215 = vsub.f32 %v2154, %v2211
    %v2216 = vsub.f32 %v2204, %v2214
    %v2217 = vmul.f32 %v2215, 1.442695
    %v2218 = vpow.pop %v2217
    %v2219 = vmul.f32 %v2216, 1.442695
    %v2220 = vpow.pop %v2219
    %v2221 = vsel %vm386, %v2218, 0.0
    %2222 = vadd.xlane.f32.xlu0 %v2221
    %v2223 = vpop.xlane.xlu0 %2222
    %v2224 = vsel %vm386, %v2220, 0.0
    %2225 = vadd.xlane.f32.xlu0 %v2224
    %v2226 = vpop.xlane.xlu0 %2225
    %v2227 = vrcp.pop %v2223
    %v2228 = vrcp.pop %v2226
    %v2229 = vmul.f32 %v2218, %v2227
    %v2230 = vmul.f32 %v2220, %v2228
    %v2231 = vpack.c.bf16 %v2229, %v2229
    %v2232 = vpack.c.bf16 %v2230, %v2230
    %2233 = vrot.lane.b32.xlu0 %v1897, 120
    %v2234 = vpop.permute.xlu0 %2233
    %v2236 = vsel %vm386, %v2231, 0
    %v2239 = vsel %vm506, %v2234, 0
    %2241 = vmatprep.subr.bf16.mxu0 0
    %2242 = vmatpush1.bf16.msra.mxu0 %v2239
    %2243 = vmatprep.subr.bf16.mxu0 0
    %2244 = vmatpush1.bf16.msra.mxu0 0
    %2245 = vmatprep.subr.bf16.mxu0 0
    %2246 = vmatpush1.bf16.msra.mxu0 0
    %2247 = vmatprep.subr.bf16.mxu0 0
    %2248 = vmatpush1.bf16.msra.mxu0 0
    %2249 = vmatprep.subr.bf16.mxu0 0
    %2250 = vmatpush1.bf16.msra.mxu0 0
    %2251 = vmatprep.subr.bf16.mxu0 0
    %2252 = vmatpush1.bf16.msra.mxu0 0
    %2253 = vmatprep.subr.bf16.mxu0 0
    %2254 = vmatpush1.bf16.msra.mxu0 0
    %2255 = vmatprep.subr.bf16.mxu0 0
    %2256 = vmatpush1.bf16.msra.mxu0 0
    %2257 = vmatprep.subr.bf16.mxu0 0
    %2258 = vmatpush1.bf16.msra.mxu0 0
    %2259 = vmatprep.subr.bf16.mxu0 0
    %2260 = vmatpush1.bf16.msra.mxu0 0
    %2261 = vmatprep.subr.bf16.mxu0 0
    %2262 = vmatpush1.bf16.msra.mxu0 0
    %2263 = vmatprep.subr.bf16.mxu0 0
    %2264 = vmatpush1.bf16.msra.mxu0 0
    %2265 = vmatprep.subr.bf16.mxu0 0
    %2266 = vmatpush1.bf16.msra.mxu0 0
    %2267 = vmatprep.subr.bf16.mxu0 0
    %2268 = vmatpush1.bf16.msra.mxu0 0
    %2269 = vmatprep.subr.bf16.mxu0 0
    %2270 = vmatpush1.bf16.msra.mxu0 0
    %2271 = vmatprep.subr.bf16.mxu0 0
    %2272 = vmatpush1.bf16.msra.mxu0 0
    %2273 = vmatprep.mubr.bf16.mxu0 0
    %2274 = vmatmul.mubr.bf16.gmra.mrb[0].mxu0 %v2236
    %v2275 = vpop.f32.mrb[0].mxu0
    %v2276 = vadd.f32 0.0, %v2275
    %v2277 = vpop.f32.mrb[0].mxu0
    %v2278 = vpop.f32.mrb[0].mxu0
    %v2279 = vpop.f32.mrb[0].mxu0
    %2280 = vdwg.mxu0
    %2281 = vrot.lane.b32.xlu0 %v1898, 120
    %v2282 = vpop.permute.xlu0 %2281
    %v2284 = vsel %vm386, %v2232, 0
    %v2287 = vsel %vm506, %v2282, 0
    %2289 = vmatprep.subr.bf16.mxu0 0
    %2290 = vmatpush1.bf16.msra.mxu0 %v2287
    %2291 = vmatprep.subr.bf16.mxu0 0
    %2292 = vmatpush1.bf16.msra.mxu0 0
    %2293 = vmatprep.subr.bf16.mxu0 0
    %2294 = vmatpush1.bf16.msra.mxu0 0
    %2295 = vmatprep.subr.bf16.mxu0 0
    %2296 = vmatpush1.bf16.msra.mxu0 0
    %2297 = vmatprep.subr.bf16.mxu0 0
    %2298 = vmatpush1.bf16.msra.mxu0 0
    %2299 = vmatprep.subr.bf16.mxu0 0
    %2300 = vmatpush1.bf16.msra.mxu0 0
    %2301 = vmatprep.subr.bf16.mxu0 0
    %2302 = vmatpush1.bf16.msra.mxu0 0
    %2303 = vmatprep.subr.bf16.mxu0 0
    %2304 = vmatpush1.bf16.msra.mxu0 0
    %2305 = vmatprep.subr.bf16.mxu0 0
    %2306 = vmatpush1.bf16.msra.mxu0 0
    %2307 = vmatprep.subr.bf16.mxu0 0
    %2308 = vmatpush1.bf16.msra.mxu0 0
    %2309 = vmatprep.subr.bf16.mxu0 0
    %2310 = vmatpush1.bf16.msra.mxu0 0
    %2311 = vmatprep.subr.bf16.mxu0 0
    %2312 = vmatpush1.bf16.msra.mxu0 0
    %2313 = vmatprep.subr.bf16.mxu0 0
    %2314 = vmatpush1.bf16.msra.mxu0 0
    %2315 = vmatprep.subr.bf16.mxu0 0
    %2316 = vmatpush1.bf16.msra.mxu0 0
    %2317 = vmatprep.subr.bf16.mxu0 0
    %2318 = vmatpush1.bf16.msra.mxu0 0
    %2319 = vmatprep.subr.bf16.mxu0 0
    %2320 = vmatpush1.bf16.msra.mxu0 0
    %2321 = vmatprep.mubr.bf16.mxu0 0
    %2322 = vmatmul.mubr.bf16.gmra.mrb[0].mxu0 %v2284
    %v2323 = vpop.f32.mrb[0].mxu0
    %v2324 = vadd.f32 0.0, %v2323
    %v2325 = vpop.f32.mrb[0].mxu0
    %v2326 = vpop.f32.mrb[0].mxu0
    %v2327 = vpop.f32.mrb[0].mxu0
    %2328 = vdwg.mxu0
    %v2329 = vld [vmem:[#allocation2 + $0x34] sm:$0xf]
    %v2330 = vpack.c.bf16 %v2324, %v2276
    %v2332 = vunpack.c.l.b16 %v2329
    %v2333 = vpack.c.b16 %v2332, %v2332
    %2334 = vrot.lane.b32.xlu0 %v2333, 32
    %v2335 = vpop.permute.xlu0 %2334
    %v2337 = vsel %vm386, %v2330, 0
    %v2340 = vsel %vm506, %v2335, 0
    %2342 = vmatprep.subr.bf16.mxu0 0
    %2343 = vmatpush1.bf16.msra.mxu0 %v2340
    %2344 = vmatprep.subr.bf16.mxu0 0
    %2345 = vmatpush1.bf16.msra.mxu0 0
    %2346 = vmatprep.subr.bf16.mxu0 0
    %2347 = vmatpush1.bf16.msra.mxu0 0
    %2348 = vmatprep.subr.bf16.mxu0 0
    %2349 = vmatpush1.bf16.msra.mxu0 0
    %2350 = vmatprep.subr.bf16.mxu0 0
    %2351 = vmatpush1.bf16.msra.mxu0 0
    %2352 = vmatprep.subr.bf16.mxu0 0
    %2353 = vmatpush1.bf16.msra.mxu0 0
    %2354 = vmatprep.subr.bf16.mxu0 0
    %2355 = vmatpush1.bf16.msra.mxu0 0
    %2356 = vmatprep.subr.bf16.mxu0 0
    %2357 = vmatpush1.bf16.msra.mxu0 0
    %2358 = vmatprep.subr.bf16.mxu0 0
    %2359 = vmatpush1.bf16.msra.mxu0 0
    %2360 = vmatprep.subr.bf16.mxu0 0
    %2361 = vmatpush1.bf16.msra.mxu0 0
    %2362 = vmatprep.subr.bf16.mxu0 0
    %2363 = vmatpush1.bf16.msra.mxu0 0
    %2364 = vmatprep.subr.bf16.mxu0 0
    %2365 = vmatpush1.bf16.msra.mxu0 0
    %2366 = vmatprep.subr.bf16.mxu0 0
    %2367 = vmatpush1.bf16.msra.mxu0 0
    %2368 = vmatprep.subr.bf16.mxu0 0
    %2369 = vmatpush1.bf16.msra.mxu0 0
    %2370 = vmatprep.subr.bf16.mxu0 0
    %2371 = vmatpush1.bf16.msra.mxu0 0
    %2372 = vmatprep.subr.bf16.mxu0 0
    %2373 = vmatpush1.bf16.msra.mxu0 0
    %2374 = vmatprep.mubr.bf16.mxu0 0
    %2375 = vmatmul.mubr.bf16.gmra.mrb[0].mxu0 %v2337
    %v2376 = vpop.f32.mrb[0].mxu0
    %v2377 = vadd.f32 0.0, %v2376
    %v2378 = vpop.f32.mrb[0].mxu0
    %v2379 = vpop.f32.mrb[0].mxu0
    %v2380 = vadd.f32 0.0, %v2379
    %v2381 = vpop.f32.mrb[0].mxu0
    %2382 = vdwg.mxu0
    %v2384 = vunpack.c.l.b16 %v2107
    %v2385 = vpack.c.b16 %v2384, %v2384
    %2386 = vrot.lane.b32.xlu0 %v2385, 32
    %v2387 = vpop.permute.xlu0 %2386
    %v2389 = vsel %vm386, %v2108, 0
    %v2392 = vsel %vm506, %v2387, 0
    %2394 = vmatprep.subr.bf16.mxu0 0
    %2395 = vmatpush1.bf16.msra.mxu0 %v2392
    %2396 = vmatprep.subr.bf16.mxu0 0
    %2397 = vmatpush1.bf16.msra.mxu0 0
    %2398 = vmatprep.subr.bf16.mxu0 0
    %2399 = vmatpush1.bf16.msra.mxu0 0
    %2400 = vmatprep.subr.bf16.mxu0 0
    %2401 = vmatpush1.bf16.msra.mxu0 0
    %2402 = vmatprep.subr.bf16.mxu0 0
    %2403 = vmatpush1.bf16.msra.mxu0 0
    %2404 = vmatprep.subr.bf16.mxu0 0
    %2405 = vmatpush1.bf16.msra.mxu0 0
    %2406 = vmatprep.subr.bf16.mxu0 0
    %2407 = vmatpush1.bf16.msra.mxu0 0
    %2408 = vmatprep.subr.bf16.mxu0 0
    %2409 = vmatpush1.bf16.msra.mxu0 0
    %2410 = vmatprep.subr.bf16.mxu0 0
    %2411 = vmatpush1.bf16.msra.mxu0 0
    %2412 = vmatprep.subr.bf16.mxu0 0
    %2413 = vmatpush1.bf16.msra.mxu0 0
    %2414 = vmatprep.subr.bf16.mxu0 0
    %2415 = vmatpush1.bf16.msra.mxu0 0
    %2416 = vmatprep.subr.bf16.mxu0 0
    %2417 = vmatpush1.bf16.msra.mxu0 0
    %2418 = vmatprep.subr.bf16.mxu0 0
    %2419 = vmatpush1.bf16.msra.mxu0 0
    %2420 = vmatprep.subr.bf16.mxu0 0
    %2421 = vmatpush1.bf16.msra.mxu0 0
    %2422 = vmatprep.subr.bf16.mxu0 0
    %2423 = vmatpush1.bf16.msra.mxu0 0
    %2424 = vmatprep.subr.bf16.mxu0 0
    %2425 = vmatpush1.bf16.msra.mxu0 0
    %2426 = vmatprep.mubr.bf16.mxu0 0
    %2427 = vmatmul.mubr.bf16.gmra.mrb[0].mxu0 %v2389
    %v2428 = vpop.f32.mrb[0].mxu0
    %v2429 = vadd.f32 %v2377, %v2428
    %v2430 = vpop.f32.mrb[0].mxu0
    %v2431 = vpop.f32.mrb[0].mxu0
    %v2432 = vadd.f32 %v2380, %v2431
    %v2433 = vpop.f32.mrb[0].mxu0
    %2434 = vdwg.mxu0
    %2435 = vrot.lane.b32.xlu0 %v1887, 112
    %v2436 = vpop.permute.xlu0 %2435
    %2437 = vrot.lane.b32.xlu0 %v1892, 112
    %v2438 = vpop.permute.xlu0 %2437
    %v2440 = vsel %vm386, %v2436, 0
    %v2443 = vsel %vm386, %v2438, 0
    %2445 = vmatprep.subr.bf16.mxu0 0
    %2446 = vmatpush1.bf16.xpose.msra.mxu0 %v2443
    %2447 = vmatprep.subr.bf16.mxu0 0
    %2448 = vmatpush1.bf16.xpose.msra.mxu0 0
    %2449 = vmatprep.subr.bf16.mxu0 0
    %2450 = vmatpush1.bf16.xpose.msra.mxu0 0
    %2451 = vmatprep.subr.bf16.mxu0 0
    %2452 = vmatpush1.bf16.xpose.msra.mxu0 0
    %2453 = vmatprep.subr.bf16.mxu0 0
    %2454 = vmatpush1.bf16.xpose.msra.mxu0 0
    %2455 = vmatprep.subr.bf16.mxu0 0
    %2456 = vmatpush1.bf16.xpose.msra.mxu0 0
    %2457 = vmatprep.subr.bf16.mxu0 0
    %2458 = vmatpush1.bf16.xpose.msra.mxu0 0
    %2459 = vmatprep.subr.bf16.mxu0 0
    %2460 = vmatpush1.bf16.xpose.msra.mxu0 0
    %2461 = vmatprep.subr.bf16.mxu0 0
    %2462 = vmatpush1.bf16.xpose.msra.mxu0 0
    %2463 = vmatprep.subr.bf16.mxu0 0
    %2464 = vmatpush1.bf16.xpose.msra.mxu0 0
    %2465 = vmatprep.subr.bf16.mxu0 0
    %2466 = vmatpush1.bf16.xpose.msra.mxu0 0
    %2467 = vmatprep.subr.bf16.mxu0 0
    %2468 = vmatpush1.bf16.xpose.msra.mxu0 0
    %2469 = vmatprep.subr.bf16.mxu0 0
    %2470 = vmatpush1.bf16.xpose.msra.mxu0 0
    %2471 = vmatprep.subr.bf16.mxu0 0
    %2472 = vmatpush1.bf16.xpose.msra.mxu0 0
    %2473 = vmatprep.subr.bf16.mxu0 0
    %2474 = vmatpush1.bf16.xpose.msra.mxu0 0
    %2475 = vmatprep.subr.bf16.mxu0 0
    %2476 = vmatpush1.bf16.xpose.msra.mxu0 0
    %2477 = vmatprep.mubr.bf16.mxu0 0
    %2478 = vmatmul.mubr.bf16.gmra.mrb[0].mxu0 %v2440
    %v2479 = vpop.f32.mrb[0].mxu0
    %v2480 = vadd.f32 %v379, %v2479
    %v2481 = vpop.f32.mrb[0].mxu0
    %v2482 = vpop.f32.mrb[0].mxu0
    %v2483 = vpop.f32.mrb[0].mxu0
    %2484 = vdwg.mxu0
    %2485 = vrot.lane.b32.xlu0 %v1888, 112
    %v2486 = vpop.permute.xlu0 %2485
    %2487 = vrot.lane.b32.xlu0 %v1893, 112
    %v2488 = vpop.permute.xlu0 %2487
    %v2490 = vsel %vm386, %v2486, 0
    %v2493 = vsel %vm386, %v2488, 0
    %2495 = vmatprep.subr.bf16.mxu0 0
    %2496 = vmatpush1.bf16.xpose.msra.mxu0 %v2493
    %2497 = vmatprep.subr.bf16.mxu0 0
    %2498 = vmatpush1.bf16.xpose.msra.mxu0 0
    %2499 = vmatprep.subr.bf16.mxu0 0
    %2500 = vmatpush1.bf16.xpose.msra.mxu0 0
    %2501 = vmatprep.subr.bf16.mxu0 0
    %2502 = vmatpush1.bf16.xpose.msra.mxu0 0
    %2503 = vmatprep.subr.bf16.mxu0 0
    %2504 = vmatpush1.bf16.xpose.msra.mxu0 0
    %2505 = vmatprep.subr.bf16.mxu0 0
    %2506 = vmatpush1.bf16.xpose.msra.mxu0 0
    %2507 = vmatprep.subr.bf16.mxu0 0
    %2508 = vmatpush1.bf16.xpose.msra.mxu0 0
    %2509 = vmatprep.subr.bf16.mxu0 0
    %2510 = vmatpush1.bf16.xpose.msra.mxu0 0
    %2511 = vmatprep.subr.bf16.mxu0 0
    %2512 = vmatpush1.bf16.xpose.msra.mxu0 0
    %2513 = vmatprep.subr.bf16.mxu0 0
    %2514 = vmatpush1.bf16.xpose.msra.mxu0 0
    %2515 = vmatprep.subr.bf16.mxu0 0
    %2516 = vmatpush1.bf16.xpose.msra.mxu0 0
    %2517 = vmatprep.subr.bf16.mxu0 0
    %2518 = vmatpush1.bf16.xpose.msra.mxu0 0
    %2519 = vmatprep.subr.bf16.mxu0 0
    %2520 = vmatpush1.bf16.xpose.msra.mxu0 0
    %2521 = vmatprep.subr.bf16.mxu0 0
    %2522 = vmatpush1.bf16.xpose.msra.mxu0 0
    %2523 = vmatprep.subr.bf16.mxu0 0
    %2524 = vmatpush1.bf16.xpose.msra.mxu0 0
    %2525 = vmatprep.subr.bf16.mxu0 0
    %2526 = vmatpush1.bf16.xpose.msra.mxu0 0
    %2527 = vmatprep.mubr.bf16.mxu0 0
    %2528 = vmatmul.mubr.bf16.gmra.mrb[0].mxu0 %v2490
    %v2529 = vpop.f32.mrb[0].mxu0
    %v2530 = vadd.f32 %v383, %v2529
    %v2531 = vpop.f32.mrb[0].mxu0
    %v2532 = vpop.f32.mrb[0].mxu0
    %v2533 = vpop.f32.mrb[0].mxu0
    %2534 = vdwg.mxu0
    %v2535 = vsel %vm386, %v2480, -inf
    %2536 = vmax.xlane.f32.xlu0 %v2535
    %v2537 = vpop.xlane.xlu0 %2536
    %v2538 = vsel %vm386, %v2530, -inf
    %2539 = vmax.xlane.f32.xlu0 %v2538
    %v2540 = vpop.xlane.xlu0 %2539
    %v2541 = vsub.f32 %v2480, %v2537
    %v2542 = vsub.f32 %v2530, %v2540
    %v2543 = vmul.f32 %v2541, 1.442695
    %v2544 = vpow.pop %v2543
    %v2545 = vmul.f32 %v2542, 1.442695
    %v2546 = vpow.pop %v2545
    %v2547 = vsel %vm386, %v2544, 0.0
    %2548 = vadd.xlane.f32.xlu0 %v2547
    %v2549 = vpop.xlane.xlu0 %2548
    %v2550 = vsel %vm386, %v2546, 0.0
    %2551 = vadd.xlane.f32.xlu0 %v2550
    %v2552 = vpop.xlane.xlu0 %2551
    %v2553 = vrcp.pop %v2549
    %v2554 = vrcp.pop %v2552
    %v2555 = vmul.f32 %v2544, %v2553
    %v2556 = vmul.f32 %v2546, %v2554
    %v2557 = vpack.c.bf16 %v2555, %v2555
    %v2558 = vpack.c.bf16 %v2556, %v2556
    %2559 = vrot.lane.b32.xlu0 %v1897, 112
    %v2560 = vpop.permute.xlu0 %2559
    %v2562 = vsel %vm386, %v2557, 0
    %v2565 = vsel %vm506, %v2560, 0
    %2567 = vmatprep.subr.bf16.mxu0 0
    %2568 = vmatpush1.bf16.msra.mxu0 %v2565
    %2569 = vmatprep.subr.bf16.mxu0 0
    %2570 = vmatpush1.bf16.msra.mxu0 0
    %2571 = vmatprep.subr.bf16.mxu0 0
    %2572 = vmatpush1.bf16.msra.mxu0 0
    %2573 = vmatprep.subr.bf16.mxu0 0
    %2574 = vmatpush1.bf16.msra.mxu0 0
    %2575 = vmatprep.subr.bf16.mxu0 0
    %2576 = vmatpush1.bf16.msra.mxu0 0
    %2577 = vmatprep.subr.bf16.mxu0 0
    %2578 = vmatpush1.bf16.msra.mxu0 0
    %2579 = vmatprep.subr.bf16.mxu0 0
    %2580 = vmatpush1.bf16.msra.mxu0 0
    %2581 = vmatprep.subr.bf16.mxu0 0
    %2582 = vmatpush1.bf16.msra.mxu0 0
    %2583 = vmatprep.subr.bf16.mxu0 0
    %2584 = vmatpush1.bf16.msra.mxu0 0
    %2585 = vmatprep.subr.bf16.mxu0 0
    %2586 = vmatpush1.bf16.msra.mxu0 0
    %2587 = vmatprep.subr.bf16.mxu0 0
    %2588 = vmatpush1.bf16.msra.mxu0 0
    %2589 = vmatprep.subr.bf16.mxu0 0
    %2590 = vmatpush1.bf16.msra.mxu0 0
    %2591 = vmatprep.subr.bf16.mxu0 0
    %2592 = vmatpush1.bf16.msra.mxu0 0
    %2593 = vmatprep.subr.bf16.mxu0 0
    %2594 = vmatpush1.bf16.msra.mxu0 0
    %2595 = vmatprep.subr.bf16.mxu0 0
    %2596 = vmatpush1.bf16.msra.mxu0 0
    %2597 = vmatprep.subr.bf16.mxu0 0
    %2598 = vmatpush1.bf16.msra.mxu0 0
    %2599 = vmatprep.mubr.bf16.mxu0 0
    %2600 = vmatmul.mubr.bf16.gmra.mrb[0].mxu0 %v2562
    %v2601 = vpop.f32.mrb[0].mxu0
    %v2602 = vadd.f32 0.0, %v2601
    %v2603 = vpop.f32.mrb[0].mxu0
    %v2604 = vpop.f32.mrb[0].mxu0
    %v2605 = vpop.f32.mrb[0].mxu0
    %2606 = vdwg.mxu0
    %2607 = vrot.lane.b32.xlu0 %v1898, 112
    %v2608 = vpop.permute.xlu0 %2607
    %v2610 = vsel %vm386, %v2558, 0
    %v2613 = vsel %vm506, %v2608, 0
    %2615 = vmatprep.subr.bf16.mxu0 0
    %2616 = vmatpush1.bf16.msra.mxu0 %v2613
    %2617 = vmatprep.subr.bf16.mxu0 0
    %2618 = vmatpush1.bf16.msra.mxu0 0
    %2619 = vmatprep.subr.bf16.mxu0 0
    %2620 = vmatpush1.bf16.msra.mxu0 0
    %2621 = vmatprep.subr.bf16.mxu0 0
    %2622 = vmatpush1.bf16.msra.mxu0 0
    %2623 = vmatprep.subr.bf16.mxu0 0
    %2624 = vmatpush1.bf16.msra.mxu0 0
    %2625 = vmatprep.subr.bf16.mxu0 0
    %2626 = vmatpush1.bf16.msra.mxu0 0
    %2627 = vmatprep.subr.bf16.mxu0 0
    %2628 = vmatpush1.bf16.msra.mxu0 0
    %2629 = vmatprep.subr.bf16.mxu0 0
    %2630 = vmatpush1.bf16.msra.mxu0 0
    %2631 = vmatprep.subr.bf16.mxu0 0
    %2632 = vmatpush1.bf16.msra.mxu0 0
    %2633 = vmatprep.subr.bf16.mxu0 0
    %2634 = vmatpush1.bf16.msra.mxu0 0
    %2635 = vmatprep.subr.bf16.mxu0 0
    %2636 = vmatpush1.bf16.msra.mxu0 0
    %2637 = vmatprep.subr.bf16.mxu0 0
    %2638 = vmatpush1.bf16.msra.mxu0 0
    %2639 = vmatprep.subr.bf16.mxu0 0
    %2640 = vmatpush1.bf16.msra.mxu0 0
    %2641 = vmatprep.subr.bf16.mxu0 0
    %2642 = vmatpush1.bf16.msra.mxu0 0
    %2643 = vmatprep.subr.bf16.mxu0 0
    %2644 = vmatpush1.bf16.msra.mxu0 0
    %2645 = vmatprep.subr.bf16.mxu0 0
    %2646 = vmatpush1.bf16.msra.mxu0 0
    %2647 = vmatprep.mubr.bf16.mxu0 0
    %2648 = vmatmul.mubr.bf16.gmra.mrb[0].mxu0 %v2610
    %v2649 = vpop.f32.mrb[0].mxu0
    %v2650 = vadd.f32 0.0, %v2649
    %v2651 = vpop.f32.mrb[0].mxu0
    %v2652 = vpop.f32.mrb[0].mxu0
    %v2653 = vpop.f32.mrb[0].mxu0
    %2654 = vdwg.mxu0
    %v2655 = vld [vmem:[#allocation2 + $0x38] sm:$0xf]
    %v2656 = vpack.c.bf16 %v2650, %v2602
    %v2658 = vunpack.c.l.b16 %v2655
    %v2659 = vpack.c.b16 %v2658, %v2658
    %2660 = vrot.lane.b32.xlu0 %v2659, 32
    %v2661 = vpop.permute.xlu0 %2660
    %v2663 = vsel %vm386, %v2656, 0
    %v2666 = vsel %vm506, %v2661, 0
    %2668 = vmatprep.subr.bf16.mxu0 0
    %2669 = vmatpush1.bf16.msra.mxu0 %v2666
    %2670 = vmatprep.subr.bf16.mxu0 0
    %2671 = vmatpush1.bf16.msra.mxu0 0
    %2672 = vmatprep.subr.bf16.mxu0 0
    %2673 = vmatpush1.bf16.msra.mxu0 0
    %2674 = vmatprep.subr.bf16.mxu0 0
    %2675 = vmatpush1.bf16.msra.mxu0 0
    %2676 = vmatprep.subr.bf16.mxu0 0
    %2677 = vmatpush1.bf16.msra.mxu0 0
    %2678 = vmatprep.subr.bf16.mxu0 0
    %2679 = vmatpush1.bf16.msra.mxu0 0
    %2680 = vmatprep.subr.bf16.mxu0 0
    %2681 = vmatpush1.bf16.msra.mxu0 0
    %2682 = vmatprep.subr.bf16.mxu0 0
    %2683 = vmatpush1.bf16.msra.mxu0 0
    %2684 = vmatprep.subr.bf16.mxu0 0
    %2685 = vmatpush1.bf16.msra.mxu0 0
    %2686 = vmatprep.subr.bf16.mxu0 0
    %2687 = vmatpush1.bf16.msra.mxu0 0
    %2688 = vmatprep.subr.bf16.mxu0 0
    %2689 = vmatpush1.bf16.msra.mxu0 0
    %2690 = vmatprep.subr.bf16.mxu0 0
    %2691 = vmatpush1.bf16.msra.mxu0 0
    %2692 = vmatprep.subr.bf16.mxu0 0
    %2693 = vmatpush1.bf16.msra.mxu0 0
    %2694 = vmatprep.subr.bf16.mxu0 0
    %2695 = vmatpush1.bf16.msra.mxu0 0
    %2696 = vmatprep.subr.bf16.mxu0 0
    %2697 = vmatpush1.bf16.msra.mxu0 0
    %2698 = vmatprep.subr.bf16.mxu0 0
    %2699 = vmatpush1.bf16.msra.mxu0 0
    %2700 = vmatprep.mubr.bf16.mxu0 0
    %2701 = vmatmul.mubr.bf16.gmra.mrb[0].mxu0 %v2663
    %v2702 = vpop.f32.mrb[0].mxu0
    %v2703 = vadd.f32 0.0, %v2702
    %v2704 = vpop.f32.mrb[0].mxu0
    %v2705 = vpop.f32.mrb[0].mxu0
    %v2706 = vadd.f32 0.0, %v2705
    %v2707 = vpop.f32.mrb[0].mxu0
    %2708 = vdwg.mxu0
    %v2709 = vadd.f32 %v2429, %v2703
    %v2710 = vadd.f32 %v2432, %v2706
    %2711 = vrot.lane.b32.xlu0 %v1887, 104
    %v2712 = vpop.permute.xlu0 %2711
    %2713 = vrot.lane.b32.xlu0 %v1892, 104
    %v2714 = vpop.permute.xlu0 %2713
    %v2716 = vsel %vm386, %v2712, 0
    %v2719 = vsel %vm386, %v2714, 0
    %2721 = vmatprep.subr.bf16.mxu0 0
    %2722 = vmatpush1.bf16.xpose.msra.mxu0 %v2719
    %2723 = vmatprep.subr.bf16.mxu0 0
    %2724 = vmatpush1.bf16.xpose.msra.mxu0 0
    %2725 = vmatprep.subr.bf16.mxu0 0
    %2726 = vmatpush1.bf16.xpose.msra.mxu0 0
    %2727 = vmatprep.subr.bf16.mxu0 0
    %2728 = vmatpush1.bf16.xpose.msra.mxu0 0
    %2729 = vmatprep.subr.bf16.mxu0 0
    %2730 = vmatpush1.bf16.xpose.msra.mxu0 0
    %2731 = vmatprep.subr.bf16.mxu0 0
    %2732 = vmatpush1.bf16.xpose.msra.mxu0 0
    %2733 = vmatprep.subr.bf16.mxu0 0
    %2734 = vmatpush1.bf16.xpose.msra.mxu0 0
    %2735 = vmatprep.subr.bf16.mxu0 0
    %2736 = vmatpush1.bf16.xpose.msra.mxu0 0
    %2737 = vmatprep.subr.bf16.mxu0 0
    %2738 = vmatpush1.bf16.xpose.msra.mxu0 0
    %2739 = vmatprep.subr.bf16.mxu0 0
    %2740 = vmatpush1.bf16.xpose.msra.mxu0 0
    %2741 = vmatprep.subr.bf16.mxu0 0
    %2742 = vmatpush1.bf16.xpose.msra.mxu0 0
    %2743 = vmatprep.subr.bf16.mxu0 0
    %2744 = vmatpush1.bf16.xpose.msra.mxu0 0
    %2745 = vmatprep.subr.bf16.mxu0 0
    %2746 = vmatpush1.bf16.xpose.msra.mxu0 0
    %2747 = vmatprep.subr.bf16.mxu0 0
    %2748 = vmatpush1.bf16.xpose.msra.mxu0 0
    %2749 = vmatprep.subr.bf16.mxu0 0
    %2750 = vmatpush1.bf16.xpose.msra.mxu0 0
    %2751 = vmatprep.subr.bf16.mxu0 0
    %2752 = vmatpush1.bf16.xpose.msra.mxu0 0
    %2753 = vmatprep.mubr.bf16.mxu0 0
    %2754 = vmatmul.mubr.bf16.gmra.mrb[0].mxu0 %v2716
    %v2755 = vpop.f32.mrb[0].mxu0
    %v2756 = vadd.f32 %v379, %v2755
    %v2757 = vpop.f32.mrb[0].mxu0
    %v2758 = vpop.f32.mrb[0].mxu0
    %v2759 = vpop.f32.mrb[0].mxu0
    %2760 = vdwg.mxu0
    %2761 = vrot.lane.b32.xlu0 %v1888, 104
    %v2762 = vpop.permute.xlu0 %2761
    %2763 = vrot.lane.b32.xlu0 %v1893, 104
    %v2764 = vpop.permute.xlu0 %2763
    %v2766 = vsel %vm386, %v2762, 0
    %v2769 = vsel %vm386, %v2764, 0
    %2771 = vmatprep.subr.bf16.mxu0 0
    %2772 = vmatpush1.bf16.xpose.msra.mxu0 %v2769
    %2773 = vmatprep.subr.bf16.mxu0 0
    %2774 = vmatpush1.bf16.xpose.msra.mxu0 0
    %2775 = vmatprep.subr.bf16.mxu0 0
    %2776 = vmatpush1.bf16.xpose.msra.mxu0 0
    %2777 = vmatprep.subr.bf16.mxu0 0
    %2778 = vmatpush1.bf16.xpose.msra.mxu0 0
    %2779 = vmatprep.subr.bf16.mxu0 0
    %2780 = vmatpush1.bf16.xpose.msra.mxu0 0
    %2781 = vmatprep.subr.bf16.mxu0 0
    %2782 = vmatpush1.bf16.xpose.msra.mxu0 0
    %2783 = vmatprep.subr.bf16.mxu0 0
    %2784 = vmatpush1.bf16.xpose.msra.mxu0 0
    %2785 = vmatprep.subr.bf16.mxu0 0
    %2786 = vmatpush1.bf16.xpose.msra.mxu0 0
    %2787 = vmatprep.subr.bf16.mxu0 0
    %2788 = vmatpush1.bf16.xpose.msra.mxu0 0
    %2789 = vmatprep.subr.bf16.mxu0 0
    %2790 = vmatpush1.bf16.xpose.msra.mxu0 0
    %2791 = vmatprep.subr.bf16.mxu0 0
    %2792 = vmatpush1.bf16.xpose.msra.mxu0 0
    %2793 = vmatprep.subr.bf16.mxu0 0
    %2794 = vmatpush1.bf16.xpose.msra.mxu0 0
    %2795 = vmatprep.subr.bf16.mxu0 0
    %2796 = vmatpush1.bf16.xpose.msra.mxu0 0
    %2797 = vmatprep.subr.bf16.mxu0 0
    %2798 = vmatpush1.bf16.xpose.msra.mxu0 0
    %2799 = vmatprep.subr.bf16.mxu0 0
    %2800 = vmatpush1.bf16.xpose.msra.mxu0 0
    %2801 = vmatprep.subr.bf16.mxu0 0
    %2802 = vmatpush1.bf16.xpose.msra.mxu0 0
    %2803 = vmatprep.mubr.bf16.mxu0 0
    %2804 = vmatmul.mubr.bf16.gmra.mrb[0].mxu0 %v2766
    %v2805 = vpop.f32.mrb[0].mxu0
    %v2806 = vadd.f32 %v383, %v2805
    %v2807 = vpop.f32.mrb[0].mxu0
    %v2808 = vpop.f32.mrb[0].mxu0
    %v2809 = vpop.f32.mrb[0].mxu0
    %2810 = vdwg.mxu0
    %v2811 = vsel %vm386, %v2756, -inf
    %2812 = vmax.xlane.f32.xlu0 %v2811
    %v2813 = vpop.xlane.xlu0 %2812
    %v2814 = vsel %vm386, %v2806, -inf
    %2815 = vmax.xlane.f32.xlu0 %v2814
    %v2816 = vpop.xlane.xlu0 %2815
    %v2817 = vsub.f32 %v2756, %v2813
    %v2818 = vsub.f32 %v2806, %v2816
    %v2819 = vmul.f32 %v2817, 1.442695
    %v2820 = vpow.pop %v2819
    %v2821 = vmul.f32 %v2818, 1.442695
    %v2822 = vpow.pop %v2821
    %v2823 = vsel %vm386, %v2820, 0.0
    %2824 = vadd.xlane.f32.xlu0 %v2823
    %v2825 = vpop.xlane.xlu0 %2824
    %v2826 = vsel %vm386, %v2822, 0.0
    %2827 = vadd.xlane.f32.xlu0 %v2826
    %v2828 = vpop.xlane.xlu0 %2827
    %v2829 = vrcp.pop %v2825
    %v2830 = vrcp.pop %v2828
    %v2831 = vmul.f32 %v2820, %v2829
    %v2832 = vmul.f32 %v2822, %v2830
    %v2833 = vpack.c.bf16 %v2831, %v2831
    %v2834 = vpack.c.bf16 %v2832, %v2832
    %2835 = vrot.lane.b32.xlu0 %v1897, 104
    %v2836 = vpop.permute.xlu0 %2835
    %v2838 = vsel %vm386, %v2833, 0
    %v2841 = vsel %vm506, %v2836, 0
    %2843 = vmatprep.subr.bf16.mxu0 0
    %2844 = vmatpush1.bf16.msra.mxu0 %v2841
    %2845 = vmatprep.subr.bf16.mxu0 0
    %2846 = vmatpush1.bf16.msra.mxu0 0
    %2847 = vmatprep.subr.bf16.mxu0 0
    %2848 = vmatpush1.bf16.msra.mxu0 0
    %2849 = vmatprep.subr.bf16.mxu0 0
    %2850 = vmatpush1.bf16.msra.mxu0 0
    %2851 = vmatprep.subr.bf16.mxu0 0
    %2852 = vmatpush1.bf16.msra.mxu0 0
    %2853 = vmatprep.subr.bf16.mxu0 0
    %2854 = vmatpush1.bf16.msra.mxu0 0
    %2855 = vmatprep.subr.bf16.mxu0 0
    %2856 = vmatpush1.bf16.msra.mxu0 0
    %2857 = vmatprep.subr.bf16.mxu0 0
    %2858 = vmatpush1.bf16.msra.mxu0 0
    %2859 = vmatprep.subr.bf16.mxu0 0
    %2860 = vmatpush1.bf16.msra.mxu0 0
    %2861 = vmatprep.subr.bf16.mxu0 0
    %2862 = vmatpush1.bf16.msra.mxu0 0
    %2863 = vmatprep.subr.bf16.mxu0 0
    %2864 = vmatpush1.bf16.msra.mxu0 0
    %2865 = vmatprep.subr.bf16.mxu0 0
    %2866 = vmatpush1.bf16.msra.mxu0 0
    %2867 = vmatprep.subr.bf16.mxu0 0
    %2868 = vmatpush1.bf16.msra.mxu0 0
    %2869 = vmatprep.subr.bf16.mxu0 0
    %2870 = vmatpush1.bf16.msra.mxu0 0
    %2871 = vmatprep.subr.bf16.mxu0 0
    %2872 = vmatpush1.bf16.msra.mxu0 0
    %2873 = vmatprep.subr.bf16.mxu0 0
    %2874 = vmatpush1.bf16.msra.mxu0 0
    %2875 = vmatprep.mubr.bf16.mxu0 0
    %2876 = vmatmul.mubr.bf16.gmra.mrb[0].mxu0 %v2838
    %v2877 = vpop.f32.mrb[0].mxu0
    %v2878 = vadd.f32 0.0, %v2877
    %v2879 = vpop.f32.mrb[0].mxu0
    %v2880 = vpop.f32.mrb[0].mxu0
    %v2881 = vpop.f32.mrb[0].mxu0
    %2882 = vdwg.mxu0
    %2883 = vrot.lane.b32.xlu0 %v1898, 104
    %v2884 = vpop.permute.xlu0 %2883
    %v2886 = vsel %vm386, %v2834, 0
    %v2889 = vsel %vm506, %v2884, 0
    %2891 = vmatprep.subr.bf16.mxu0 0
    %2892 = vmatpush1.bf16.msra.mxu0 %v2889
    %2893 = vmatprep.subr.bf16.mxu0 0
    %2894 = vmatpush1.bf16.msra.mxu0 0
    %2895 = vmatprep.subr.bf16.mxu0 0
    %2896 = vmatpush1.bf16.msra.mxu0 0
    %2897 = vmatprep.subr.bf16.mxu0 0
    %2898 = vmatpush1.bf16.msra.mxu0 0
    %2899 = vmatprep.subr.bf16.mxu0 0
    %2900 = vmatpush1.bf16.msra.mxu0 0
    %2901 = vmatprep.subr.bf16.mxu0 0
    %2902 = vmatpush1.bf16.msra.mxu0 0
    %2903 = vmatprep.subr.bf16.mxu0 0
    %2904 = vmatpush1.bf16.msra.mxu0 0
    %2905 = vmatprep.subr.bf16.mxu0 0
    %2906 = vmatpush1.bf16.msra.mxu0 0
    %2907 = vmatprep.subr.bf16.mxu0 0
    %2908 = vmatpush1.bf16.msra.mxu0 0
    %2909 = vmatprep.subr.bf16.mxu0 0
    %2910 = vmatpush1.bf16.msra.mxu0 0
    %2911 = vmatprep.subr.bf16.mxu0 0
    %2912 = vmatpush1.bf16.msra.mxu0 0
    %2913 = vmatprep.subr.bf16.mxu0 0
    %2914 = vmatpush1.bf16.msra.mxu0 0
    %2915 = vmatprep.subr.bf16.mxu0 0
    %2916 = vmatpush1.bf16.msra.mxu0 0
    %2917 = vmatprep.subr.bf16.mxu0 0
    %2918 = vmatpush1.bf16.msra.mxu0 0
    %2919 = vmatprep.subr.bf16.mxu0 0
    %2920 = vmatpush1.bf16.msra.mxu0 0
    %2921 = vmatprep.subr.bf16.mxu0 0
    %2922 = vmatpush1.bf16.msra.mxu0 0
    %2923 = vmatprep.mubr.bf16.mxu0 0
    %2924 = vmatmul.mubr.bf16.gmra.mrb[0].mxu0 %v2886
    %v2925 = vpop.f32.mrb[0].mxu0
    %v2926 = vadd.f32 0.0, %v2925
    %v2927 = vpop.f32.mrb[0].mxu0
    %v2928 = vpop.f32.mrb[0].mxu0
    %v2929 = vpop.f32.mrb[0].mxu0
    %2930 = vdwg.mxu0
    %v2931 = vld [vmem:[#allocation2 + $0x3c] sm:$0xf]
    %v2932 = vpack.c.bf16 %v2926, %v2878
    %v2934 = vunpack.c.l.b16 %v2931
    %v2935 = vpack.c.b16 %v2934, %v2934
    %2936 = vrot.lane.b32.xlu0 %v2935, 32
    %v2937 = vpop.permute.xlu0 %2936
    %v2939 = vsel %vm386, %v2932, 0
    %v2942 = vsel %vm506, %v2937, 0
    %2944 = vmatprep.subr.bf16.mxu0 0
    %2945 = vmatpush1.bf16.msra.mxu0 %v2942
    %2946 = vmatprep.subr.bf16.mxu0 0
    %2947 = vmatpush1.bf16.msra.mxu0 0
    %2948 = vmatprep.subr.bf16.mxu0 0
    %2949 = vmatpush1.bf16.msra.mxu0 0
    %2950 = vmatprep.subr.bf16.mxu0 0
    %2951 = vmatpush1.bf16.msra.mxu0 0
    %2952 = vmatprep.subr.bf16.mxu0 0
    %2953 = vmatpush1.bf16.msra.mxu0 0
    %2954 = vmatprep.subr.bf16.mxu0 0
    %2955 = vmatpush1.bf16.msra.mxu0 0
    %2956 = vmatprep.subr.bf16.mxu0 0
    %2957 = vmatpush1.bf16.msra.mxu0 0
    %2958 = vmatprep.subr.bf16.mxu0 0
    %2959 = vmatpush1.bf16.msra.mxu0 0
    %2960 = vmatprep.subr.bf16.mxu0 0
    %2961 = vmatpush1.bf16.msra.mxu0 0
    %2962 = vmatprep.subr.bf16.mxu0 0
    %2963 = vmatpush1.bf16.msra.mxu0 0
    %2964 = vmatprep.subr.bf16.mxu0 0
    %2965 = vmatpush1.bf16.msra.mxu0 0
    %2966 = vmatprep.subr.bf16.mxu0 0
    %2967 = vmatpush1.bf16.msra.mxu0 0
    %2968 = vmatprep.subr.bf16.mxu0 0
    %2969 = vmatpush1.bf16.msra.mxu0 0
    %2970 = vmatprep.subr.bf16.mxu0 0
    %2971 = vmatpush1.bf16.msra.mxu0 0
    %2972 = vmatprep.subr.bf16.mxu0 0
    %2973 = vmatpush1.bf16.msra.mxu0 0
    %2974 = vmatprep.subr.bf16.mxu0 0
    %2975 = vmatpush1.bf16.msra.mxu0 0
    %2976 = vmatprep.mubr.bf16.mxu0 0
    %2977 = vmatmul.mubr.bf16.gmra.mrb[0].mxu0 %v2939
    %v2978 = vpop.f32.mrb[0].mxu0
    %v2979 = vadd.f32 0.0, %v2978
    %v2980 = vpop.f32.mrb[0].mxu0
    %v2981 = vpop.f32.mrb[0].mxu0
    %v2982 = vadd.f32 0.0, %v2981
    %v2983 = vpop.f32.mrb[0].mxu0
    %2984 = vdwg.mxu0
    %v2985 = vadd.f32 %v2709, %v2979
    %v2986 = vadd.f32 %v2710, %v2982
    %v2987 = vlaneseq
    %v2988 = vshrl.u32 %v2987, 7
    %v2989 = vsub.s32 3, %v2988
    %v2990 = vrot.slane %v1711, %v2989
    %v2991 = vadd.f32 %v2985, %v2990
    %v2992 = vadd.f32 %v2986, %v2990
    %v2993 = vld [vmem:[#allocation4 + $0x68] sm:$0x3]
    %v2994 = vadd.f32 %v2991, %v1709
    %v2995 = vadd.f32 %v2992, %v1710
    %v2996 = vsel %vm144, %v2994, 0.0
    %2997 = vadd.xlane.f32.xlu0 %v2996
    %v2998 = vpop.xlane.xlu0 %2997
    %v2999 = vsel %vm144, %v2995, 0.0
    %3000 = vadd.xlane.f32.xlu0 %v2999
    %v3001 = vpop.xlane.xlu0 %3000
    %v3002 = vmul.f32 %v2998, %v151
    %v3003 = vmul.f32 %v3001, %v151
    %v3004 = vsub.f32 %v2994, %v3002
    %v3005 = vsub.f32 %v2995, %v3003
    %v3006 = vmul.f32 %v3004, %v3004
    %v3007 = vmul.f32 %v3005, %v3005
    %v3008 = vsel %vm144, %v3006, 0.0
    %3009 = vadd.xlane.f32.xlu0 %v3008
    %v3010 = vpop.xlane.xlu0 %3009
    %v3011 = vsel %vm144, %v3007, 0.0
    %3012 = vadd.xlane.f32.xlu0 %v3011
    %v3013 = vpop.xlane.xlu0 %3012
    %v3014 = vmul.f32 %v3010, %v151
    %v3015 = vmul.f32 %v3013, %v151
    %v3016 = vadd.f32 %v3014, 1e-12
    %v3017 = vadd.f32 %v3015, 1e-12
    %v3018 = vrsqrt.pop %v3016
    %v3019 = vrsqrt.pop %v3017
    %v3020 = vmul.f32 %v3004, %v3018
    %v3021 = vmul.f32 %v3005, %v3019
    %v3022 = vlaneseq
    %v3023 = vshrl.u32 %v3022, 7
    %v3024 = vsub.s32 0, %v3023
    %v3025 = vrot.slane %v2993, %v3024
    %v3026 = vmul.f32 %v3020, %v3025
    %v3027 = vmul.f32 %v3021, %v3025
    %v3028 = vlaneseq
    %v3029 = vshrl.u32 %v3028, 7
    %v3030 = vsub.s32 1, %v3029
    %v3031 = vrot.slane %v2993, %v3030
    %v3032 = vadd.f32 %v3026, %v3031
    %v3033 = vadd.f32 %v3027, %v3031
    %v3034 = vpack.c.bf16 %v3033, %v3032
    %v3035 = vld [vmem:[#allocation2 + $0x40] sm:$0xf]
    %v3036 = vld [vmem:[#allocation2 + $0x44] sm:$0xf]
    %v3037 = vld [vmem:[#allocation2 + $0x48] sm:$0xf]
    %v3038 = vld [vmem:[#allocation2 + $0x4c] sm:$0xf]
    %v3039 = vld [vmem:[#allocation4 + $0x70] sm:$0x1]
    %v3040 = vlaneseq
    %v3041 = vshrl.u32 %v3040, 7
    %v3042 = vsub.s32 0, %v3041
    %v3043 = vrot.slane %v3039, %v3042
    %v3048 = vunpack.c.l.b16 %v3035
    %v3049 = vunpack.c.l.b16 %v3036
    %v3050 = vunpack.c.l.b16 %v3037
    %v3051 = vunpack.c.l.b16 %v3038
    %v3052 = vpack.c.b16 %v3049, %v3048
    %v3053 = vpack.c.b16 %v3051, %v3050
    %v3057 = vsel %vm144, %v3034, 0
    %3059 = vmatprep.subr.bf16.mxu0 0
    %3060 = vmatpush1.bf16.msra.mxu0 %v3052
    %3061 = vmatprep.subr.bf16.mxu0 0
    %3062 = vmatpush1.bf16.msra.mxu0 %v3053
    %3063 = vmatprep.subr.bf16.mxu0 0
    %3064 = vmatpush1.bf16.msra.mxu0 0
    %3065 = vmatprep.subr.bf16.mxu0 0
    %3066 = vmatpush1.bf16.msra.mxu0 0
    %3067 = vmatprep.subr.bf16.mxu0 0
    %3068 = vmatpush1.bf16.msra.mxu0 0
    %3069 = vmatprep.subr.bf16.mxu0 0
    %3070 = vmatpush1.bf16.msra.mxu0 0
    %3071 = vmatprep.subr.bf16.mxu0 0
    %3072 = vmatpush1.bf16.msra.mxu0 0
    %3073 = vmatprep.subr.bf16.mxu0 0
    %3074 = vmatpush1.bf16.msra.mxu0 0
    %3075 = vmatprep.subr.bf16.mxu0 0
    %3076 = vmatpush1.bf16.msra.mxu0 0
    %3077 = vmatprep.subr.bf16.mxu0 0
    %3078 = vmatpush1.bf16.msra.mxu0 0
    %3079 = vmatprep.subr.bf16.mxu0 0
    %3080 = vmatpush1.bf16.msra.mxu0 0
    %3081 = vmatprep.subr.bf16.mxu0 0
    %3082 = vmatpush1.bf16.msra.mxu0 0
    %3083 = vmatprep.subr.bf16.mxu0 0
    %3084 = vmatpush1.bf16.msra.mxu0 0
    %3085 = vmatprep.subr.bf16.mxu0 0
    %3086 = vmatpush1.bf16.msra.mxu0 0
    %3087 = vmatprep.subr.bf16.mxu0 0
    %3088 = vmatpush1.bf16.msra.mxu0 0
    %3089 = vmatprep.subr.bf16.mxu0 0
    %3090 = vmatpush1.bf16.msra.mxu0 0
    %3091 = vmatprep.mubr.bf16.mxu0 0
    %3092 = vmatmul.mubr.bf16.gmra.mrb[0].mxu0 %v3057
    %v3093 = vpop.f32.mrb[0].mxu0
    %v3094 = vadd.f32 %v3043, %v3093
    %v3095 = vpop.f32.mrb[0].mxu0
    %v3096 = vpop.f32.mrb[0].mxu0
    %v3097 = vadd.f32 %v3043, %v3096
    %v3098 = vpop.f32.mrb[0].mxu0
    %3099 = vdwg.mxu0
    %v3100 = vmul.f32 %v3094, 0.5
    %v3101 = vmul.f32 %v3097, 0.5
    %v3102 = vmul.f32 %v3094, 0.044715
    %v3103 = vmul.f32 %v3097, 0.044715
    %v3104 = vmul.f32 %v3102, %v3094
    %v3105 = vmul.f32 %v3103, %v3097
    %v3106 = vmul.f32 %v3104, %v3094
    %v3107 = vmul.f32 %v3105, %v3097
    %v3108 = vadd.f32 %v3094, %v3106
    %v3109 = vadd.f32 %v3097, %v3107
    %v3110 = vmul.f32 %v3108, 0.7978846
    %v3111 = vmul.f32 %v3109, 0.7978846
    %v3112 = vtanh.pop %v3110
    %v3113 = vtanh.pop %v3111
    %v3114 = vadd.f32 %v3112, 1.0
    %v3115 = vadd.f32 %v3113, 1.0
    %v3116 = vmul.f32 %v3100, %v3114
    %v3117 = vmul.f32 %v3101, %v3115
    %v3118 = vpack.c.bf16 %v3117, %v3116
    %v3119 = vld [vmem:[#allocation2 + $0x50] sm:$0xf]
    %v3120 = vld [vmem:[#allocation2 + $0x54] sm:$0xf]
    %v3121 = vld [vmem:[#allocation2 + $0x58] sm:$0xf]
    %v3122 = vld [vmem:[#allocation2 + $0x5c] sm:$0xf]
    %v3123 = vld [vmem:[#allocation4 + $0x78] sm:$0x1]
    %v3124 = vlaneseq
    %v3125 = vshrl.u32 %v3124, 7
    %v3126 = vsub.s32 0, %v3125
    %v3127 = vrot.slane %v3123, %v3126
    %v3132 = vunpack.c.l.b16 %v3119
    %v3133 = vunpack.c.l.b16 %v3120
    %v3134 = vunpack.c.l.b16 %v3121
    %v3135 = vunpack.c.l.b16 %v3122
    %v3136 = vpack.c.b16 %v3133, %v3132
    %v3137 = vpack.c.b16 %v3135, %v3134
    %3140 = vmatprep.subr.bf16.mxu0 0
    %3141 = vmatpush1.bf16.xpose.msra.mxu0 %v3136
    %3142 = vmatprep.subr.bf16.mxu0 0
    %3143 = vmatpush1.bf16.xpose.msra.mxu0 %v3137
    %3144 = vmatprep.subr.bf16.mxu0 0
    %3145 = vmatpush1.bf16.xpose.msra.mxu0 0
    %3146 = vmatprep.subr.bf16.mxu0 0
    %3147 = vmatpush1.bf16.xpose.msra.mxu0 0
    %3148 = vmatprep.subr.bf16.mxu0 0
    %3149 = vmatpush1.bf16.xpose.msra.mxu0 0
    %3150 = vmatprep.subr.bf16.mxu0 0
    %3151 = vmatpush1.bf16.xpose.msra.mxu0 0
    %3152 = vmatprep.subr.bf16.mxu0 0
    %3153 = vmatpush1.bf16.xpose.msra.mxu0 0
    %3154 = vmatprep.subr.bf16.mxu0 0
    %3155 = vmatpush1.bf16.xpose.msra.mxu0 0
    %3156 = vmatprep.subr.bf16.mxu0 0
    %3157 = vmatpush1.bf16.xpose.msra.mxu0 0
    %3158 = vmatprep.subr.bf16.mxu0 0
    %3159 = vmatpush1.bf16.xpose.msra.mxu0 0
    %3160 = vmatprep.subr.bf16.mxu0 0
    %3161 = vmatpush1.bf16.xpose.msra.mxu0 0
    %3162 = vmatprep.subr.bf16.mxu0 0
    %3163 = vmatpush1.bf16.xpose.msra.mxu0 0
    %3164 = vmatprep.subr.bf16.mxu0 0
    %3165 = vmatpush1.bf16.xpose.msra.mxu0 0
    %3166 = vmatprep.subr.bf16.mxu0 0
    %3167 = vmatpush1.bf16.xpose.msra.mxu0 0
    %3168 = vmatprep.subr.bf16.mxu0 0
    %3169 = vmatpush1.bf16.xpose.msra.mxu0 0
    %3170 = vmatprep.subr.bf16.mxu0 0
    %3171 = vmatpush1.bf16.xpose.msra.mxu0 0
    %3172 = vmatprep.mubr.bf16.mxu0 0
    %3173 = vmatmul.mubr.bf16.gmra.mrb[0].mxu0 %v3118
    %v3174 = vpop.f32.mrb[0].mxu0
    %v3175 = vadd.f32 %v3127, %v3174
    %v3176 = vpop.f32.mrb[0].mxu0
    %v3177 = vpop.f32.mrb[0].mxu0
    %v3178 = vadd.f32 %v3127, %v3177
    %v3179 = vpop.f32.mrb[0].mxu0
    %3180 = vdwg.mxu0
    %v3181 = vld [vmem:[#allocation4 + $0x80] sm:$0x3]
    %v3182 = vadd.f32 %v3175, %v3032
    %v3183 = vadd.f32 %v3178, %v3033
    %v3184 = vsel %vm144, %v3182, 0.0
    %3185 = vadd.xlane.f32.xlu0 %v3184
    %v3186 = vpop.xlane.xlu0 %3185
    %v3187 = vsel %vm144, %v3183, 0.0
    %3188 = vadd.xlane.f32.xlu0 %v3187
    %v3189 = vpop.xlane.xlu0 %3188
    %v3190 = vmul.f32 %v3186, %v151
    %v3191 = vmul.f32 %v3189, %v151
    %v3192 = vsub.f32 %v3182, %v3190
    %v3193 = vsub.f32 %v3183, %v3191
    %v3194 = vmul.f32 %v3192, %v3192
    %v3195 = vmul.f32 %v3193, %v3193
    %v3196 = vsel %vm144, %v3194, 0.0
    %3197 = vadd.xlane.f32.xlu0 %v3196
    %v3198 = vpop.xlane.xlu0 %3197
    %v3199 = vsel %vm144, %v3195, 0.0
    %3200 = vadd.xlane.f32.xlu0 %v3199
    %v3201 = vpop.xlane.xlu0 %3200
    %v3202 = vmul.f32 %v3198, %v151
    %v3203 = vmul.f32 %v3201, %v151
    %v3204 = vadd.f32 %v3202, 1e-12
    %v3205 = vadd.f32 %v3203, 1e-12
    %v3206 = vrsqrt.pop %v3204
    %v3207 = vrsqrt.pop %v3205
    %v3208 = vmul.f32 %v3192, %v3206
    %v3209 = vmul.f32 %v3193, %v3207
    %v3210 = vlaneseq
    %v3211 = vshrl.u32 %v3210, 7
    %v3212 = vsub.s32 0, %v3211
    %v3213 = vrot.slane %v3181, %v3212
    %v3214 = vmul.f32 %v3208, %v3213
    %v3215 = vmul.f32 %v3209, %v3213
    %v3216 = vlaneseq
    %v3217 = vshrl.u32 %v3216, 7
    %v3218 = vsub.s32 1, %v3217
    %v3219 = vrot.slane %v3181, %v3218
    %v3220 = vadd.f32 %v3214, %v3219
    %v3221 = vadd.f32 %v3215, %v3219
    %v3222 = vpack.c.bf16 %v3221, %v3220
    %v3223 = vld [vmem:[#allocation4 + $0x88] sm:$0xf]
    %v3224 = vld [vmem:[#allocation2 + $0x60] sm:$0xf]
    %v3225 = vld [vmem:[#allocation2 + $0x64] sm:$0xf]
    %v3226 = vld [vmem:[#allocation2 + $0x68] sm:$0xf]
    %v3227 = vld [vmem:[#allocation2 + $0x6c] sm:$0xf]
    %v3228 = vlaneseq
    %v3229 = vshrl.u32 %v3228, 7
    %v3230 = vsub.s32 0, %v3229
    %v3231 = vrot.slane %v3223, %v3230
    %v3236 = vunpack.c.l.b16 %v3224
    %v3237 = vunpack.c.l.b16 %v3225
    %v3238 = vunpack.c.l.b16 %v3226
    %v3239 = vunpack.c.l.b16 %v3227
    %v3240 = vpack.c.b16 %v3237, %v3236
    %v3241 = vpack.c.b16 %v3239, %v3238
    %v3245 = vsel %vm144, %v3222, 0
    %3247 = vmatprep.subr.bf16.mxu0 0
    %3248 = vmatpush1.bf16.msra.mxu0 %v3240
    %3249 = vmatprep.subr.bf16.mxu0 0
    %3250 = vmatpush1.bf16.msra.mxu0 %v3241
    %3251 = vmatprep.subr.bf16.mxu0 0
    %3252 = vmatpush1.bf16.msra.mxu0 0
    %3253 = vmatprep.subr.bf16.mxu0 0
    %3254 = vmatpush1.bf16.msra.mxu0 0
    %3255 = vmatprep.subr.bf16.mxu0 0
    %3256 = vmatpush1.bf16.msra.mxu0 0
    %3257 = vmatprep.subr.bf16.mxu0 0
    %3258 = vmatpush1.bf16.msra.mxu0 0
    %3259 = vmatprep.subr.bf16.mxu0 0
    %3260 = vmatpush1.bf16.msra.mxu0 0
    %3261 = vmatprep.subr.bf16.mxu0 0
    %3262 = vmatpush1.bf16.msra.mxu0 0
    %3263 = vmatprep.subr.bf16.mxu0 0
    %3264 = vmatpush1.bf16.msra.mxu0 0
    %3265 = vmatprep.subr.bf16.mxu0 0
    %3266 = vmatpush1.bf16.msra.mxu0 0
    %3267 = vmatprep.subr.bf16.mxu0 0
    %3268 = vmatpush1.bf16.msra.mxu0 0
    %3269 = vmatprep.subr.bf16.mxu0 0
    %3270 = vmatpush1.bf16.msra.mxu0 0
    %3271 = vmatprep.subr.bf16.mxu0 0
    %3272 = vmatpush1.bf16.msra.mxu0 0
    %3273 = vmatprep.subr.bf16.mxu0 0
    %3274 = vmatpush1.bf16.msra.mxu0 0
    %3275 = vmatprep.subr.bf16.mxu0 0
    %3276 = vmatpush1.bf16.msra.mxu0 0
    %3277 = vmatprep.subr.bf16.mxu0 0
    %3278 = vmatpush1.bf16.msra.mxu0 0
    %3279 = vmatprep.mubr.bf16.mxu0 0
    %3280 = vmatmul.mubr.bf16.gmra.mrb[0].mxu0 %v3245
    %v3281 = vpop.f32.mrb[0].mxu0
    %v3282 = vadd.f32 %v3231, %v3281
    %v3283 = vpop.f32.mrb[0].mxu0
    %v3284 = vpop.f32.mrb[0].mxu0
    %v3285 = vadd.f32 %v3231, %v3284
    %v3286 = vpop.f32.mrb[0].mxu0
    %3287 = vdwg.mxu0
    %v3288 = vmax.f32 %v3282, 0.0
    %v3289 = vmax.f32 %v3285, 0.0
    %v3290 = vpack.c.bf16 %v3289, %v3288
    %v3291 = vld [vmem:[#allocation2 + $0xa0] sm:$0x1]
    %v3292 = vld [vmem:[#allocation2 + $0x70] sm:$0xf]
    %v3293 = vld [vmem:[#allocation2 + $0x74] sm:$0xf]
    %v3294 = vld [vmem:[#allocation2 + $0x78] sm:$0xf]
    %v3295 = vld [vmem:[#allocation2 + $0x7c] sm:$0xf]
    %v3296 = vlaneseq
    %v3297 = vshrl.u32 %v3296, 7
    %v3298 = vsub.s32 1, %v3297
    %v3299 = vrot.slane %v3223, %v3298
    %v3304 = vunpack.c.l.b16 %v3292
    %v3305 = vunpack.c.l.b16 %v3293
    %v3306 = vunpack.c.l.b16 %v3294
    %v3307 = vunpack.c.l.b16 %v3295
    %v3308 = vpack.c.b16 %v3305, %v3304
    %v3309 = vpack.c.b16 %v3307, %v3306
    %3312 = vmatprep.subr.bf16.mxu0 0
    %3313 = vmatpush1.bf16.msra.mxu0 %v3308
    %3314 = vmatprep.subr.bf16.mxu0 0
    %3315 = vmatpush1.bf16.msra.mxu0 %v3309
    %3316 = vmatprep.subr.bf16.mxu0 0
    %3317 = vmatpush1.bf16.msra.mxu0 0
    %3318 = vmatprep.subr.bf16.mxu0 0
    %3319 = vmatpush1.bf16.msra.mxu0 0
    %3320 = vmatprep.subr.bf16.mxu0 0
    %3321 = vmatpush1.bf16.msra.mxu0 0
    %3322 = vmatprep.subr.bf16.mxu0 0
    %3323 = vmatpush1.bf16.msra.mxu0 0
    %3324 = vmatprep.subr.bf16.mxu0 0
    %3325 = vmatpush1.bf16.msra.mxu0 0
    %3326 = vmatprep.subr.bf16.mxu0 0
    %3327 = vmatpush1.bf16.msra.mxu0 0
    %3328 = vmatprep.subr.bf16.mxu0 0
    %3329 = vmatpush1.bf16.msra.mxu0 0
    %3330 = vmatprep.subr.bf16.mxu0 0
    %3331 = vmatpush1.bf16.msra.mxu0 0
    %3332 = vmatprep.subr.bf16.mxu0 0
    %3333 = vmatpush1.bf16.msra.mxu0 0
    %3334 = vmatprep.subr.bf16.mxu0 0
    %3335 = vmatpush1.bf16.msra.mxu0 0
    %3336 = vmatprep.subr.bf16.mxu0 0
    %3337 = vmatpush1.bf16.msra.mxu0 0
    %3338 = vmatprep.subr.bf16.mxu0 0
    %3339 = vmatpush1.bf16.msra.mxu0 0
    %3340 = vmatprep.subr.bf16.mxu0 0
    %3341 = vmatpush1.bf16.msra.mxu0 0
    %3342 = vmatprep.subr.bf16.mxu0 0
    %3343 = vmatpush1.bf16.msra.mxu0 0
    %3344 = vmatprep.mubr.bf16.mxu0 0
    %3345 = vmatmul.mubr.bf16.gmra.mrb[0].mxu0 %v3245
    %v3346 = vpop.f32.mrb[0].mxu0
    %v3347 = vadd.f32 %v3299, %v3346
    %v3348 = vpop.f32.mrb[0].mxu0
    %v3349 = vpop.f32.mrb[0].mxu0
    %v3350 = vadd.f32 %v3299, %v3349
    %v3351 = vpop.f32.mrb[0].mxu0
    %3352 = vdwg.mxu0
    %v3353 = vmax.f32 %v3347, 0.0
    %v3354 = vmax.f32 %v3350, 0.0
    %v3355 = vpack.c.bf16 %v3354, %v3353
    %v3356 = vld [vmem:[#allocation2 + $0xa8] sm:$0x1]
    %3357 = vmatprep.subr.bf16.mxu0 0
    %3358 = vmatpush1.bf16.xpose.msra.mxu0 %v3356
    %3359 = vmatprep.subr.bf16.mxu0 0
    %3360 = vmatpush1.bf16.xpose.msra.mxu0 0
    %3361 = vmatprep.subr.bf16.mxu0 0
    %3362 = vmatpush1.bf16.xpose.msra.mxu0 0
    %3363 = vmatprep.subr.bf16.mxu0 0
    %3364 = vmatpush1.bf16.xpose.msra.mxu0 0
    %3365 = vmatprep.subr.bf16.mxu0 0
    %3366 = vmatpush1.bf16.xpose.msra.mxu0 0
    %3367 = vmatprep.subr.bf16.mxu0 0
    %3368 = vmatpush1.bf16.xpose.msra.mxu0 0
    %3369 = vmatprep.subr.bf16.mxu0 0
    %3370 = vmatpush1.bf16.xpose.msra.mxu0 0
    %3371 = vmatprep.subr.bf16.mxu0 0
    %3372 = vmatpush1.bf16.xpose.msra.mxu0 0
    %3373 = vmatprep.subr.bf16.mxu0 0
    %3374 = vmatpush1.bf16.xpose.msra.mxu0 0
    %3375 = vmatprep.subr.bf16.mxu0 0
    %3376 = vmatpush1.bf16.xpose.msra.mxu0 0
    %3377 = vmatprep.subr.bf16.mxu0 0
    %3378 = vmatpush1.bf16.xpose.msra.mxu0 0
    %3379 = vmatprep.subr.bf16.mxu0 0
    %3380 = vmatpush1.bf16.xpose.msra.mxu0 0
    %3381 = vmatprep.subr.bf16.mxu0 0
    %3382 = vmatpush1.bf16.xpose.msra.mxu0 0
    %3383 = vmatprep.subr.bf16.mxu0 0
    %3384 = vmatpush1.bf16.xpose.msra.mxu0 0
    %3385 = vmatprep.subr.bf16.mxu0 0
    %3386 = vmatpush1.bf16.xpose.msra.mxu0 0
    %3387 = vmatprep.subr.bf16.mxu0 0
    %3388 = vmatpush1.bf16.xpose.msra.mxu0 0
    %3389 = vmatprep.mubr.bf16.mxu0 0
    %3390 = vmatmul.mubr.bf16.gmra.mrb[0].mxu0 %v3355
    %v3391 = vpop.f32.mrb[0].mxu0
    %v3392 = vadd.f32 0.0, %v3391
    %v3393 = vpop.f32.mrb[0].mxu0
    %v3394 = vpop.f32.mrb[0].mxu0
    %v3395 = vadd.f32 0.0, %v3394
    %v3396 = vpop.f32.mrb[0].mxu0
    %3397 = vdwg.mxu0
    %3398 = vmatprep.subr.bf16.mxu0 0
    %3399 = vmatpush1.bf16.xpose.msra.mxu0 %v3291
    %3400 = vmatprep.subr.bf16.mxu0 0
    %3401 = vmatpush1.bf16.xpose.msra.mxu0 0
    %3402 = vmatprep.subr.bf16.mxu0 0
    %3403 = vmatpush1.bf16.xpose.msra.mxu0 0
    %3404 = vmatprep.subr.bf16.mxu0 0
    %3405 = vmatpush1.bf16.xpose.msra.mxu0 0
    %3406 = vmatprep.subr.bf16.mxu0 0
    %3407 = vmatpush1.bf16.xpose.msra.mxu0 0
    %3408 = vmatprep.subr.bf16.mxu0 0
    %3409 = vmatpush1.bf16.xpose.msra.mxu0 0
    %3410 = vmatprep.subr.bf16.mxu0 0
    %3411 = vmatpush1.bf16.xpose.msra.mxu0 0
    %3412 = vmatprep.subr.bf16.mxu0 0
    %3413 = vmatpush1.bf16.xpose.msra.mxu0 0
    %3414 = vmatprep.subr.bf16.mxu0 0
    %3415 = vmatpush1.bf16.xpose.msra.mxu0 0
    %3416 = vmatprep.subr.bf16.mxu0 0
    %3417 = vmatpush1.bf16.xpose.msra.mxu0 0
    %3418 = vmatprep.subr.bf16.mxu0 0
    %3419 = vmatpush1.bf16.xpose.msra.mxu0 0
    %3420 = vmatprep.subr.bf16.mxu0 0
    %3421 = vmatpush1.bf16.xpose.msra.mxu0 0
    %3422 = vmatprep.subr.bf16.mxu0 0
    %3423 = vmatpush1.bf16.xpose.msra.mxu0 0
    %3424 = vmatprep.subr.bf16.mxu0 0
    %3425 = vmatpush1.bf16.xpose.msra.mxu0 0
    %3426 = vmatprep.subr.bf16.mxu0 0
    %3427 = vmatpush1.bf16.xpose.msra.mxu0 0
    %3428 = vmatprep.subr.bf16.mxu0 0
    %3429 = vmatpush1.bf16.xpose.msra.mxu0 0
    %3430 = vmatprep.mubr.bf16.mxu0 0
    %3431 = vmatmul.mubr.bf16.gmra.mrb[0].mxu0 %v3290
    %v3432 = vpop.f32.mrb[0].mxu0
    %v3433 = vadd.f32 %v3392, %v3432
    %v3434 = vpop.f32.mrb[0].mxu0
    %v3435 = vpop.f32.mrb[0].mxu0
    %v3436 = vadd.f32 %v3395, %v3435
    %v3437 = vpop.f32.mrb[0].mxu0
    %3438 = vdwg.mxu0
    %v3439 = vld [vmem:[#allocation2 + $0x80] sm:$0xf]
    %v3440 = vld [vmem:[#allocation2 + $0x84] sm:$0xf]
    %v3441 = vld [vmem:[#allocation2 + $0x88] sm:$0xf]
    %v3442 = vld [vmem:[#allocation2 + $0x8c] sm:$0xf]
    %v3443 = vlaneseq
    %v3444 = vshrl.u32 %v3443, 7
    %v3445 = vsub.s32 2, %v3444
    %v3446 = vrot.slane %v3223, %v3445
    %v3451 = vunpack.c.l.b16 %v3439
    %v3452 = vunpack.c.l.b16 %v3440
    %v3453 = vunpack.c.l.b16 %v3441
    %v3454 = vunpack.c.l.b16 %v3442
    %v3455 = vpack.c.b16 %v3452, %v3451
    %v3456 = vpack.c.b16 %v3454, %v3453
    %3459 = vmatprep.subr.bf16.mxu0 0
    %3460 = vmatpush1.bf16.msra.mxu0 %v3455
    %3461 = vmatprep.subr.bf16.mxu0 0
    %3462 = vmatpush1.bf16.msra.mxu0 %v3456
    %3463 = vmatprep.subr.bf16.mxu0 0
    %3464 = vmatpush1.bf16.msra.mxu0 0
    %3465 = vmatprep.subr.bf16.mxu0 0
    %3466 = vmatpush1.bf16.msra.mxu0 0
    %3467 = vmatprep.subr.bf16.mxu0 0
    %3468 = vmatpush1.bf16.msra.mxu0 0
    %3469 = vmatprep.subr.bf16.mxu0 0
    %3470 = vmatpush1.bf16.msra.mxu0 0
    %3471 = vmatprep.subr.bf16.mxu0 0
    %3472 = vmatpush1.bf16.msra.mxu0 0
    %3473 = vmatprep.subr.bf16.mxu0 0
    %3474 = vmatpush1.bf16.msra.mxu0 0
    %3475 = vmatprep.subr.bf16.mxu0 0
    %3476 = vmatpush1.bf16.msra.mxu0 0
    %3477 = vmatprep.subr.bf16.mxu0 0
    %3478 = vmatpush1.bf16.msra.mxu0 0
    %3479 = vmatprep.subr.bf16.mxu0 0
    %3480 = vmatpush1.bf16.msra.mxu0 0
    %3481 = vmatprep.subr.bf16.mxu0 0
    %3482 = vmatpush1.bf16.msra.mxu0 0
    %3483 = vmatprep.subr.bf16.mxu0 0
    %3484 = vmatpush1.bf16.msra.mxu0 0
    %3485 = vmatprep.subr.bf16.mxu0 0
    %3486 = vmatpush1.bf16.msra.mxu0 0
    %3487 = vmatprep.subr.bf16.mxu0 0
    %3488 = vmatpush1.bf16.msra.mxu0 0
    %3489 = vmatprep.subr.bf16.mxu0 0
    %3490 = vmatpush1.bf16.msra.mxu0 0
    %3491 = vmatprep.mubr.bf16.mxu0 0
    %3492 = vmatmul.mubr.bf16.gmra.mrb[0].mxu0 %v3245
    %v3493 = vpop.f32.mrb[0].mxu0
    %v3494 = vadd.f32 %v3446, %v3493
    %v3495 = vpop.f32.mrb[0].mxu0
    %v3496 = vpop.f32.mrb[0].mxu0
    %v3497 = vadd.f32 %v3446, %v3496
    %v3498 = vpop.f32.mrb[0].mxu0
    %3499 = vdwg.mxu0
    %v3500 = vmax.f32 %v3494, 0.0
    %v3501 = vmax.f32 %v3497, 0.0
    %v3502 = vpack.c.bf16 %v3501, %v3500
    %v3503 = vld [vmem:[#allocation2 + $0xb0] sm:$0x1]
    %3504 = vmatprep.subr.bf16.mxu0 0
    %3505 = vmatpush1.bf16.xpose.msra.mxu0 %v3503
    %3506 = vmatprep.subr.bf16.mxu0 0
    %3507 = vmatpush1.bf16.xpose.msra.mxu0 0
    %3508 = vmatprep.subr.bf16.mxu0 0
    %3509 = vmatpush1.bf16.xpose.msra.mxu0 0
    %3510 = vmatprep.subr.bf16.mxu0 0
    %3511 = vmatpush1.bf16.xpose.msra.mxu0 0
    %3512 = vmatprep.subr.bf16.mxu0 0
    %3513 = vmatpush1.bf16.xpose.msra.mxu0 0
    %3514 = vmatprep.subr.bf16.mxu0 0
    %3515 = vmatpush1.bf16.xpose.msra.mxu0 0
    %3516 = vmatprep.subr.bf16.mxu0 0
    %3517 = vmatpush1.bf16.xpose.msra.mxu0 0
    %3518 = vmatprep.subr.bf16.mxu0 0
    %3519 = vmatpush1.bf16.xpose.msra.mxu0 0
    %3520 = vmatprep.subr.bf16.mxu0 0
    %3521 = vmatpush1.bf16.xpose.msra.mxu0 0
    %3522 = vmatprep.subr.bf16.mxu0 0
    %3523 = vmatpush1.bf16.xpose.msra.mxu0 0
    %3524 = vmatprep.subr.bf16.mxu0 0
    %3525 = vmatpush1.bf16.xpose.msra.mxu0 0
    %3526 = vmatprep.subr.bf16.mxu0 0
    %3527 = vmatpush1.bf16.xpose.msra.mxu0 0
    %3528 = vmatprep.subr.bf16.mxu0 0
    %3529 = vmatpush1.bf16.xpose.msra.mxu0 0
    %3530 = vmatprep.subr.bf16.mxu0 0
    %3531 = vmatpush1.bf16.xpose.msra.mxu0 0
    %3532 = vmatprep.subr.bf16.mxu0 0
    %3533 = vmatpush1.bf16.xpose.msra.mxu0 0
    %3534 = vmatprep.subr.bf16.mxu0 0
    %3535 = vmatpush1.bf16.xpose.msra.mxu0 0
    %3536 = vmatprep.mubr.bf16.mxu0 0
    %3537 = vmatmul.mubr.bf16.gmra.mrb[0].mxu0 %v3502
    %v3538 = vpop.f32.mrb[0].mxu0
    %v3539 = vadd.f32 0.0, %v3538
    %v3540 = vpop.f32.mrb[0].mxu0
    %v3541 = vpop.f32.mrb[0].mxu0
    %v3542 = vadd.f32 0.0, %v3541
    %v3543 = vpop.f32.mrb[0].mxu0
    %3544 = vdwg.mxu0
    %v3545 = vadd.f32 %v3433, %v3539
    %v3546 = vadd.f32 %v3436, %v3542
    %v3547 = vld [vmem:[#allocation2 + $0x90] sm:$0xf]
    %v3548 = vld [vmem:[#allocation2 + $0x94] sm:$0xf]
    %v3549 = vld [vmem:[#allocation2 + $0x98] sm:$0xf]
    %v3550 = vld [vmem:[#allocation2 + $0x9c] sm:$0xf]
    %v3551 = vlaneseq
    %v3552 = vshrl.u32 %v3551, 7
    %v3553 = vsub.s32 3, %v3552
    %v3554 = vrot.slane %v3223, %v3553
    %v3559 = vunpack.c.l.b16 %v3547
    %v3560 = vunpack.c.l.b16 %v3548
    %v3561 = vunpack.c.l.b16 %v3549
    %v3562 = vunpack.c.l.b16 %v3550
    %v3563 = vpack.c.b16 %v3560, %v3559
    %v3564 = vpack.c.b16 %v3562, %v3561
    %3567 = vmatprep.subr.bf16.mxu0 0
    %3568 = vmatpush1.bf16.msra.mxu0 %v3563
    %3569 = vmatprep.subr.bf16.mxu0 0
    %3570 = vmatpush1.bf16.msra.mxu0 %v3564
    %3571 = vmatprep.subr.bf16.mxu0 0
    %3572 = vmatpush1.bf16.msra.mxu0 0
    %3573 = vmatprep.subr.bf16.mxu0 0
    %3574 = vmatpush1.bf16.msra.mxu0 0
    %3575 = vmatprep.subr.bf16.mxu0 0
    %3576 = vmatpush1.bf16.msra.mxu0 0
    %3577 = vmatprep.subr.bf16.mxu0 0
    %3578 = vmatpush1.bf16.msra.mxu0 0
    %3579 = vmatprep.subr.bf16.mxu0 0
    %3580 = vmatpush1.bf16.msra.mxu0 0
    %3581 = vmatprep.subr.bf16.mxu0 0
    %3582 = vmatpush1.bf16.msra.mxu0 0
    %3583 = vmatprep.subr.bf16.mxu0 0
    %3584 = vmatpush1.bf16.msra.mxu0 0
    %3585 = vmatprep.subr.bf16.mxu0 0
    %3586 = vmatpush1.bf16.msra.mxu0 0
    %3587 = vmatprep.subr.bf16.mxu0 0
    %3588 = vmatpush1.bf16.msra.mxu0 0
    %3589 = vmatprep.subr.bf16.mxu0 0
    %3590 = vmatpush1.bf16.msra.mxu0 0
    %3591 = vmatprep.subr.bf16.mxu0 0
    %3592 = vmatpush1.bf16.msra.mxu0 0
    %3593 = vmatprep.subr.bf16.mxu0 0
    %3594 = vmatpush1.bf16.msra.mxu0 0
    %3595 = vmatprep.subr.bf16.mxu0 0
    %3596 = vmatpush1.bf16.msra.mxu0 0
    %3597 = vmatprep.subr.bf16.mxu0 0
    %3598 = vmatpush1.bf16.msra.mxu0 0
    %3599 = vmatprep.mubr.bf16.mxu0 0
    %3600 = vmatmul.mubr.bf16.gmra.mrb[0].mxu0 %v3245
    %v3601 = vpop.f32.mrb[0].mxu0
    %v3602 = vadd.f32 %v3554, %v3601
    %v3603 = vpop.f32.mrb[0].mxu0
    %v3604 = vpop.f32.mrb[0].mxu0
    %v3605 = vadd.f32 %v3554, %v3604
    %v3606 = vpop.f32.mrb[0].mxu0
    %3607 = vdwg.mxu0
    %v3608 = vmax.f32 %v3602, 0.0
    %v3609 = vmax.f32 %v3605, 0.0
    %v3610 = vpack.c.bf16 %v3609, %v3608
    %v3611 = vld [vmem:[#allocation2 + $0xb8] sm:$0x1]
    %3612 = vmatprep.subr.bf16.mxu0 0
    %3613 = vmatpush1.bf16.xpose.msra.mxu0 %v3611
    %3614 = vmatprep.subr.bf16.mxu0 0
    %3615 = vmatpush1.bf16.xpose.msra.mxu0 0
    %3616 = vmatprep.subr.bf16.mxu0 0
    %3617 = vmatpush1.bf16.xpose.msra.mxu0 0
    %3618 = vmatprep.subr.bf16.mxu0 0
    %3619 = vmatpush1.bf16.xpose.msra.mxu0 0
    %3620 = vmatprep.subr.bf16.mxu0 0
    %3621 = vmatpush1.bf16.xpose.msra.mxu0 0
    %3622 = vmatprep.subr.bf16.mxu0 0
    %3623 = vmatpush1.bf16.xpose.msra.mxu0 0
    %3624 = vmatprep.subr.bf16.mxu0 0
    %3625 = vmatpush1.bf16.xpose.msra.mxu0 0
    %3626 = vmatprep.subr.bf16.mxu0 0
    %3627 = vmatpush1.bf16.xpose.msra.mxu0 0
    %3628 = vmatprep.subr.bf16.mxu0 0
    %3629 = vmatpush1.bf16.xpose.msra.mxu0 0
    %3630 = vmatprep.subr.bf16.mxu0 0
    %3631 = vmatpush1.bf16.xpose.msra.mxu0 0
    %3632 = vmatprep.subr.bf16.mxu0 0
    %3633 = vmatpush1.bf16.xpose.msra.mxu0 0
    %3634 = vmatprep.subr.bf16.mxu0 0
    %3635 = vmatpush1.bf16.xpose.msra.mxu0 0
    %3636 = vmatprep.subr.bf16.mxu0 0
    %3637 = vmatpush1.bf16.xpose.msra.mxu0 0
    %3638 = vmatprep.subr.bf16.mxu0 0
    %3639 = vmatpush1.bf16.xpose.msra.mxu0 0
    %3640 = vmatprep.subr.bf16.mxu0 0
    %3641 = vmatpush1.bf16.xpose.msra.mxu0 0
    %3642 = vmatprep.subr.bf16.mxu0 0
    %3643 = vmatpush1.bf16.xpose.msra.mxu0 0
    %3644 = vmatprep.mubr.bf16.mxu0 0
    %3645 = vmatmul.mubr.bf16.gmra.mrb[0].mxu0 %v3610
    %v3646 = vpop.f32.mrb[0].mxu0
    %v3647 = vadd.f32 0.0, %v3646
    %v3648 = vpop.f32.mrb[0].mxu0
    %v3649 = vpop.f32.mrb[0].mxu0
    %v3650 = vadd.f32 0.0, %v3649
    %v3651 = vpop.f32.mrb[0].mxu0
    %3652 = vdwg.mxu0
    %v3653 = vadd.f32 %v3545, %v3647
    %v3654 = vadd.f32 %v3546, %v3650
    %v3655 = vld [vmem:[#allocation4 + $0x90] sm:$0x1]
    %v3656 = vlaneseq
    %v3657 = vshrl.u32 %v3656, 7
    %v3658 = vsub.s32 0, %v3657
    %v3659 = vrot.slane %v3655, %v3658
    %v3660 = vadd.f32 %v3653, %v3659
    %v3661 = vadd.f32 %v3654, %v3659
    %vm3662 = vcmask 15360
    %3663 = vst.msk [vmem:[%s4] sm:$0xff] %vm3662, %v3660
    %3664 = vst.msk [vmem:[%s4 + $0x8] sm:$0xff] %vm3662, %v3661
    // Predicated region
    $region26: #{fused_forward.1} parent=1 // pred_check
      _
    $region27: #{fused_forward.1} parent=1 // pred_check_branch
      %3666 = sbr.rel (0) target = $region29
    $region28: #{fused_forward.1} parent=1 // pred_region
      _
    $region29: #{fused_forward.1} parent=1 // pred_fallthru
      _
    // Predicated region
    $region30: #{fused_forward.1} parent=1 // pred_check
      _
    $region31: #{fused_forward.1} parent=1 // pred_check_branch
      %3668 = sbr.rel (0) target = $region33
    $region32: #{fused_forward.1} parent=1 // pred_region
      _
    $region33: #{fused_forward.1} parent=1 // pred_fallthru
      _
    %3669 = vsyncpa [#allocation3], 1
    %3670 = vsyncpa [#allocation5], 1

</llo_original>
